<compile_context>
chip_gen: v7x
topology: tpu7x:2x2x1
jax: 0.10.0
libtpu: 0.0.40
codegen_flags: <defaults>
</compile_context>

<pallas_src>
import functools

import jax
import jax.numpy as jnp
import numpy as np
from jax.experimental import pallas as pl
from jax.experimental.pallas import tpu as pltpu

EPS = 1e-5


# ---------------------------------------------------------------------------
# Kernels
# ---------------------------------------------------------------------------
def _conv_stage_kernel(*refs, pre_bn_relu):
    """One grid step = one image:  [affine+ReLU ->] 3x3 conv -> partial BN stats.

    refs (pre_bn_relu=False): in, w, z, stats, pad, slab
    refs (pre_bn_relu=True) : in, w, scale, shift, z, stats, pad, slab

    in    : (1, H, W, C)   activation (MXU operand dtype)
    w     : (9C, C)        conv weight, im2col layout (tap-major, then Cin)
    scale : (1, C) f32     BN scale  gamma * rsqrt(var + eps)     [stage 2]
    shift : (1, C) f32     BN shift  beta - mean * scale          [stage 2]
    z     : (1, H, W, C)   conv output
    stats : (1, 2, C) f32  per-image [sum, sum-of-squares] of the conv output
    pad   : (H+2, W+2, C)  VMEM scratch, zero halo
    slab  : (H*W, 9C)      VMEM scratch, im2col slab
    """
    if pre_bn_relu:
        (in_ref, w_ref, scale_ref, shift_ref,
         z_ref, stats_ref, pad_ref, slab_ref) = refs
    else:
        in_ref, w_ref, z_ref, stats_ref, pad_ref, slab_ref = refs

    _, h, w, c = in_ref.shape
    l = h * w
    cdt = pad_ref.dtype

    # Activation feeding this conv: raw input (stage 1) or relu(bn1(z1)).
    if pre_bn_relu:
        act = jnp.maximum(
            in_ref[0].astype(jnp.float32) * scale_ref[...] + shift_ref[...],
            0.0).astype(cdt)
    else:
        act = in_ref[0].astype(cdt)

    # Zero only the 1-pixel halo border; the interior is overwritten below.
    pad_ref[0:1, :, :] = jnp.zeros((1, w + 2, c), cdt)
    pad_ref[h + 1:h + 2, :, :] = jnp.zeros((1, w + 2, c), cdt)
    pad_ref[:, 0:1, :] = jnp.zeros((h + 2, 1, c), cdt)
    pad_ref[:, w + 1:w + 2, :] = jnp.zeros((h + 2, 1, c), cdt)
    pad_ref[1:h + 1, 1:w + 1, :] = act

    # im2col: 9 shifted views -> one (L, 9C) slab (one column block per tap).
    for dy in range(3):
        for dx in range(3):
            t = dy * 3 + dx
            slab_ref[:, t * c:(t + 1) * c] = (
                pad_ref[dy:dy + h, dx:dx + w, :].reshape(l, c))

    # One MXU matmul, K = 9*Cin, f32 accumulation.
    acc = jnp.dot(slab_ref[...], w_ref[...],
                  preferred_element_type=jnp.float32)            # (L, C) f32

    # Per-image partial BN statistics (finalized in the wrapper).
    stats_ref[0, 0:1, :] = jnp.sum(acc, axis=0, keepdims=True)
    stats_ref[0, 1:2, :] = jnp.sum(acc * acc, axis=0, keepdims=True)

    z_ref[0] = acc.reshape(h, w, c).astype(z_ref.dtype)


def _bn_add_relu_kernel(z_ref, x_ref, scale_ref, shift_ref, out_ref):
    """out = relu(bn2(z2) + residual), one image per grid step."""
    out_ref[0] = jnp.maximum(
        z_ref[0].astype(jnp.float32) * scale_ref[...] + shift_ref[...]
        + x_ref[0], 0.0)


# ---------------------------------------------------------------------------
# VMEM / cost accounting helpers
# ---------------------------------------------------------------------------
def _round_up(x, m):
    return (x + m - 1) // m * m


def _padded_bytes(shape, dtype):
    """Approximate VMEM footprint of one buffer under (8, 128) tiling."""
    item = np.dtype(dtype).itemsize
    sub_mult = 8 * max(1, 4 // item)          # f32: 8, bf16: 16, int8/fp8: 32
    if len(shape) == 1:
        return _round_up(shape[0] * item, 4 * 128)
    lead = int(np.prod(shape[:-2])) if len(shape) > 2 else 1
    return (lead * _round_up(shape[-2], sub_mult)
            * _round_up(shape[-1], 128) * item)


def _vmem_limit_bytes(block_arrays, scratch_arrays):
    """Scoped-VMEM limit: double-buffered blocks + scratch, 2x safety margin."""
    est = (2 * sum(_padded_bytes(s, d) for s, d in block_arrays)
           + sum(_padded_bytes(s, d) for s, d in scratch_arrays))
    return int(min(100 * 2**20, max(32 * 2**20, 2 * est)))


# ---------------------------------------------------------------------------
# pallas_call wrappers
# ---------------------------------------------------------------------------
def _conv_stage(inp, wmat, scale=None, shift=None):
    """z = conv3x3(pre(inp)) over a (N,) grid, plus per-image BN sum/sumsq."""
    n, h, w, c = inp.shape
    l = h * w
    pre = scale is not None
    act_dtype = inp.dtype

    kernel = functools.partial(_conv_stage_kernel, pre_bn_relu=pre)

    in_specs = [pl.BlockSpec((1, h, w, c), lambda i: (i, 0, 0, 0)),
                pl.BlockSpec((9 * c, c), lambda i: (0, 0))]
    operands = [inp, wmat]
    if pre:
        in_specs += [pl.BlockSpec((1, c), lambda i: (0, 0)),
                     pl.BlockSpec((1, c), lambda i: (0, 0))]
        operands += [scale, shift]

    out_shape = (jax.ShapeDtypeStruct((n, h, w, c), act_dtype),
                 jax.ShapeDtypeStruct((n, 2, c), jnp.float32))
    out_specs = (pl.BlockSpec((1, h, w, c), lambda i: (i, 0, 0, 0)),
                 pl.BlockSpec((1, 2, c), lambda i: (i, 0, 0)))

    scratch = [((h + 2, w + 2, c), act_dtype),     # zero-padded activation
               ((l, 9 * c), act_dtype)]            # per-image im2col slab
    scratch_shapes = [pltpu.VMEM(s, d) for s, d in scratch]

    blocks = ([((1, h, w, c), act_dtype), ((9 * c, c), act_dtype),
               ((1, h, w, c), act_dtype), ((1, 2, c), jnp.float32)]
              + ([((1, c), jnp.float32)] * 2 if pre else []))

    item = np.dtype(act_dtype).itemsize
    flops = 2 * n * l * (9 * c) * c
    bytes_accessed = (2 * n * l * c * item + 9 * c * c * item
                      + n * 2 * c * 4 + (2 * c * 4 if pre else 0))

    return pl.pallas_call(
        kernel,
        grid=(n,),
        out_shape=out_shape,
        in_specs=in_specs,
        out_specs=out_specs,
        scratch_shapes=scratch_shapes,
        compiler_params=pltpu.CompilerParams(
            dimension_semantics=("parallel",),
            vmem_limit_bytes=_vmem_limit_bytes(blocks, scratch)),
        cost_estimate=pl.CostEstimate(flops=flops, transcendentals=0,
                                      bytes_accessed=bytes_accessed),
    )(*operands)


def _bn_add_relu(z, x_nhwc, scale, shift):
    n, h, w, c = x_nhwc.shape
    blocks = [((1, h, w, c), z.dtype), ((1, h, w, c), jnp.float32),
              ((1, c), jnp.float32), ((1, c), jnp.float32),
              ((1, h, w, c), jnp.float32)]
    bytes_accessed = (n * h * w * c * (np.dtype(z.dtype).itemsize + 8)
                      + 2 * c * 4)
    return pl.pallas_call(
        _bn_add_relu_kernel,
        grid=(n,),
        out_shape=jax.ShapeDtypeStruct((n, h, w, c), jnp.float32),
        in_specs=[pl.BlockSpec((1, h, w, c), lambda i: (i, 0, 0, 0)),
                  pl.BlockSpec((1, h, w, c), lambda i: (i, 0, 0, 0)),
                  pl.BlockSpec((1, c), lambda i: (0, 0)),
                  pl.BlockSpec((1, c), lambda i: (0, 0))],
        out_specs=pl.BlockSpec((1, h, w, c), lambda i: (i, 0, 0, 0)),
        compiler_params=pltpu.CompilerParams(
            dimension_semantics=("parallel",),
            vmem_limit_bytes=_vmem_limit_bytes(blocks, [])),
        cost_estimate=pl.CostEstimate(flops=4 * n * h * w * c,
                                      transcendentals=0,
                                      bytes_accessed=bytes_accessed),
    )(z, x_nhwc, scale, shift)


def _bn_affine(stats, count, gamma, beta):
    """Finish training-mode BN from per-image partial sums -> (1,C) scale/shift."""
    s = jnp.sum(stats[:, 0, :], axis=0)
    ss = jnp.sum(stats[:, 1, :], axis=0)
    mean = s / count
    var = ss / count - mean * mean                        # biased variance
    scale = gamma * jax.lax.rsqrt(var + EPS)
    shift = beta - mean * scale
    return (scale.reshape(1, -1).astype(jnp.float32),
            shift.reshape(1, -1).astype(jnp.float32))


@functools.partial(jax.jit, static_argnames=("mxu_dtype",))
def resblock2d_forward(x_nchw, w1, g1, b1, w2, g2, b2,
                       mxu_dtype=jnp.bfloat16):
    """ResBlock2D.forward with downsample=None (requires inplanes == planes).

    x_nchw : (N, C, H, W) f32
    w1, w2 : (Cout, Cin, 3, 3) f32   (PyTorch OIHW layout)
    g*, b* : (C,) f32                (BatchNorm gamma / beta)
    """
    n, c, h, w = x_nchw.shape
    count = n * h * w

    # Cheap layout plumbing only; padding and im2col happen inside the kernels.
    x_nhwc = jnp.transpose(x_nchw, (0, 2, 3, 1)).astype(jnp.float32)
    # OIHW -> (kh, kw, Cin, Cout) -> (9*Cin, Cout): row = (dy*3+dx)*Cin + ci
    w1m = jnp.transpose(w1, (2, 3, 1, 0)).reshape(9 * c, c).astype(mxu_dtype)
    w2m = jnp.transpose(w2, (2, 3, 1, 0)).reshape(9 * c, c).astype(mxu_dtype)

    # Stage 1: z1 = conv1(x) + per-image BN1 partial stats.
    z1, st1 = _conv_stage(x_nhwc.astype(mxu_dtype), w1m)
    scale1, shift1 = _bn_affine(st1, count, g1, b1)

    # Stage 2: y1 = relu(bn1(z1)); z2 = conv2(y1) + per-image BN2 partial stats.
    z2, st2 = _conv_stage(z1, w2m, scale1, shift1)
    scale2, shift2 = _bn_affine(st2, count, g2, b2)

    # Stage 3: out = relu(bn2(z2) + residual).
    out_nhwc = _bn_add_relu(z2, x_nhwc, scale2, shift2)
    return jnp.transpose(out_nhwc, (0, 3, 1, 2))


# ---------------------------------------------------------------------------
# Pure-JAX reference (matches the PyTorch module in training mode)
# ---------------------------------------------------------------------------
def _reference(x, w1, g1, b1, w2, g2, b2):
    def conv(y, wgt):
        return jax.lax.conv_general_dilated(
            y, wgt, window_strides=(1, 1), padding=((1, 1), (1, 1)),
            dimension_numbers=("NCHW", "OIHW", "NCHW"))

    def bn(y, g, b):
        mean = jnp.mean(y, axis=(0, 2, 3), keepdims=True)
        var = jnp.mean((y - mean) ** 2, axis=(0, 2, 3), keepdims=True)
        return ((y - mean) * jax.lax.rsqrt(var + EPS) * g.reshape(1, -1, 1, 1)
                + b.reshape(1, -1, 1, 1))

    y = jax.nn.relu(bn(conv(x, w1), g1, b1))
    y = bn(conv(y, w2), g2, b2) + x
    return jax.nn.relu(y)


if __name__ == "__main__":
    # Small debug shapes consistent with the module (inplanes == planes).
    # NOTE: do not draw perf conclusions at C=8 -- validate perf at C>=64.
    N, C, H, W = 2, 8, 16, 16

    key = jax.random.PRNGKey(0)
    kx, kw1, kw2 = jax.random.split(key, 3)

    x = jax.random.normal(kx, (N, C, H, W), dtype=jnp.float32)
    w1 = 0.1 * jax.random.normal(kw1, (C, C, 3, 3), dtype=jnp.float32)
    w2 = 0.1 * jax.random.normal(kw2, (C, C, 3, 3), dtype=jnp.float32)
    g1 = jnp.ones((C,), jnp.float32)
    b1 = jnp.zeros((C,), jnp.float32)
    g2 = jnp.ones((C,), jnp.float32)
    b2 = jnp.zeros((C,), jnp.float32)

    ref = jax.block_until_ready(_reference(x, w1, g1, b1, w2, g2, b2))

    # f32 MXU-operand path: tight agreement with the f32 reference.
    out_f32 = jax.block_until_ready(
        resblock2d_forward(x, w1, g1, b1, w2, g2, b2, mxu_dtype=jnp.float32))
    np.testing.assert_allclose(np.asarray(out_f32), np.asarray(ref),
                               rtol=1e-4, atol=1e-4)

    # bf16 MXU-operand path (production default): loose sanity tolerance.
    out_bf16 = jax.block_until_ready(
        resblock2d_forward(x, w1, g1, b1, w2, g2, b2, mxu_dtype=jnp.bfloat16))
    np.testing.assert_allclose(np.asarray(out_bf16), np.asarray(ref),
                               rtol=5e-2, atol=1e-1)

    assert out_f32.shape == (N, C, H, W) and out_f32.dtype == jnp.float32
    assert out_bf16.shape == (N, C, H, W) and out_bf16.dtype == jnp.float32
    print("KERNEL_OK")
</pallas_src>

<mosaic_0001>
module attributes {stable_mosaic.version = 11 : i64} {
  func.func @_conv_stage_kernel(%arg0: i32, %arg1: memref<1x16x16x8xf32, #tpu.memory_space<vmem>>, %arg2: memref<72x8xf32, #tpu.memory_space<vmem>>, %arg3: memref<1x16x16x8xf32, #tpu.memory_space<vmem>>, %arg4: memref<1x2x8xf32, #tpu.memory_space<vmem>>, %arg5: memref<18x18x8xf32, #tpu.memory_space<vmem>>, %arg6: memref<256x72xf32, #tpu.memory_space<vmem>>) attributes {dimension_semantics = [#tpu.dimension_semantics<parallel>], iteration_bounds = array<i64: 2>, scalar_prefetch = 0 : i64, scratch_operands = 2 : i64, tpu.core_type = #tpu.core_type<tc>, window_params = [{transform_indices = @transform_0, window_bounds = array<i64: 1, 16, 16, 8>}, {pipeline_mode = #tpu.pipeline_mode<synchronous>, transform_indices = @transform_1, window_bounds = array<i64: 72, 8>}, {transform_indices = @transform_2, window_bounds = array<i64: 1, 16, 16, 8>}, {transform_indices = @transform_3, window_bounds = array<i64: 1, 2, 8>}]} {
    %c0 = arith.constant 0 : index
    %c0_0 = arith.constant 0 : index
    %c0_1 = arith.constant 0 : index
    %c0_2 = arith.constant 0 : index
    %0 = vector.load %arg1[%c0, %c0_0, %c0_1, %c0_2] : memref<1x16x16x8xf32, #tpu.memory_space<vmem>>, vector<1x16x16x8xf32>
    %1 = vector.shape_cast %0 : vector<1x16x16x8xf32> to vector<16x16x8xf32>
    %cst = arith.constant 0.000000e+00 : f32
    %2 = vector.broadcast %cst : f32 to vector<1x18x8xf32>
    %c0_3 = arith.constant 0 : index
    %c0_4 = arith.constant 0 : index
    %c0_5 = arith.constant 0 : index
    %3 = vector.load %arg5[%c0_3, %c0_4, %c0_5] : memref<18x18x8xf32, #tpu.memory_space<vmem>>, vector<1x18x8xf32>
    tpu.vector_store %arg5[%c0_3, %c0_4, %c0_5], %2 {strides = array<i32>} : memref<18x18x8xf32, #tpu.memory_space<vmem>>, vector<1x18x8xf32>,
    %cst_6 = arith.constant 0.000000e+00 : f32
    %4 = vector.broadcast %cst_6 : f32 to vector<1x18x8xf32>
    %c17 = arith.constant 17 : index
    %c0_7 = arith.constant 0 : index
    %c0_8 = arith.constant 0 : index
    %5 = vector.load %arg5[%c17, %c0_7, %c0_8] : memref<18x18x8xf32, #tpu.memory_space<vmem>>, vector<1x18x8xf32>
    tpu.vector_store %arg5[%c17, %c0_7, %c0_8], %4 {strides = array<i32>} : memref<18x18x8xf32, #tpu.memory_space<vmem>>, vector<1x18x8xf32>,
    %cst_9 = arith.constant 0.000000e+00 : f32
    %6 = vector.broadcast %cst_9 : f32 to vector<18x1x8xf32>
    %c0_10 = arith.constant 0 : index
    %c0_11 = arith.constant 0 : index
    %c0_12 = arith.constant 0 : index
    %7 = vector.load %arg5[%c0_10, %c0_11, %c0_12] : memref<18x18x8xf32, #tpu.memory_space<vmem>>, vector<18x1x8xf32>
    tpu.vector_store %arg5[%c0_10, %c0_11, %c0_12], %6 {strides = array<i32>} : memref<18x18x8xf32, #tpu.memory_space<vmem>>, vector<18x1x8xf32>,
    %cst_13 = arith.constant 0.000000e+00 : f32
    %8 = vector.broadcast %cst_13 : f32 to vector<18x1x8xf32>
    %c0_14 = arith.constant 0 : index
    %c17_15 = arith.constant 17 : index
    %c0_16 = arith.constant 0 : index
    %9 = vector.load %arg5[%c0_14, %c17_15, %c0_16] : memref<18x18x8xf32, #tpu.memory_space<vmem>>, vector<18x1x8xf32>
    tpu.vector_store %arg5[%c0_14, %c17_15, %c0_16], %8 {strides = array<i32>} : memref<18x18x8xf32, #tpu.memory_space<vmem>>, vector<18x1x8xf32>,
    %c1 = arith.constant 1 : index
    %c1_17 = arith.constant 1 : index
    %c0_18 = arith.constant 0 : index
    %10 = vector.load %arg5[%c1, %c1_17, %c0_18] : memref<18x18x8xf32, #tpu.memory_space<vmem>>, vector<16x16x8xf32>
    tpu.vector_store %arg5[%c1, %c1_17, %c0_18], %1 {strides = array<i32>} : memref<18x18x8xf32, #tpu.memory_space<vmem>>, vector<16x16x8xf32>,
    %c0_19 = arith.constant 0 : index
    %c0_20 = arith.constant 0 : index
    %c0_21 = arith.constant 0 : index
    %11 = vector.load %arg5[%c0_19, %c0_20, %c0_21] : memref<18x18x8xf32, #tpu.memory_space<vmem>>, vector<16x16x8xf32>
    %12 = vector.shape_cast %11 : vector<16x16x8xf32> to vector<256x8xf32>
    %c0_22 = arith.constant 0 : index
    %c0_23 = arith.constant 0 : index
    %13 = vector.load %arg6[%c0_22, %c0_23] : memref<256x72xf32, #tpu.memory_space<vmem>>, vector<256x8xf32>
    tpu.vector_store %arg6[%c0_22, %c0_23], %12 {strides = array<i32>} : memref<256x72xf32, #tpu.memory_space<vmem>>, vector<256x8xf32>,
    %c0_24 = arith.constant 0 : index
    %c1_25 = arith.constant 1 : index
    %c0_26 = arith.constant 0 : index
    %14 = vector.load %arg5[%c0_24, %c1_25, %c0_26] : memref<18x18x8xf32, #tpu.memory_space<vmem>>, vector<16x16x8xf32>
    %15 = vector.shape_cast %14 : vector<16x16x8xf32> to vector<256x8xf32>
    %c0_27 = arith.constant 0 : index
    %c8 = arith.constant 8 : index
    %16 = vector.load %arg6[%c0_27, %c8] : memref<256x72xf32, #tpu.memory_space<vmem>>, vector<256x8xf32>
    tpu.vector_store %arg6[%c0_27, %c8], %15 {strides = array<i32>} : memref<256x72xf32, #tpu.memory_space<vmem>>, vector<256x8xf32>,
    %c0_28 = arith.constant 0 : index
    %c2 = arith.constant 2 : index
    %c0_29 = arith.constant 0 : index
    %17 = vector.load %arg5[%c0_28, %c2, %c0_29] : memref<18x18x8xf32, #tpu.memory_space<vmem>>, vector<16x16x8xf32>
    %18 = vector.shape_cast %17 : vector<16x16x8xf32> to vector<256x8xf32>
    %c0_30 = arith.constant 0 : index
    %c16 = arith.constant 16 : index
    %19 = vector.load %arg6[%c0_30, %c16] : memref<256x72xf32, #tpu.memory_space<vmem>>, vector<256x8xf32>
    tpu.vector_store %arg6[%c0_30, %c16], %18 {strides = array<i32>} : memref<256x72xf32, #tpu.memory_space<vmem>>, vector<256x8xf32>,
    %c1_31 = arith.constant 1 : index
    %c0_32 = arith.constant 0 : index
    %c0_33 = arith.constant 0 : index
    %20 = vector.load %arg5[%c1_31, %c0_32, %c0_33] : memref<18x18x8xf32, #tpu.memory_space<vmem>>, vector<16x16x8xf32>
    %21 = vector.shape_cast %20 : vector<16x16x8xf32> to vector<256x8xf32>
    %c0_34 = arith.constant 0 : index
    %c24 = arith.constant 24 : index
    %22 = vector.load %arg6[%c0_34, %c24] : memref<256x72xf32, #tpu.memory_space<vmem>>, vector<256x8xf32>
    tpu.vector_store %arg6[%c0_34, %c24], %21 {strides = array<i32>} : memref<256x72xf32, #tpu.memory_space<vmem>>, vector<256x8xf32>,
    %c1_35 = arith.constant 1 : index
    %c1_36 = arith.constant 1 : index
    %c0_37 = arith.constant 0 : index
    %23 = vector.load %arg5[%c1_35, %c1_36, %c0_37] : memref<18x18x8xf32, #tpu.memory_space<vmem>>, vector<16x16x8xf32>
    %24 = vector.shape_cast %23 : vector<16x16x8xf32> to vector<256x8xf32>
    %c0_38 = arith.constant 0 : index
    %c32 = arith.constant 32 : index
    %25 = vector.load %arg6[%c0_38, %c32] : memref<256x72xf32, #tpu.memory_space<vmem>>, vector<256x8xf32>
    tpu.vector_store %arg6[%c0_38, %c32], %24 {strides = array<i32>} : memref<256x72xf32, #tpu.memory_space<vmem>>, vector<256x8xf32>,
    %c1_39 = arith.constant 1 : index
    %c2_40 = arith.constant 2 : index
    %c0_41 = arith.constant 0 : index
    %26 = vector.load %arg5[%c1_39, %c2_40, %c0_41] : memref<18x18x8xf32, #tpu.memory_space<vmem>>, vector<16x16x8xf32>
    %27 = vector.shape_cast %26 : vector<16x16x8xf32> to vector<256x8xf32>
    %c0_42 = arith.constant 0 : index
    %c40 = arith.constant 40 : index
    %28 = vector.load %arg6[%c0_42, %c40] : memref<256x72xf32, #tpu.memory_space<vmem>>, vector<256x8xf32>
    tpu.vector_store %arg6[%c0_42, %c40], %27 {strides = array<i32>} : memref<256x72xf32, #tpu.memory_space<vmem>>, vector<256x8xf32>,
    %c2_43 = arith.constant 2 : index
    %c0_44 = arith.constant 0 : index
    %c0_45 = arith.constant 0 : index
    %29 = vector.load %arg5[%c2_43, %c0_44, %c0_45] : memref<18x18x8xf32, #tpu.memory_space<vmem>>, vector<16x16x8xf32>
    %30 = vector.shape_cast %29 : vector<16x16x8xf32> to vector<256x8xf32>
    %c0_46 = arith.constant 0 : index
    %c48 = arith.constant 48 : index
    %31 = vector.load %arg6[%c0_46, %c48] : memref<256x72xf32, #tpu.memory_space<vmem>>, vector<256x8xf32>
    tpu.vector_store %arg6[%c0_46, %c48], %30 {strides = array<i32>} : memref<256x72xf32, #tpu.memory_space<vmem>>, vector<256x8xf32>,
    %c2_47 = arith.constant 2 : index
    %c1_48 = arith.constant 1 : index
    %c0_49 = arith.constant 0 : index
    %32 = vector.load %arg5[%c2_47, %c1_48, %c0_49] : memref<18x18x8xf32, #tpu.memory_space<vmem>>, vector<16x16x8xf32>
    %33 = vector.shape_cast %32 : vector<16x16x8xf32> to vector<256x8xf32>
    %c0_50 = arith.constant 0 : index
    %c56 = arith.constant 56 : index
    %34 = vector.load %arg6[%c0_50, %c56] : memref<256x72xf32, #tpu.memory_space<vmem>>, vector<256x8xf32>
    tpu.vector_store %arg6[%c0_50, %c56], %33 {strides = array<i32>} : memref<256x72xf32, #tpu.memory_space<vmem>>, vector<256x8xf32>,
    %c2_51 = arith.constant 2 : index
    %c2_52 = arith.constant 2 : index
    %c0_53 = arith.constant 0 : index
    %35 = vector.load %arg5[%c2_51, %c2_52, %c0_53] : memref<18x18x8xf32, #tpu.memory_space<vmem>>, vector<16x16x8xf32>
    %36 = vector.shape_cast %35 : vector<16x16x8xf32> to vector<256x8xf32>
    %c0_54 = arith.constant 0 : index
    %c64 = arith.constant 64 : index
    %37 = vector.load %arg6[%c0_54, %c64] : memref<256x72xf32, #tpu.memory_space<vmem>>, vector<256x8xf32>
    tpu.vector_store %arg6[%c0_54, %c64], %36 {strides = array<i32>} : memref<256x72xf32, #tpu.memory_space<vmem>>, vector<256x8xf32>,
    %c0_55 = arith.constant 0 : index
    %c0_56 = arith.constant 0 : index
    %38 = vector.load %arg6[%c0_55, %c0_56] : memref<256x72xf32, #tpu.memory_space<vmem>>, vector<256x72xf32>
    %c0_57 = arith.constant 0 : index
    %c0_58 = arith.constant 0 : index
    %39 = vector.load %arg2[%c0_57, %c0_58] : memref<72x8xf32, #tpu.memory_space<vmem>>, vector<72x8xf32>
    %cst_59 = arith.constant dense<0.000000e+00> : vector<256x8xf32>
    %40 = tpu.matmul %38, %39, %cst_59 {dimension_numbers = #tpu.dot_dimension_numbers<[1], [0], [0], [1], [0, 0, 1, 1], [], []>} : vector<256x72xf32>, vector<72x8xf32>, vector<256x8xf32> -> vector<256x8xf32>
    %cst_60 = arith.constant dense<0.000000e+00> : vector<8xf32>
    %41 = vector.multi_reduction <add>, %40, %cst_60 [0] : vector<256x8xf32> to vector<8xf32>
    %42 = vector.shape_cast %41 : vector<8xf32> to vector<1x8xf32>
    %c0_61 = arith.constant 0 : index
    %c0_62 = arith.constant 0 : index
    %c0_63 = arith.constant 0 : index
    %43 = vector.load %arg4[%c0_61, %c0_62, %c0_63] : memref<1x2x8xf32, #tpu.memory_space<vmem>>, vector<1x1x8xf32>
    %44 = vector.shape_cast %43 : vector<1x1x8xf32> to vector<1x8xf32>
    %45 = vector.shape_cast %42 : vector<1x8xf32> to vector<1x1x8xf32>
    tpu.vector_store %arg4[%c0_61, %c0_62, %c0_63], %45 {strides = array<i32>} : memref<1x2x8xf32, #tpu.memory_space<vmem>>, vector<1x1x8xf32>,
    %46 = arith.mulf %40, %40 : vector<256x8xf32>
    %cst_64 = arith.constant dense<0.000000e+00> : vector<8xf32>
    %47 = vector.multi_reduction <add>, %46, %cst_64 [0] : vector<256x8xf32> to vector<8xf32>
    %48 = vector.shape_cast %47 : vector<8xf32> to vector<1x8xf32>
    %c0_65 = arith.constant 0 : index
    %c1_66 = arith.constant 1 : index
    %c0_67 = arith.constant 0 : index
    %49 = vector.load %arg4[%c0_65, %c1_66, %c0_67] : memref<1x2x8xf32, #tpu.memory_space<vmem>>, vector<1x1x8xf32>
    %50 = vector.shape_cast %49 : vector<1x1x8xf32> to vector<1x8xf32>
    %51 = vector.shape_cast %48 : vector<1x8xf32> to vector<1x1x8xf32>
    tpu.vector_store %arg4[%c0_65, %c1_66, %c0_67], %51 {strides = array<i32>} : memref<1x2x8xf32, #tpu.memory_space<vmem>>, vector<1x1x8xf32>,
    %52 = vector.shape_cast %40 : vector<256x8xf32> to vector<16x16x8xf32>
    %c0_68 = arith.constant 0 : index
    %c0_69 = arith.constant 0 : index
    %c0_70 = arith.constant 0 : index
    %c0_71 = arith.constant 0 : index
    %53 = vector.load %arg3[%c0_68, %c0_69, %c0_70, %c0_71] : memref<1x16x16x8xf32, #tpu.memory_space<vmem>>, vector<1x16x16x8xf32>
    %54 = vector.shape_cast %53 : vector<1x16x16x8xf32> to vector<16x16x8xf32>
    %55 = vector.shape_cast %52 : vector<16x16x8xf32> to vector<1x16x16x8xf32>
    tpu.vector_store %arg3[%c0_68, %c0_69, %c0_70, %c0_71], %55 {strides = array<i32>} : memref<1x16x16x8xf32, #tpu.memory_space<vmem>>, vector<1x16x16x8xf32>,
    return
  }
  func.func @transform_0(%arg0: i32) -> (i32, i32, i32, i32) {
    %c0_i32 = arith.constant 0 : i32
    %c0_i32_0 = arith.constant 0 : i32
    %c0_i32_1 = arith.constant 0 : i32
    %c0_i32_2 = arith.constant 0 : i32
    return %arg0, %c0_i32, %c0_i32_0, %c0_i32_1 : i32, i32, i32, i32
  }
  func.func @transform_1(%arg0: i32) -> (i32, i32) {
    %c0_i32 = arith.constant 0 : i32
    %c0_i32_0 = arith.constant 0 : i32
    %c0_i32_1 = arith.constant 0 : i32
    return %c0_i32, %c0_i32_0 : i32, i32
  }
  func.func @transform_2(%arg0: i32) -> (i32, i32, i32, i32) {
    %c0_i32 = arith.constant 0 : i32
    %c0_i32_0 = arith.constant 0 : i32
    %c0_i32_1 = arith.constant 0 : i32
    %c0_i32_2 = arith.constant 0 : i32
    return %arg0, %c0_i32, %c0_i32_0, %c0_i32_1 : i32, i32, i32, i32
  }
  func.func @transform_3(%arg0: i32) -> (i32, i32, i32) {
    %c0_i32 = arith.constant 0 : i32
    %c0_i32_0 = arith.constant 0 : i32
    %c0_i32_1 = arith.constant 0 : i32
    return %arg0, %c0_i32, %c0_i32_0 : i32, i32, i32
  }
}

module attributes {stable_mosaic.version = 11 : i64} {
  func.func @_conv_stage_kernel(%arg0: i32, %arg1: memref<1x16x16x8xf32, #tpu.memory_space<vmem>>, %arg2: memref<72x8xf32, #tpu.memory_space<vmem>>, %arg3: memref<1x8xf32, #tpu.memory_space<vmem>>, %arg4: memref<1x8xf32, #tpu.memory_space<vmem>>, %arg5: memref<1x16x16x8xf32, #tpu.memory_space<vmem>>, %arg6: memref<1x2x8xf32, #tpu.memory_space<vmem>>, %arg7: memref<18x18x8xf32, #tpu.memory_space<vmem>>, %arg8: memref<256x72xf32, #tpu.memory_space<vmem>>) attributes {dimension_semantics = [#tpu.dimension_semantics<parallel>], iteration_bounds = array<i64: 2>, scalar_prefetch = 0 : i64, scratch_operands = 2 : i64, tpu.core_type = #tpu.core_type<tc>, window_params = [{transform_indices = @transform_0, window_bounds = array<i64: 1, 16, 16, 8>}, {pipeline_mode = #tpu.pipeline_mode<synchronous>, transform_indices = @transform_1, window_bounds = array<i64: 72, 8>}, {pipeline_mode = #tpu.pipeline_mode<synchronous>, transform_indices = @transform_2, window_bounds = array<i64: 1, 8>}, {pipeline_mode = #tpu.pipeline_mode<synchronous>, transform_indices = @transform_3, window_bounds = array<i64: 1, 8>}, {transform_indices = @transform_4, window_bounds = array<i64: 1, 16, 16, 8>}, {transform_indices = @transform_5, window_bounds = array<i64: 1, 2, 8>}]} {
    %c0 = arith.constant 0 : index
    %c0_0 = arith.constant 0 : index
    %c0_1 = arith.constant 0 : index
    %c0_2 = arith.constant 0 : index
    %0 = vector.load %arg1[%c0, %c0_0, %c0_1, %c0_2] : memref<1x16x16x8xf32, #tpu.memory_space<vmem>>, vector<1x16x16x8xf32>
    %1 = vector.shape_cast %0 : vector<1x16x16x8xf32> to vector<16x16x8xf32>
    %c0_3 = arith.constant 0 : index
    %c0_4 = arith.constant 0 : index
    %2 = vector.load %arg3[%c0_3, %c0_4] : memref<1x8xf32, #tpu.memory_space<vmem>>, vector<1x8xf32>
    %3 = vector.shape_cast %2 : vector<1x8xf32> to vector<1x1x8xf32>
    %4 = vector.broadcast %3 : vector<1x1x8xf32> to vector<16x16x8xf32>
    %5 = arith.mulf %1, %4 : vector<16x16x8xf32>
    %c0_5 = arith.constant 0 : index
    %c0_6 = arith.constant 0 : index
    %6 = vector.load %arg4[%c0_5, %c0_6] : memref<1x8xf32, #tpu.memory_space<vmem>>, vector<1x8xf32>
    %7 = vector.shape_cast %6 : vector<1x8xf32> to vector<1x1x8xf32>
    %8 = vector.broadcast %7 : vector<1x1x8xf32> to vector<16x16x8xf32>
    %9 = arith.addf %5, %8 : vector<16x16x8xf32>
    %cst = arith.constant 0.000000e+00 : f32
    %10 = vector.broadcast %cst : f32 to vector<16x16x8xf32>
    %11 = arith.maximumf %9, %10 : vector<16x16x8xf32>
    %cst_7 = arith.constant 0.000000e+00 : f32
    %12 = vector.broadcast %cst_7 : f32 to vector<1x18x8xf32>
    %c0_8 = arith.constant 0 : index
    %c0_9 = arith.constant 0 : index
    %c0_10 = arith.constant 0 : index
    %13 = vector.load %arg7[%c0_8, %c0_9, %c0_10] : memref<18x18x8xf32, #tpu.memory_space<vmem>>, vector<1x18x8xf32>
    tpu.vector_store %arg7[%c0_8, %c0_9, %c0_10], %12 {strides = array<i32>} : memref<18x18x8xf32, #tpu.memory_space<vmem>>, vector<1x18x8xf32>,
    %cst_11 = arith.constant 0.000000e+00 : f32
    %14 = vector.broadcast %cst_11 : f32 to vector<1x18x8xf32>
    %c17 = arith.constant 17 : index
    %c0_12 = arith.constant 0 : index
    %c0_13 = arith.constant 0 : index
    %15 = vector.load %arg7[%c17, %c0_12, %c0_13] : memref<18x18x8xf32, #tpu.memory_space<vmem>>, vector<1x18x8xf32>
    tpu.vector_store %arg7[%c17, %c0_12, %c0_13], %14 {strides = array<i32>} : memref<18x18x8xf32, #tpu.memory_space<vmem>>, vector<1x18x8xf32>,
    %cst_14 = arith.constant 0.000000e+00 : f32
    %16 = vector.broadcast %cst_14 : f32 to vector<18x1x8xf32>
    %c0_15 = arith.constant 0 : index
    %c0_16 = arith.constant 0 : index
    %c0_17 = arith.constant 0 : index
    %17 = vector.load %arg7[%c0_15, %c0_16, %c0_17] : memref<18x18x8xf32, #tpu.memory_space<vmem>>, vector<18x1x8xf32>
    tpu.vector_store %arg7[%c0_15, %c0_16, %c0_17], %16 {strides = array<i32>} : memref<18x18x8xf32, #tpu.memory_space<vmem>>, vector<18x1x8xf32>,
    %cst_18 = arith.constant 0.000000e+00 : f32
    %18 = vector.broadcast %cst_18 : f32 to vector<18x1x8xf32>
    %c0_19 = arith.constant 0 : index
    %c17_20 = arith.constant 17 : index
    %c0_21 = arith.constant 0 : index
    %19 = vector.load %arg7[%c0_19, %c17_20, %c0_21] : memref<18x18x8xf32, #tpu.memory_space<vmem>>, vector<18x1x8xf32>
    tpu.vector_store %arg7[%c0_19, %c17_20, %c0_21], %18 {strides = array<i32>} : memref<18x18x8xf32, #tpu.memory_space<vmem>>, vector<18x1x8xf32>,
    %c1 = arith.constant 1 : index
    %c1_22 = arith.constant 1 : index
    %c0_23 = arith.constant 0 : index
    %20 = vector.load %arg7[%c1, %c1_22, %c0_23] : memref<18x18x8xf32, #tpu.memory_space<vmem>>, vector<16x16x8xf32>
    tpu.vector_store %arg7[%c1, %c1_22, %c0_23], %11 {strides = array<i32>} : memref<18x18x8xf32, #tpu.memory_space<vmem>>, vector<16x16x8xf32>,
    %c0_24 = arith.constant 0 : index
    %c0_25 = arith.constant 0 : index
    %c0_26 = arith.constant 0 : index
    %21 = vector.load %arg7[%c0_24, %c0_25, %c0_26] : memref<18x18x8xf32, #tpu.memory_space<vmem>>, vector<16x16x8xf32>
    %22 = vector.shape_cast %21 : vector<16x16x8xf32> to vector<256x8xf32>
    %c0_27 = arith.constant 0 : index
    %c0_28 = arith.constant 0 : index
    %23 = vector.load %arg8[%c0_27, %c0_28] : memref<256x72xf32, #tpu.memory_space<vmem>>, vector<256x8xf32>
    tpu.vector_store %arg8[%c0_27, %c0_28], %22 {strides = array<i32>} : memref<256x72xf32, #tpu.memory_space<vmem>>, vector<256x8xf32>,
    %c0_29 = arith.constant 0 : index
    %c1_30 = arith.constant 1 : index
    %c0_31 = arith.constant 0 : index
    %24 = vector.load %arg7[%c0_29, %c1_30, %c0_31] : memref<18x18x8xf32, #tpu.memory_space<vmem>>, vector<16x16x8xf32>
    %25 = vector.shape_cast %24 : vector<16x16x8xf32> to vector<256x8xf32>
    %c0_32 = arith.constant 0 : index
    %c8 = arith.constant 8 : index
    %26 = vector.load %arg8[%c0_32, %c8] : memref<256x72xf32, #tpu.memory_space<vmem>>, vector<256x8xf32>
    tpu.vector_store %arg8[%c0_32, %c8], %25 {strides = array<i32>} : memref<256x72xf32, #tpu.memory_space<vmem>>, vector<256x8xf32>,
    %c0_33 = arith.constant 0 : index
    %c2 = arith.constant 2 : index
    %c0_34 = arith.constant 0 : index
    %27 = vector.load %arg7[%c0_33, %c2, %c0_34] : memref<18x18x8xf32, #tpu.memory_space<vmem>>, vector<16x16x8xf32>
    %28 = vector.shape_cast %27 : vector<16x16x8xf32> to vector<256x8xf32>
    %c0_35 = arith.constant 0 : index
    %c16 = arith.constant 16 : index
    %29 = vector.load %arg8[%c0_35, %c16] : memref<256x72xf32, #tpu.memory_space<vmem>>, vector<256x8xf32>
    tpu.vector_store %arg8[%c0_35, %c16], %28 {strides = array<i32>} : memref<256x72xf32, #tpu.memory_space<vmem>>, vector<256x8xf32>,
    %c1_36 = arith.constant 1 : index
    %c0_37 = arith.constant 0 : index
    %c0_38 = arith.constant 0 : index
    %30 = vector.load %arg7[%c1_36, %c0_37, %c0_38] : memref<18x18x8xf32, #tpu.memory_space<vmem>>, vector<16x16x8xf32>
    %31 = vector.shape_cast %30 : vector<16x16x8xf32> to vector<256x8xf32>
    %c0_39 = arith.constant 0 : index
    %c24 = arith.constant 24 : index
    %32 = vector.load %arg8[%c0_39, %c24] : memref<256x72xf32, #tpu.memory_space<vmem>>, vector<256x8xf32>
    tpu.vector_store %arg8[%c0_39, %c24], %31 {strides = array<i32>} : memref<256x72xf32, #tpu.memory_space<vmem>>, vector<256x8xf32>,
    %c1_40 = arith.constant 1 : index
    %c1_41 = arith.constant 1 : index
    %c0_42 = arith.constant 0 : index
    %33 = vector.load %arg7[%c1_40, %c1_41, %c0_42] : memref<18x18x8xf32, #tpu.memory_space<vmem>>, vector<16x16x8xf32>
    %34 = vector.shape_cast %33 : vector<16x16x8xf32> to vector<256x8xf32>
    %c0_43 = arith.constant 0 : index
    %c32 = arith.constant 32 : index
    %35 = vector.load %arg8[%c0_43, %c32] : memref<256x72xf32, #tpu.memory_space<vmem>>, vector<256x8xf32>
    tpu.vector_store %arg8[%c0_43, %c32], %34 {strides = array<i32>} : memref<256x72xf32, #tpu.memory_space<vmem>>, vector<256x8xf32>,
    %c1_44 = arith.constant 1 : index
    %c2_45 = arith.constant 2 : index
    %c0_46 = arith.constant 0 : index
    %36 = vector.load %arg7[%c1_44, %c2_45, %c0_46] : memref<18x18x8xf32, #tpu.memory_space<vmem>>, vector<16x16x8xf32>
    %37 = vector.shape_cast %36 : vector<16x16x8xf32> to vector<256x8xf32>
    %c0_47 = arith.constant 0 : index
    %c40 = arith.constant 40 : index
    %38 = vector.load %arg8[%c0_47, %c40] : memref<256x72xf32, #tpu.memory_space<vmem>>, vector<256x8xf32>
    tpu.vector_store %arg8[%c0_47, %c40], %37 {strides = array<i32>} : memref<256x72xf32, #tpu.memory_space<vmem>>, vector<256x8xf32>,
    %c2_48 = arith.constant 2 : index
    %c0_49 = arith.constant 0 : index
    %c0_50 = arith.constant 0 : index
    %39 = vector.load %arg7[%c2_48, %c0_49, %c0_50] : memref<18x18x8xf32, #tpu.memory_space<vmem>>, vector<16x16x8xf32>
    %40 = vector.shape_cast %39 : vector<16x16x8xf32> to vector<256x8xf32>
    %c0_51 = arith.constant 0 : index
    %c48 = arith.constant 48 : index
    %41 = vector.load %arg8[%c0_51, %c48] : memref<256x72xf32, #tpu.memory_space<vmem>>, vector<256x8xf32>
    tpu.vector_store %arg8[%c0_51, %c48], %40 {strides = array<i32>} : memref<256x72xf32, #tpu.memory_space<vmem>>, vector<256x8xf32>,
    %c2_52 = arith.constant 2 : index
    %c1_53 = arith.constant 1 : index
    %c0_54 = arith.constant 0 : index
    %42 = vector.load %arg7[%c2_52, %c1_53, %c0_54] : memref<18x18x8xf32, #tpu.memory_space<vmem>>, vector<16x16x8xf32>
    %43 = vector.shape_cast %42 : vector<16x16x8xf32> to vector<256x8xf32>
    %c0_55 = arith.constant 0 : index
    %c56 = arith.constant 56 : index
    %44 = vector.load %arg8[%c0_55, %c56] : memref<256x72xf32, #tpu.memory_space<vmem>>, vector<256x8xf32>
    tpu.vector_store %arg8[%c0_55, %c56], %43 {strides = array<i32>} : memref<256x72xf32, #tpu.memory_space<vmem>>, vector<256x8xf32>,
    %c2_56 = arith.constant 2 : index
    %c2_57 = arith.constant 2 : index
    %c0_58 = arith.constant 0 : index
    %45 = vector.load %arg7[%c2_56, %c2_57, %c0_58] : memref<18x18x8xf32, #tpu.memory_space<vmem>>, vector<16x16x8xf32>
    %46 = vector.shape_cast %45 : vector<16x16x8xf32> to vector<256x8xf32>
    %c0_59 = arith.constant 0 : index
    %c64 = arith.constant 64 : index
    %47 = vector.load %arg8[%c0_59, %c64] : memref<256x72xf32, #tpu.memory_space<vmem>>, vector<256x8xf32>
    tpu.vector_store %arg8[%c0_59, %c64], %46 {strides = array<i32>} : memref<256x72xf32, #tpu.memory_space<vmem>>, vector<256x8xf32>,
    %c0_60 = arith.constant 0 : index
    %c0_61 = arith.constant 0 : index
    %48 = vector.load %arg8[%c0_60, %c0_61] : memref<256x72xf32, #tpu.memory_space<vmem>>, vector<256x72xf32>
    %c0_62 = arith.constant 0 : index
    %c0_63 = arith.constant 0 : index
    %49 = vector.load %arg2[%c0_62, %c0_63] : memref<72x8xf32, #tpu.memory_space<vmem>>, vector<72x8xf32>
    %cst_64 = arith.constant dense<0.000000e+00> : vector<256x8xf32>
    %50 = tpu.matmul %48, %49, %cst_64 {dimension_numbers = #tpu.dot_dimension_numbers<[1], [0], [0], [1], [0, 0, 1, 1], [], []>} : vector<256x72xf32>, vector<72x8xf32>, vector<256x8xf32> -> vector<256x8xf32>
    %cst_65 = arith.constant dense<0.000000e+00> : vector<8xf32>
    %51 = vector.multi_reduction <add>, %50, %cst_65 [0] : vector<256x8xf32> to vector<8xf32>
    %52 = vector.shape_cast %51 : vector<8xf32> to vector<1x8xf32>
    %c0_66 = arith.constant 0 : index
    %c0_67 = arith.constant 0 : index
    %c0_68 = arith.constant 0 : index
    %53 = vector.load %arg6[%c0_66, %c0_67, %c0_68] : memref<1x2x8xf32, #tpu.memory_space<vmem>>, vector<1x1x8xf32>
    %54 = vector.shape_cast %53 : vector<1x1x8xf32> to vector<1x8xf32>
    %55 = vector.shape_cast %52 : vector<1x8xf32> to vector<1x1x8xf32>
    tpu.vector_store %arg6[%c0_66, %c0_67, %c0_68], %55 {strides = array<i32>} : memref<1x2x8xf32, #tpu.memory_space<vmem>>, vector<1x1x8xf32>,
    %56 = arith.mulf %50, %50 : vector<256x8xf32>
    %cst_69 = arith.constant dense<0.000000e+00> : vector<8xf32>
    %57 = vector.multi_reduction <add>, %56, %cst_69 [0] : vector<256x8xf32> to vector<8xf32>
    %58 = vector.shape_cast %57 : vector<8xf32> to vector<1x8xf32>
    %c0_70 = arith.constant 0 : index
    %c1_71 = arith.constant 1 : index
    %c0_72 = arith.constant 0 : index
    %59 = vector.load %arg6[%c0_70, %c1_71, %c0_72] : memref<1x2x8xf32, #tpu.memory_space<vmem>>, vector<1x1x8xf32>
    %60 = vector.shape_cast %59 : vector<1x1x8xf32> to vector<1x8xf32>
    %61 = vector.shape_cast %58 : vector<1x8xf32> to vector<1x1x8xf32>
    tpu.vector_store %arg6[%c0_70, %c1_71, %c0_72], %61 {strides = array<i32>} : memref<1x2x8xf32, #tpu.memory_space<vmem>>, vector<1x1x8xf32>,
    %62 = vector.shape_cast %50 : vector<256x8xf32> to vector<16x16x8xf32>
    %c0_73 = arith.constant 0 : index
    %c0_74 = arith.constant 0 : index
    %c0_75 = arith.constant 0 : index
    %c0_76 = arith.constant 0 : index
    %63 = vector.load %arg5[%c0_73, %c0_74, %c0_75, %c0_76] : memref<1x16x16x8xf32, #tpu.memory_space<vmem>>, vector<1x16x16x8xf32>
    %64 = vector.shape_cast %63 : vector<1x16x16x8xf32> to vector<16x16x8xf32>
    %65 = vector.shape_cast %62 : vector<16x16x8xf32> to vector<1x16x16x8xf32>
    tpu.vector_store %arg5[%c0_73, %c0_74, %c0_75, %c0_76], %65 {strides = array<i32>} : memref<1x16x16x8xf32, #tpu.memory_space<vmem>>, vector<1x16x16x8xf32>,
    return
  }
  func.func @transform_0(%arg0: i32) -> (i32, i32, i32, i32) {
    %c0_i32 = arith.constant 0 : i32
    %c0_i32_0 = arith.constant 0 : i32
    %c0_i32_1 = arith.constant 0 : i32
    %c0_i32_2 = arith.constant 0 : i32
    return %arg0, %c0_i32, %c0_i32_0, %c0_i32_1 : i32, i32, i32, i32
  }
  func.func @transform_1(%arg0: i32) -> (i32, i32) {
    %c0_i32 = arith.constant 0 : i32
    %c0_i32_0 = arith.constant 0 : i32
    %c0_i32_1 = arith.constant 0 : i32
    return %c0_i32, %c0_i32_0 : i32, i32
  }
  func.func @transform_2(%arg0: i32) -> (i32, i32) {
    %c0_i32 = arith.constant 0 : i32
    %c0_i32_0 = arith.constant 0 : i32
    %c0_i32_1 = arith.constant 0 : i32
    return %c0_i32, %c0_i32_0 : i32, i32
  }
  func.func @transform_3(%arg0: i32) -> (i32, i32) {
    %c0_i32 = arith.constant 0 : i32
    %c0_i32_0 = arith.constant 0 : i32
    %c0_i32_1 = arith.constant 0 : i32
    return %c0_i32, %c0_i32_0 : i32, i32
  }
  func.func @transform_4(%arg0: i32) -> (i32, i32, i32, i32) {
    %c0_i32 = arith.constant 0 : i32
    %c0_i32_0 = arith.constant 0 : i32
    %c0_i32_1 = arith.constant 0 : i32
    %c0_i32_2 = arith.constant 0 : i32
    return %arg0, %c0_i32, %c0_i32_0, %c0_i32_1 : i32, i32, i32, i32
  }
  func.func @transform_5(%arg0: i32) -> (i32, i32, i32) {
    %c0_i32 = arith.constant 0 : i32
    %c0_i32_0 = arith.constant 0 : i32
    %c0_i32_1 = arith.constant 0 : i32
    return %arg0, %c0_i32, %c0_i32_0 : i32, i32, i32
  }
}

module attributes {stable_mosaic.version = 11 : i64} {
  func.func @_bn_add_relu_kernel(%arg0: i32, %arg1: memref<1x16x16x8xf32, #tpu.memory_space<vmem>>, %arg2: memref<1x16x16x8xf32, #tpu.memory_space<vmem>>, %arg3: memref<1x8xf32, #tpu.memory_space<vmem>>, %arg4: memref<1x8xf32, #tpu.memory_space<vmem>>, %arg5: memref<1x16x16x8xf32, #tpu.memory_space<vmem>>) attributes {dimension_semantics = [#tpu.dimension_semantics<parallel>], iteration_bounds = array<i64: 2>, scalar_prefetch = 0 : i64, scratch_operands = 0 : i64, tpu.core_type = #tpu.core_type<tc>, window_params = [{transform_indices = @transform_0, window_bounds = array<i64: 1, 16, 16, 8>}, {transform_indices = @transform_1, window_bounds = array<i64: 1, 16, 16, 8>}, {pipeline_mode = #tpu.pipeline_mode<synchronous>, transform_indices = @transform_2, window_bounds = array<i64: 1, 8>}, {pipeline_mode = #tpu.pipeline_mode<synchronous>, transform_indices = @transform_3, window_bounds = array<i64: 1, 8>}, {transform_indices = @transform_4, window_bounds = array<i64: 1, 16, 16, 8>}]} {
    %c0 = arith.constant 0 : index
    %c0_0 = arith.constant 0 : index
    %c0_1 = arith.constant 0 : index
    %c0_2 = arith.constant 0 : index
    %0 = vector.load %arg1[%c0, %c0_0, %c0_1, %c0_2] : memref<1x16x16x8xf32, #tpu.memory_space<vmem>>, vector<1x16x16x8xf32>
    %1 = vector.shape_cast %0 : vector<1x16x16x8xf32> to vector<16x16x8xf32>
    %c0_3 = arith.constant 0 : index
    %c0_4 = arith.constant 0 : index
    %2 = vector.load %arg3[%c0_3, %c0_4] : memref<1x8xf32, #tpu.memory_space<vmem>>, vector<1x8xf32>
    %3 = vector.shape_cast %2 : vector<1x8xf32> to vector<1x1x8xf32>
    %4 = vector.broadcast %3 : vector<1x1x8xf32> to vector<16x16x8xf32>
    %5 = arith.mulf %1, %4 : vector<16x16x8xf32>
    %c0_5 = arith.constant 0 : index
    %c0_6 = arith.constant 0 : index
    %6 = vector.load %arg4[%c0_5, %c0_6] : memref<1x8xf32, #tpu.memory_space<vmem>>, vector<1x8xf32>
    %7 = vector.shape_cast %6 : vector<1x8xf32> to vector<1x1x8xf32>
    %8 = vector.broadcast %7 : vector<1x1x8xf32> to vector<16x16x8xf32>
    %9 = arith.addf %5, %8 : vector<16x16x8xf32>
    %c0_7 = arith.constant 0 : index
    %c0_8 = arith.constant 0 : index
    %c0_9 = arith.constant 0 : index
    %c0_10 = arith.constant 0 : index
    %10 = vector.load %arg2[%c0_7, %c0_8, %c0_9, %c0_10] : memref<1x16x16x8xf32, #tpu.memory_space<vmem>>, vector<1x16x16x8xf32>
    %11 = vector.shape_cast %10 : vector<1x16x16x8xf32> to vector<16x16x8xf32>
    %12 = arith.addf %9, %11 : vector<16x16x8xf32>
    %cst = arith.constant 0.000000e+00 : f32
    %13 = vector.broadcast %cst : f32 to vector<16x16x8xf32>
    %14 = arith.maximumf %12, %13 : vector<16x16x8xf32>
    %c0_11 = arith.constant 0 : index
    %c0_12 = arith.constant 0 : index
    %c0_13 = arith.constant 0 : index
    %c0_14 = arith.constant 0 : index
    %15 = vector.load %arg5[%c0_11, %c0_12, %c0_13, %c0_14] : memref<1x16x16x8xf32, #tpu.memory_space<vmem>>, vector<1x16x16x8xf32>
    %16 = vector.shape_cast %15 : vector<1x16x16x8xf32> to vector<16x16x8xf32>
    %17 = vector.shape_cast %14 : vector<16x16x8xf32> to vector<1x16x16x8xf32>
    tpu.vector_store %arg5[%c0_11, %c0_12, %c0_13, %c0_14], %17 {strides = array<i32>} : memref<1x16x16x8xf32, #tpu.memory_space<vmem>>, vector<1x16x16x8xf32>,
    return
  }
  func.func @transform_0(%arg0: i32) -> (i32, i32, i32, i32) {
    %c0_i32 = arith.constant 0 : i32
    %c0_i32_0 = arith.constant 0 : i32
    %c0_i32_1 = arith.constant 0 : i32
    %c0_i32_2 = arith.constant 0 : i32
    return %arg0, %c0_i32, %c0_i32_0, %c0_i32_1 : i32, i32, i32, i32
  }
  func.func @transform_1(%arg0: i32) -> (i32, i32, i32, i32) {
    %c0_i32 = arith.constant 0 : i32
    %c0_i32_0 = arith.constant 0 : i32
    %c0_i32_1 = arith.constant 0 : i32
    %c0_i32_2 = arith.constant 0 : i32
    return %arg0, %c0_i32, %c0_i32_0, %c0_i32_1 : i32, i32, i32, i32
  }
  func.func @transform_2(%arg0: i32) -> (i32, i32) {
    %c0_i32 = arith.constant 0 : i32
    %c0_i32_0 = arith.constant 0 : i32
    %c0_i32_1 = arith.constant 0 : i32
    return %c0_i32, %c0_i32_0 : i32, i32
  }
  func.func @transform_3(%arg0: i32) -> (i32, i32) {
    %c0_i32 = arith.constant 0 : i32
    %c0_i32_0 = arith.constant 0 : i32
    %c0_i32_1 = arith.constant 0 : i32
    return %c0_i32, %c0_i32_0 : i32, i32
  }
  func.func @transform_4(%arg0: i32) -> (i32, i32, i32, i32) {
    %c0_i32 = arith.constant 0 : i32
    %c0_i32_0 = arith.constant 0 : i32
    %c0_i32_1 = arith.constant 0 : i32
    %c0_i32_2 = arith.constant 0 : i32
    return %arg0, %c0_i32, %c0_i32_0, %c0_i32_1 : i32, i32, i32, i32
  }
}

</mosaic_0001>

<llo_original>
// kernel: resblock2d_forward.5
$region0: #{resblock2d_forward.5}
  #allocation0 [shape = 'u32[]', space=smem, size = 0x4, offset = 0x4, fixed_abs, tag = 'smem constant byte address 0x4 - core index']
  #allocation1 [shape = 'u32[144,128]{1,0:T(1,128)}', space=vmem, size = 0x12000, scoped, tag = 'internal scratch']
  %s0 = inlined_call_operand.vmem [shape: f32[2,16,16,8], index: 0, kind: input, shape index: {}]
  %s1 = inlined_call_operand.vmem [shape: f32[2,16,16,8], index: 1, kind: input, shape index: {}]
  %s2 = inlined_call_operand.vmem [shape: f32[1,8], index: 2, kind: input, shape index: {}]
  %s3 = inlined_call_operand.vmem [shape: f32[1,8], index: 3, kind: input, shape index: {}]
  %s4 = inlined_call_operand.vmem [shape: f32[2,16,16,8], index: 4, kind: output, shape index: {}]
  %s5 = sld [smem:[#allocation0]]
  $region49: #{resblock2d_forward.5} parent=0
    _
  %s7 = ssub.s32 1, %s5
  %s8 = scalar_select 0, %s7, %s5
  loop: start=0, step=1, limit=4
  $region2: #{resblock2d_forward.5} parent=0 // loop_pre_header
    _
  $region3: #{resblock2d_forward.5} parent=0 // loop_header
    %s10 = sphi 0, %s14
    %p11 = scmp.ge.s32.totalorder %s10, 4
    %s20 = sphi 0, %s22
    %s23 = sphi 0, %s20
    %s24 = sphi 0, %s23
    %s40 = sphi 0, %s24
    %s46 = sphi 0, %s48
    %s49 = sphi 0, %s46
    %s50 = sphi 0, %s49
    %s66 = sphi 0, %s50
    %s70 = sphi 0, %s70
    %s72 = sphi 0, %s70
    %s73 = sphi 0, %s72
    %s87 = sphi 0, %s73
    %s91 = sphi 0, %s91
    %s93 = sphi 0, %s91
    %s94 = sphi 0, %s93
    %s108 = sphi 0, %s94
    %s114 = sphi 0, %s116
    %s117 = sphi 0, %s114
    %s118 = sphi 0, %s117
    %s134 = sphi 0, %s118
  $region4: #{resblock2d_forward.5} parent=0 // loop_header_branch
    %13 = sbr.rel (%p11) target = $region8
  $region5: #{resblock2d_forward.5} parent=0 // loop_body
    %s15 = ssub.s32 %s10, 1
    %s16 = ssub.s32 %s10, 2
    %s17 = sadd.s32 %s10, 1
    %s18 = ssub.s32 %s10, %s17
    %p19 = scmp.eq.s32.totalorder %s18, 0
    %s21 = sadd.s32 %s20, 1
    %s22 = scalar_select %p19, %s20, %s21
    %p25 = pneg %p19
    %p26 = scmp.eq.s32.totalorder %s10, 1
    %p27 = por %p25, %p26
    %p28 = scmp.ne.s32.totalorder %s20, %s23
    %p29 = scmp.eq.s32.totalorder %s10, 0
    %p30 = por %p28, %p29
    %p31 = scmp.ne.s32.totalorder %s20, %s23
    %p32 = scmp.eq.s32.totalorder %s15, 1
    %p33 = por %p31, %p32
    %p34 = scmp.ne.s32.totalorder %s23, %s24
    %p35 = scmp.eq.s32.totalorder %s15, 0
    %p36 = por %p34, %p35
    %p37 = scmp.ne.s32.totalorder %s23, %s24
    %p38 = scmp.eq.s32.totalorder %s16, 1
    %p39 = por %p37, %p38
    %p41 = scmp.ne.s32.totalorder %s24, %s40
    %p42 = scmp.eq.s32.totalorder %s16, 0
    %p43 = por %p41, %p42
    %s44 = ssub.s32 %s10, %s17
    %p45 = scmp.eq.s32.totalorder %s44, 0
    %s47 = sadd.s32 %s46, 1
    %s48 = scalar_select %p45, %s46, %s47
    %p51 = pneg %p45
    %p52 = scmp.eq.s32.totalorder %s10, 1
    %p53 = por %p51, %p52
    %p54 = scmp.ne.s32.totalorder %s46, %s49
    %p55 = scmp.eq.s32.totalorder %s10, 0
    %p56 = por %p54, %p55
    %p57 = scmp.ne.s32.totalorder %s46, %s49
    %p58 = scmp.eq.s32.totalorder %s15, 1
    %p59 = por %p57, %p58
    %p60 = scmp.ne.s32.totalorder %s49, %s50
    %p61 = scmp.eq.s32.totalorder %s15, 0
    %p62 = por %p60, %p61
    %p63 = scmp.ne.s32.totalorder %s49, %s50
    %p64 = scmp.eq.s32.totalorder %s16, 1
    %p65 = por %p63, %p64
    %p67 = scmp.ne.s32.totalorder %s50, %s66
    %p68 = scmp.eq.s32.totalorder %s16, 0
    %p69 = por %p67, %p68
    %s71 = sadd.s32 %s70, 1
    %p74 = scmp.eq.s32.totalorder %s10, 1
    %p75 = scmp.ne.s32.totalorder %s70, %s72
    %p76 = scmp.eq.s32.totalorder %s10, 0
    %p77 = por %p75, %p76
    %p78 = scmp.ne.s32.totalorder %s70, %s72
    %p79 = scmp.eq.s32.totalorder %s15, 1
    %p80 = por %p78, %p79
    %p81 = scmp.ne.s32.totalorder %s72, %s73
    %p82 = scmp.eq.s32.totalorder %s15, 0
    %p83 = por %p81, %p82
    %p84 = scmp.ne.s32.totalorder %s72, %s73
    %p85 = scmp.eq.s32.totalorder %s16, 1
    %p86 = por %p84, %p85
    %p88 = scmp.ne.s32.totalorder %s73, %s87
    %p89 = scmp.eq.s32.totalorder %s16, 0
    %p90 = por %p88, %p89
    %s92 = sadd.s32 %s91, 1
    %p95 = scmp.eq.s32.totalorder %s10, 1
    %p96 = scmp.ne.s32.totalorder %s91, %s93
    %p97 = scmp.eq.s32.totalorder %s10, 0
    %p98 = por %p96, %p97
    %p99 = scmp.ne.s32.totalorder %s91, %s93
    %p100 = scmp.eq.s32.totalorder %s15, 1
    %p101 = por %p99, %p100
    %p102 = scmp.ne.s32.totalorder %s93, %s94
    %p103 = scmp.eq.s32.totalorder %s15, 0
    %p104 = por %p102, %p103
    %p105 = scmp.ne.s32.totalorder %s93, %s94
    %p106 = scmp.eq.s32.totalorder %s16, 1
    %p107 = por %p105, %p106
    %p109 = scmp.ne.s32.totalorder %s94, %s108
    %p110 = scmp.eq.s32.totalorder %s16, 0
    %p111 = por %p109, %p110
    %s112 = ssub.s32 %s10, %s17
    %p113 = scmp.eq.s32.totalorder %s112, 0
    %s115 = sadd.s32 %s114, 1
    %s116 = scalar_select %p113, %s114, %s115
    %p119 = pneg %p113
    %p120 = scmp.eq.s32.totalorder %s10, 1
    %p121 = por %p119, %p120
    %p122 = scmp.ne.s32.totalorder %s114, %s117
    %p123 = scmp.eq.s32.totalorder %s10, 0
    %p124 = por %p122, %p123
    %p125 = scmp.ne.s32.totalorder %s114, %s117
    %p126 = scmp.eq.s32.totalorder %s15, 1
    %p127 = por %p125, %p126
    %p128 = scmp.ne.s32.totalorder %s117, %s118
    %p129 = scmp.eq.s32.totalorder %s15, 0
    %p130 = por %p128, %p129
    %p131 = scmp.ne.s32.totalorder %s117, %s118
    %p132 = scmp.eq.s32.totalorder %s16, 1
    %p133 = por %p131, %p132
    %p135 = scmp.ne.s32.totalorder %s118, %s134
    %p136 = scmp.eq.s32.totalorder %s16, 0
    %p137 = por %p135, %p136
    %p138 = scmp.le.s32.totalorder 1, %s10
    %p139 = scmp.lt.s32.totalorder %s10, 3
    %p140 = pnand %p138, %p139
    %p141 = pneg %p140
    // Predicated region
    $region9: #{resblock2d_forward.5} parent=5 // pred_check
      _
    $region10: #{resblock2d_forward.5} parent=5 // pred_check_branch
      %143 = sbr.rel (%p140) target = $region12
    $region11: #{resblock2d_forward.5} parent=5 // pred_region
      %s144 = ssub.s32 %s10, 1
      // Predicated region
      $region13: #{resblock2d_forward.5} parent=11 // pred_check
        %p145 = pneg %p83
      $region14: #{resblock2d_forward.5} parent=11 // pred_check_branch
        %147 = sbr.rel (%p145) target = $region16
      $region15: #{resblock2d_forward.5} parent=11 // pred_region
        _
      $region16: #{resblock2d_forward.5} parent=11 // pred_fallthru
        _
      // Predicated region
      $region17: #{resblock2d_forward.5} parent=11 // pred_check
        %p148 = pneg %p104
      $region18: #{resblock2d_forward.5} parent=11 // pred_check_branch
        %150 = sbr.rel (%p148) target = $region20
      $region19: #{resblock2d_forward.5} parent=11 // pred_region
        _
      $region20: #{resblock2d_forward.5} parent=11 // pred_fallthru
        _
    $region12: #{resblock2d_forward.5} parent=5 // pred_fallthru
      _
    %p151 = scmp.lt.s32.totalorder %s10, 2
    // Predicated region
    $region21: #{resblock2d_forward.5} parent=5 // pred_check
      %p152 = pneg %p151
    $region22: #{resblock2d_forward.5} parent=5 // pred_check_branch
      %154 = sbr.rel (%p152) target = $region24
    $region23: #{resblock2d_forward.5} parent=5 // pred_region
      // Predicated region
      $region25: #{resblock2d_forward.5} parent=23 // pred_check
        %p155 = pneg %p30
      $region26: #{resblock2d_forward.5} parent=23 // pred_check_branch
        %157 = sbr.rel (%p155) target = $region28
      $region27: #{resblock2d_forward.5} parent=23 // pred_region
        %p158 = scmp.lt.s32.totalorder %s10, 1
        %s159 = scalar_select %p158, %s10, 1
        %s160 = smul.addr %s159, 32
        %s161 = smul.addr %s160, 8
        %s162 = scalar_lea.vmem %s0, %s161
      $region28: #{resblock2d_forward.5} parent=23 // pred_fallthru
        _
      // Predicated region
      $region29: #{resblock2d_forward.5} parent=23 // pred_check
        %p163 = pneg %p56
      $region30: #{resblock2d_forward.5} parent=23 // pred_check_branch
        %165 = sbr.rel (%p163) target = $region32
      $region31: #{resblock2d_forward.5} parent=23 // pred_region
        %p166 = scmp.lt.s32.totalorder %s10, 1
        %s167 = scalar_select %p166, %s10, 1
        %s168 = smul.addr %s167, 32
        %s169 = smul.addr %s168, 8
        %s170 = scalar_lea.vmem %s1, %s169
      $region32: #{resblock2d_forward.5} parent=23 // pred_fallthru
        _
    $region24: #{resblock2d_forward.5} parent=5 // pred_fallthru
      _
    %p171 = scmp.le.s32.totalorder 1, %s10
    %p172 = scmp.lt.s32.totalorder %s10, 3
    %p173 = pnand %p171, %p172
    %p174 = pneg %p173
    // Predicated region
    $region33: #{resblock2d_forward.5} parent=5 // pred_check
      _
    $region34: #{resblock2d_forward.5} parent=5 // pred_check_branch
      %176 = sbr.rel (%p173) target = $region36
    $region35: #{resblock2d_forward.5} parent=5 // pred_region
      %s177 = ssub.s32 %s10, 1
      %p178 = scmp.lt.s32.totalorder %s15, 1
      %s179 = scalar_select %p178, %s15, 1
      %s180 = smul.addr %s179, 32
      %s181 = smul.addr %s180, 8
      %s182 = scalar_lea.vmem %s0, %s181
      %p183 = pneg %p36
      %p184 = pneg %p33
      %p185 = scmp.lt.s32.totalorder %s15, 1
      %s186 = scalar_select %p185, %s15, 1
      %s187 = smul.addr %s186, 32
      %s188 = smul.addr %s187, 8
      %s189 = scalar_lea.vmem %s1, %s188
      %p190 = pneg %p62
      %p191 = pneg %p59
      %p192 = pneg %p83
      %p193 = pneg %p80
      %p194 = pneg %p104
      %p195 = pneg %p101
      %p196 = pneg %p130
      %p197 = pneg %p127
      %p198 = scmp.lt.s32.totalorder %s15, 1
      %s199 = scalar_select %p198, %s15, 1
      %s200 = smul.addr %s199, 32
      %s201 = smul.addr %s200, 8
      %s202 = scalar_lea.vmem %s4, %s201
      %p203 = scmp.lt.s32.totalorder %s15, 1
      %s204 = scalar_select %p203, %s15, 1
      %s205 = smul.addr %s204, 32
      %s206 = smul.addr %s205, 8
      %s207 = scalar_lea.vmem %s0, %s206
      %p208 = scmp.lt.s32.totalorder %s15, 1
      %s209 = scalar_select %p208, %s15, 1
      %s210 = smul.addr %s209, 32
      %s211 = smul.addr %s210, 8
      %s212 = scalar_lea.vmem %s1, %s211
      %p213 = scmp.lt.s32.totalorder %s15, 1
      %s214 = scalar_select %p213, %s15, 1
      %s215 = smul.addr %s214, 32
      %s216 = smul.addr %s215, 8
      %s217 = scalar_lea.vmem %s4, %s216
      %v218 = vld [vmem:[%s207] sm:$0xff]
      %v219 = vld [vmem:[%s207 + $0x8] sm:$0xff]
      %v220 = vld [vmem:[%s207 + $0x10] sm:$0xff]
      %v221 = vld [vmem:[%s207 + $0x18] sm:$0xff]
      %v222 = vld [vmem:[%s207 + $0x20] sm:$0xff]
      %v223 = vld [vmem:[%s207 + $0x28] sm:$0xff]
      %v224 = vld [vmem:[%s207 + $0x30] sm:$0xff]
      %v225 = vld [vmem:[%s207 + $0x38] sm:$0xff]
      %v226 = vld [vmem:[%s207 + $0x40] sm:$0xff]
      %v227 = vld [vmem:[%s207 + $0x48] sm:$0xff]
      %v228 = vld [vmem:[%s207 + $0x50] sm:$0xff]
      %v229 = vld [vmem:[%s207 + $0x58] sm:$0xff]
      %v230 = vld [vmem:[%s207 + $0x60] sm:$0xff]
      %v231 = vld [vmem:[%s207 + $0x68] sm:$0xff]
      %v232 = vld [vmem:[%s207 + $0x70] sm:$0xff]
      %v233 = vld [vmem:[%s207 + $0x78] sm:$0xff]
      %v234 = vld [vmem:[%s207 + $0x80] sm:$0xff]
      %v235 = vld [vmem:[%s207 + $0x88] sm:$0xff]
      %v236 = vld [vmem:[%s207 + $0x90] sm:$0xff]
      %v237 = vld [vmem:[%s207 + $0x98] sm:$0xff]
      %v238 = vld [vmem:[%s207 + $0xa0] sm:$0xff]
      %v239 = vld [vmem:[%s207 + $0xa8] sm:$0xff]
      %v240 = vld [vmem:[%s207 + $0xb0] sm:$0xff]
      %v241 = vld [vmem:[%s207 + $0xb8] sm:$0xff]
      %v242 = vld [vmem:[%s207 + $0xc0] sm:$0xff]
      %v243 = vld [vmem:[%s207 + $0xc8] sm:$0xff]
      %v244 = vld [vmem:[%s207 + $0xd0] sm:$0xff]
      %v245 = vld [vmem:[%s207 + $0xd8] sm:$0xff]
      %v246 = vld [vmem:[%s207 + $0xe0] sm:$0xff]
      %v247 = vld [vmem:[%s207 + $0xe8] sm:$0xff]
      %v248 = vld [vmem:[%s207 + $0xf0] sm:$0xff]
      %v249 = vld [vmem:[%s207 + $0xf8] sm:$0xff]
      %v250 = vld [vmem:[%s2] sm:$0x1]
      %v252 = vlaneseq
      %v253 = vshrl.u32 %v252, 7
      %v254 = vsub.s32 0, %v253
      %v255 = vrot.slane %v250, %v254
      %v257 = vmul.f32 %v218, %v255
      %v258 = vmul.f32 %v219, %v255
      %v259 = vmul.f32 %v220, %v255
      %v260 = vmul.f32 %v221, %v255
      %v261 = vmul.f32 %v222, %v255
      %v262 = vmul.f32 %v223, %v255
      %v263 = vmul.f32 %v224, %v255
      %v264 = vmul.f32 %v225, %v255
      %v265 = vmul.f32 %v226, %v255
      %v266 = vmul.f32 %v227, %v255
      %v267 = vmul.f32 %v228, %v255
      %v268 = vmul.f32 %v229, %v255
      %v269 = vmul.f32 %v230, %v255
      %v270 = vmul.f32 %v231, %v255
      %v271 = vmul.f32 %v232, %v255
      %v272 = vmul.f32 %v233, %v255
      %v273 = vmul.f32 %v234, %v255
      %v274 = vmul.f32 %v235, %v255
      %v275 = vmul.f32 %v236, %v255
      %v276 = vmul.f32 %v237, %v255
      %v277 = vmul.f32 %v238, %v255
      %v278 = vmul.f32 %v239, %v255
      %v279 = vmul.f32 %v240, %v255
      %v280 = vmul.f32 %v241, %v255
      %v281 = vmul.f32 %v242, %v255
      %v282 = vmul.f32 %v243, %v255
      %v283 = vmul.f32 %v244, %v255
      %v284 = vmul.f32 %v245, %v255
      %v285 = vmul.f32 %v246, %v255
      %v286 = vmul.f32 %v247, %v255
      %v287 = vmul.f32 %v248, %v255
      %v288 = vmul.f32 %v249, %v255
      %v289 = vld [vmem:[%s3] sm:$0x1]
      %v291 = vlaneseq
      %v292 = vshrl.u32 %v291, 7
      %v293 = vsub.s32 0, %v292
      %v294 = vrot.slane %v289, %v293
      %v296 = vadd.f32 %v257, %v294
      %v297 = vadd.f32 %v258, %v294
      %v298 = vadd.f32 %v259, %v294
      %v299 = vadd.f32 %v260, %v294
      %v300 = vadd.f32 %v261, %v294
      %v301 = vadd.f32 %v262, %v294
      %v302 = vadd.f32 %v263, %v294
      %v303 = vadd.f32 %v264, %v294
      %v304 = vadd.f32 %v265, %v294
      %v305 = vadd.f32 %v266, %v294
      %v306 = vadd.f32 %v267, %v294
      %v307 = vadd.f32 %v268, %v294
      %v308 = vadd.f32 %v269, %v294
      %v309 = vadd.f32 %v270, %v294
      %v310 = vadd.f32 %v271, %v294
      %v311 = vadd.f32 %v272, %v294
      %v312 = vadd.f32 %v273, %v294
      %v313 = vadd.f32 %v274, %v294
      %v314 = vadd.f32 %v275, %v294
      %v315 = vadd.f32 %v276, %v294
      %v316 = vadd.f32 %v277, %v294
      %v317 = vadd.f32 %v278, %v294
      %v318 = vadd.f32 %v279, %v294
      %v319 = vadd.f32 %v280, %v294
      %v320 = vadd.f32 %v281, %v294
      %v321 = vadd.f32 %v282, %v294
      %v322 = vadd.f32 %v283, %v294
      %v323 = vadd.f32 %v284, %v294
      %v324 = vadd.f32 %v285, %v294
      %v325 = vadd.f32 %v286, %v294
      %v326 = vadd.f32 %v287, %v294
      %v327 = vadd.f32 %v288, %v294
      %v328 = vld [vmem:[%s212] sm:$0xff]
      %v329 = vld [vmem:[%s212 + $0x8] sm:$0xff]
      %v330 = vld [vmem:[%s212 + $0x10] sm:$0xff]
      %v331 = vld [vmem:[%s212 + $0x18] sm:$0xff]
      %v332 = vld [vmem:[%s212 + $0x20] sm:$0xff]
      %v333 = vld [vmem:[%s212 + $0x28] sm:$0xff]
      %v334 = vld [vmem:[%s212 + $0x30] sm:$0xff]
      %v335 = vld [vmem:[%s212 + $0x38] sm:$0xff]
      %v336 = vld [vmem:[%s212 + $0x40] sm:$0xff]
      %v337 = vld [vmem:[%s212 + $0x48] sm:$0xff]
      %v338 = vld [vmem:[%s212 + $0x50] sm:$0xff]
      %v339 = vld [vmem:[%s212 + $0x58] sm:$0xff]
      %v340 = vld [vmem:[%s212 + $0x60] sm:$0xff]
      %v341 = vld [vmem:[%s212 + $0x68] sm:$0xff]
      %v342 = vld [vmem:[%s212 + $0x70] sm:$0xff]
      %v343 = vld [vmem:[%s212 + $0x78] sm:$0xff]
      %v344 = vld [vmem:[%s212 + $0x80] sm:$0xff]
      %v345 = vld [vmem:[%s212 + $0x88] sm:$0xff]
      %v346 = vld [vmem:[%s212 + $0x90] sm:$0xff]
      %v347 = vld [vmem:[%s212 + $0x98] sm:$0xff]
      %v348 = vld [vmem:[%s212 + $0xa0] sm:$0xff]
      %v349 = vld [vmem:[%s212 + $0xa8] sm:$0xff]
      %v350 = vld [vmem:[%s212 + $0xb0] sm:$0xff]
      %v351 = vld [vmem:[%s212 + $0xb8] sm:$0xff]
      %v352 = vld [vmem:[%s212 + $0xc0] sm:$0xff]
      %v353 = vld [vmem:[%s212 + $0xc8] sm:$0xff]
      %v354 = vld [vmem:[%s212 + $0xd0] sm:$0xff]
      %v355 = vld [vmem:[%s212 + $0xd8] sm:$0xff]
      %v356 = vld [vmem:[%s212 + $0xe0] sm:$0xff]
      %v357 = vld [vmem:[%s212 + $0xe8] sm:$0xff]
      %v358 = vld [vmem:[%s212 + $0xf0] sm:$0xff]
      %v359 = vld [vmem:[%s212 + $0xf8] sm:$0xff]
      %v360 = vadd.f32 %v296, %v328
      %v361 = vadd.f32 %v297, %v329
      %v362 = vadd.f32 %v298, %v330
      %v363 = vadd.f32 %v299, %v331
      %v364 = vadd.f32 %v300, %v332
      %v365 = vadd.f32 %v301, %v333
      %v366 = vadd.f32 %v302, %v334
      %v367 = vadd.f32 %v303, %v335
      %v368 = vadd.f32 %v304, %v336
      %v369 = vadd.f32 %v305, %v337
      %v370 = vadd.f32 %v306, %v338
      %v371 = vadd.f32 %v307, %v339
      %v372 = vadd.f32 %v308, %v340
      %v373 = vadd.f32 %v309, %v341
      %v374 = vadd.f32 %v310, %v342
      %v375 = vadd.f32 %v311, %v343
      %v376 = vadd.f32 %v312, %v344
      %v377 = vadd.f32 %v313, %v345
      %v378 = vadd.f32 %v314, %v346
      %v379 = vadd.f32 %v315, %v347
      %v380 = vadd.f32 %v316, %v348
      %v381 = vadd.f32 %v317, %v349
      %v382 = vadd.f32 %v318, %v350
      %v383 = vadd.f32 %v319, %v351
      %v384 = vadd.f32 %v320, %v352
      %v385 = vadd.f32 %v321, %v353
      %v386 = vadd.f32 %v322, %v354
      %v387 = vadd.f32 %v323, %v355
      %v388 = vadd.f32 %v324, %v356
      %v389 = vadd.f32 %v325, %v357
      %v390 = vadd.f32 %v326, %v358
      %v391 = vadd.f32 %v327, %v359
      %v392 = vmax.f32 %v360, 0.0
      %v393 = vmax.f32 %v361, 0.0
      %v394 = vmax.f32 %v362, 0.0
      %v395 = vmax.f32 %v363, 0.0
      %v396 = vmax.f32 %v364, 0.0
      %v397 = vmax.f32 %v365, 0.0
      %v398 = vmax.f32 %v366, 0.0
      %v399 = vmax.f32 %v367, 0.0
      %v400 = vmax.f32 %v368, 0.0
      %v401 = vmax.f32 %v369, 0.0
      %v402 = vmax.f32 %v370, 0.0
      %v403 = vmax.f32 %v371, 0.0
      %v404 = vmax.f32 %v372, 0.0
      %v405 = vmax.f32 %v373, 0.0
      %v406 = vmax.f32 %v374, 0.0
      %v407 = vmax.f32 %v375, 0.0
      %v408 = vmax.f32 %v376, 0.0
      %v409 = vmax.f32 %v377, 0.0
      %v410 = vmax.f32 %v378, 0.0
      %v411 = vmax.f32 %v379, 0.0
      %v412 = vmax.f32 %v380, 0.0
      %v413 = vmax.f32 %v381, 0.0
      %v414 = vmax.f32 %v382, 0.0
      %v415 = vmax.f32 %v383, 0.0
      %v416 = vmax.f32 %v384, 0.0
      %v417 = vmax.f32 %v385, 0.0
      %v418 = vmax.f32 %v386, 0.0
      %v419 = vmax.f32 %v387, 0.0
      %v420 = vmax.f32 %v388, 0.0
      %v421 = vmax.f32 %v389, 0.0
      %v422 = vmax.f32 %v390, 0.0
      %v423 = vmax.f32 %v391, 0.0
      %vm424 = vcmask 64512
      %425 = vst.msk [vmem:[%s217] sm:$0xff] %vm424, %v392
      %426 = vst.msk [vmem:[%s217 + $0x8] sm:$0xff] %vm424, %v393
      %427 = vst.msk [vmem:[%s217 + $0x10] sm:$0xff] %vm424, %v394
      %428 = vst.msk [vmem:[%s217 + $0x18] sm:$0xff] %vm424, %v395
      %429 = vst.msk [vmem:[%s217 + $0x20] sm:$0xff] %vm424, %v396
      %430 = vst.msk [vmem:[%s217 + $0x28] sm:$0xff] %vm424, %v397
      %431 = vst.msk [vmem:[%s217 + $0x30] sm:$0xff] %vm424, %v398
      %432 = vst.msk [vmem:[%s217 + $0x38] sm:$0xff] %vm424, %v399
      %433 = vst.msk [vmem:[%s217 + $0x40] sm:$0xff] %vm424, %v400
      %434 = vst.msk [vmem:[%s217 + $0x48] sm:$0xff] %vm424, %v401
      %435 = vst.msk [vmem:[%s217 + $0x50] sm:$0xff] %vm424, %v402
      %436 = vst.msk [vmem:[%s217 + $0x58] sm:$0xff] %vm424, %v403
      %437 = vst.msk [vmem:[%s217 + $0x60] sm:$0xff] %vm424, %v404
      %438 = vst.msk [vmem:[%s217 + $0x68] sm:$0xff] %vm424, %v405
      %439 = vst.msk [vmem:[%s217 + $0x70] sm:$0xff] %vm424, %v406
      %440 = vst.msk [vmem:[%s217 + $0x78] sm:$0xff] %vm424, %v407
      %441 = vst.msk [vmem:[%s217 + $0x80] sm:$0xff] %vm424, %v408
      %442 = vst.msk [vmem:[%s217 + $0x88] sm:$0xff] %vm424, %v409
      %443 = vst.msk [vmem:[%s217 + $0x90] sm:$0xff] %vm424, %v410
      %444 = vst.msk [vmem:[%s217 + $0x98] sm:$0xff] %vm424, %v411
      %445 = vst.msk [vmem:[%s217 + $0xa0] sm:$0xff] %vm424, %v412
      %446 = vst.msk [vmem:[%s217 + $0xa8] sm:$0xff] %vm424, %v413
      %447 = vst.msk [vmem:[%s217 + $0xb0] sm:$0xff] %vm424, %v414
      %448 = vst.msk [vmem:[%s217 + $0xb8] sm:$0xff] %vm424, %v415
      %449 = vst.msk [vmem:[%s217 + $0xc0] sm:$0xff] %vm424, %v416
      %450 = vst.msk [vmem:[%s217 + $0xc8] sm:$0xff] %vm424, %v417
      %451 = vst.msk [vmem:[%s217 + $0xd0] sm:$0xff] %vm424, %v418
      %452 = vst.msk [vmem:[%s217 + $0xd8] sm:$0xff] %vm424, %v419
      %453 = vst.msk [vmem:[%s217 + $0xe0] sm:$0xff] %vm424, %v420
      %454 = vst.msk [vmem:[%s217 + $0xe8] sm:$0xff] %vm424, %v421
      %455 = vst.msk [vmem:[%s217 + $0xf0] sm:$0xff] %vm424, %v422
      %456 = vst.msk [vmem:[%s217 + $0xf8] sm:$0xff] %vm424, %v423
      %p457 = scmp.lt.s32.totalorder %s15, 1
      %s458 = scalar_select %p457, %s15, 1
      %s459 = smul.addr %s458, 32
      %s460 = smul.addr %s459, 8
      %s461 = scalar_lea.vmem %s4, %s460
      // Predicated region
      $region37: #{resblock2d_forward.5} parent=35 // pred_check
        %p462 = pneg %p127
      $region38: #{resblock2d_forward.5} parent=35 // pred_check_branch
        %464 = sbr.rel (%p462) target = $region40
      $region39: #{resblock2d_forward.5} parent=35 // pred_region
        _
      $region40: #{resblock2d_forward.5} parent=35 // pred_fallthru
        _
    $region36: #{resblock2d_forward.5} parent=5 // pred_fallthru
      _
    %p465 = scmp.le.s32.totalorder 2, %s10
    // Predicated region
    $region41: #{resblock2d_forward.5} parent=5 // pred_check
      %p466 = pneg %p465
    $region42: #{resblock2d_forward.5} parent=5 // pred_check_branch
      %468 = sbr.rel (%p466) target = $region44
    $region43: #{resblock2d_forward.5} parent=5 // pred_region
      %s469 = ssub.s32 %s10, 2
      // Predicated region
      $region45: #{resblock2d_forward.5} parent=43 // pred_check
        %p470 = pneg %p133
      $region46: #{resblock2d_forward.5} parent=43 // pred_check_branch
        %472 = sbr.rel (%p470) target = $region48
      $region47: #{resblock2d_forward.5} parent=43 // pred_region
        %p473 = scmp.lt.s32.totalorder %s16, 1
        %s474 = scalar_select %p473, %s16, 1
        %s475 = smul.addr %s474, 32
        %s476 = smul.addr %s475, 8
        %s477 = scalar_lea.vmem %s4, %s476
      $region48: #{resblock2d_forward.5} parent=43 // pred_fallthru
        _
    $region44: #{resblock2d_forward.5} parent=5 // pred_fallthru
      _
  $region6: #{resblock2d_forward.5} parent=0 // loop_footer
    %s14 = sadd.s32 1, %s10
  $region7: #{resblock2d_forward.5} parent=0 // loop_footer_branch
    %9 = sbr.rel target = $region3
  $region8: #{resblock2d_forward.5} parent=0 // loop_exit
    _

// kernel: resblock2d_forward.3
$region0: #{resblock2d_forward.3}
  #allocation0 [shape = 'u32[]', space=smem, size = 0x4, offset = 0x4, fixed_abs, tag = 'smem constant byte address 0x4 - core index']
  #allocation1 [shape = 'u32[144,128]{1,0:T(1,128)}', space=vmem, size = 0x12000, scoped, tag = 'internal scratch']
  #allocation2 [shape = 'f32[18,18,8]{2,1,0:T(8,128)}', space=vmem, size = 0x36000, scoped, tag = 'scratch operand']
  #allocation3 [shape = 'f32[256,72]{1,0:T(8,128)}', space=vmem, size = 0x20000, scoped, tag = 'scratch operand']
  %s0 = inlined_call_operand.vmem [shape: f32[2,16,16,8], index: 0, kind: input, shape index: {}]
  %s1 = inlined_call_operand.vmem [shape: f32[72,8], index: 1, kind: input, shape index: {}]
  %s2 = inlined_call_operand.vmem [shape: f32[2,16,16,8], index: 2, kind: output, shape index: {0}]
  %s3 = inlined_call_operand.vmem [shape: f32[2,2,8], index: 3, kind: output, shape index: {1}]
  %4 = xla_tuple %s2, %s3
  %s5 = sld [smem:[#allocation0]]
  $region49: #{resblock2d_forward.3} parent=0
    _
  %s7 = ssub.s32 1, %s5
  %s8 = scalar_select 0, %s7, %s5
  loop: start=0, step=1, limit=4
  $region2: #{resblock2d_forward.3} parent=0 // loop_pre_header
    _
  $region3: #{resblock2d_forward.3} parent=0 // loop_header
    %s10 = sphi 0, %s14
    %p11 = scmp.ge.s32.totalorder %s10, 4
    %s20 = sphi 0, %s22
    %s23 = sphi 0, %s20
    %s24 = sphi 0, %s23
    %s40 = sphi 0, %s24
    %s44 = sphi 0, %s44
    %s46 = sphi 0, %s44
    %s47 = sphi 0, %s46
    %s61 = sphi 0, %s47
    %s67 = sphi 0, %s69
    %s70 = sphi 0, %s67
    %s71 = sphi 0, %s70
    %s87 = sphi 0, %s71
    %s93 = sphi 0, %s95
    %s96 = sphi 0, %s93
    %s97 = sphi 0, %s96
    %s113 = sphi 0, %s97
  $region4: #{resblock2d_forward.3} parent=0 // loop_header_branch
    %13 = sbr.rel (%p11) target = $region8
  $region5: #{resblock2d_forward.3} parent=0 // loop_body
    %s15 = ssub.s32 %s10, 1
    %s16 = ssub.s32 %s10, 2
    %s17 = sadd.s32 %s10, 1
    %s18 = ssub.s32 %s10, %s17
    %p19 = scmp.eq.s32.totalorder %s18, 0
    %s21 = sadd.s32 %s20, 1
    %s22 = scalar_select %p19, %s20, %s21
    %p25 = pneg %p19
    %p26 = scmp.eq.s32.totalorder %s10, 1
    %p27 = por %p25, %p26
    %p28 = scmp.ne.s32.totalorder %s20, %s23
    %p29 = scmp.eq.s32.totalorder %s10, 0
    %p30 = por %p28, %p29
    %p31 = scmp.ne.s32.totalorder %s20, %s23
    %p32 = scmp.eq.s32.totalorder %s15, 1
    %p33 = por %p31, %p32
    %p34 = scmp.ne.s32.totalorder %s23, %s24
    %p35 = scmp.eq.s32.totalorder %s15, 0
    %p36 = por %p34, %p35
    %p37 = scmp.ne.s32.totalorder %s23, %s24
    %p38 = scmp.eq.s32.totalorder %s16, 1
    %p39 = por %p37, %p38
    %p41 = scmp.ne.s32.totalorder %s24, %s40
    %p42 = scmp.eq.s32.totalorder %s16, 0
    %p43 = por %p41, %p42
    %s45 = sadd.s32 %s44, 1
    %p48 = scmp.eq.s32.totalorder %s10, 1
    %p49 = scmp.ne.s32.totalorder %s44, %s46
    %p50 = scmp.eq.s32.totalorder %s10, 0
    %p51 = por %p49, %p50
    %p52 = scmp.ne.s32.totalorder %s44, %s46
    %p53 = scmp.eq.s32.totalorder %s15, 1
    %p54 = por %p52, %p53
    %p55 = scmp.ne.s32.totalorder %s46, %s47
    %p56 = scmp.eq.s32.totalorder %s15, 0
    %p57 = por %p55, %p56
    %p58 = scmp.ne.s32.totalorder %s46, %s47
    %p59 = scmp.eq.s32.totalorder %s16, 1
    %p60 = por %p58, %p59
    %p62 = scmp.ne.s32.totalorder %s47, %s61
    %p63 = scmp.eq.s32.totalorder %s16, 0
    %p64 = por %p62, %p63
    %s65 = ssub.s32 %s10, %s17
    %p66 = scmp.eq.s32.totalorder %s65, 0
    %s68 = sadd.s32 %s67, 1
    %s69 = scalar_select %p66, %s67, %s68
    %p72 = pneg %p66
    %p73 = scmp.eq.s32.totalorder %s10, 1
    %p74 = por %p72, %p73
    %p75 = scmp.ne.s32.totalorder %s67, %s70
    %p76 = scmp.eq.s32.totalorder %s10, 0
    %p77 = por %p75, %p76
    %p78 = scmp.ne.s32.totalorder %s67, %s70
    %p79 = scmp.eq.s32.totalorder %s15, 1
    %p80 = por %p78, %p79
    %p81 = scmp.ne.s32.totalorder %s70, %s71
    %p82 = scmp.eq.s32.totalorder %s15, 0
    %p83 = por %p81, %p82
    %p84 = scmp.ne.s32.totalorder %s70, %s71
    %p85 = scmp.eq.s32.totalorder %s16, 1
    %p86 = por %p84, %p85
    %p88 = scmp.ne.s32.totalorder %s71, %s87
    %p89 = scmp.eq.s32.totalorder %s16, 0
    %p90 = por %p88, %p89
    %s91 = ssub.s32 %s10, %s17
    %p92 = scmp.eq.s32.totalorder %s91, 0
    %s94 = sadd.s32 %s93, 1
    %s95 = scalar_select %p92, %s93, %s94
    %p98 = pneg %p92
    %p99 = scmp.eq.s32.totalorder %s10, 1
    %p100 = por %p98, %p99
    %p101 = scmp.ne.s32.totalorder %s93, %s96
    %p102 = scmp.eq.s32.totalorder %s10, 0
    %p103 = por %p101, %p102
    %p104 = scmp.ne.s32.totalorder %s93, %s96
    %p105 = scmp.eq.s32.totalorder %s15, 1
    %p106 = por %p104, %p105
    %p107 = scmp.ne.s32.totalorder %s96, %s97
    %p108 = scmp.eq.s32.totalorder %s15, 0
    %p109 = por %p107, %p108
    %p110 = scmp.ne.s32.totalorder %s96, %s97
    %p111 = scmp.eq.s32.totalorder %s16, 1
    %p112 = por %p110, %p111
    %p114 = scmp.ne.s32.totalorder %s97, %s113
    %p115 = scmp.eq.s32.totalorder %s16, 0
    %p116 = por %p114, %p115
    %p117 = scmp.le.s32.totalorder 1, %s10
    %p118 = scmp.lt.s32.totalorder %s10, 3
    %p119 = pnand %p117, %p118
    %p120 = pneg %p119
    // Predicated region
    $region9: #{resblock2d_forward.3} parent=5 // pred_check
      _
    $region10: #{resblock2d_forward.3} parent=5 // pred_check_branch
      %122 = sbr.rel (%p119) target = $region12
    $region11: #{resblock2d_forward.3} parent=5 // pred_region
      %s123 = ssub.s32 %s10, 1
      // Predicated region
      $region13: #{resblock2d_forward.3} parent=11 // pred_check
        %p124 = pneg %p57
      $region14: #{resblock2d_forward.3} parent=11 // pred_check_branch
        %126 = sbr.rel (%p124) target = $region16
      $region15: #{resblock2d_forward.3} parent=11 // pred_region
        _
      $region16: #{resblock2d_forward.3} parent=11 // pred_fallthru
        _
    $region12: #{resblock2d_forward.3} parent=5 // pred_fallthru
      _
    %p127 = scmp.lt.s32.totalorder %s10, 2
    // Predicated region
    $region17: #{resblock2d_forward.3} parent=5 // pred_check
      %p128 = pneg %p127
    $region18: #{resblock2d_forward.3} parent=5 // pred_check_branch
      %130 = sbr.rel (%p128) target = $region20
    $region19: #{resblock2d_forward.3} parent=5 // pred_region
      // Predicated region
      $region21: #{resblock2d_forward.3} parent=19 // pred_check
        %p131 = pneg %p30
      $region22: #{resblock2d_forward.3} parent=19 // pred_check_branch
        %133 = sbr.rel (%p131) target = $region24
      $region23: #{resblock2d_forward.3} parent=19 // pred_region
        %p134 = scmp.lt.s32.totalorder %s10, 1
        %s135 = scalar_select %p134, %s10, 1
        %s136 = smul.addr %s135, 32
        %s137 = smul.addr %s136, 8
        %s138 = scalar_lea.vmem %s0, %s137
      $region24: #{resblock2d_forward.3} parent=19 // pred_fallthru
        _
    $region20: #{resblock2d_forward.3} parent=5 // pred_fallthru
      _
    %p139 = scmp.le.s32.totalorder 1, %s10
    %p140 = scmp.lt.s32.totalorder %s10, 3
    %p141 = pnand %p139, %p140
    %p142 = pneg %p141
    // Predicated region
    $region25: #{resblock2d_forward.3} parent=5 // pred_check
      _
    $region26: #{resblock2d_forward.3} parent=5 // pred_check_branch
      %144 = sbr.rel (%p141) target = $region28
    $region27: #{resblock2d_forward.3} parent=5 // pred_region
      %s145 = ssub.s32 %s10, 1
      %p146 = scmp.lt.s32.totalorder %s15, 1
      %s147 = scalar_select %p146, %s15, 1
      %s148 = smul.addr %s147, 32
      %s149 = smul.addr %s148, 8
      %s150 = scalar_lea.vmem %s0, %s149
      %p151 = pneg %p36
      %p152 = pneg %p33
      %p153 = pneg %p57
      %p154 = pneg %p54
      %p155 = pneg %p83
      %p156 = pneg %p80
      %p157 = scmp.lt.s32.totalorder %s15, 1
      %s158 = scalar_select %p157, %s15, 1
      %s159 = smul.addr %s158, 32
      %s160 = smul.addr %s159, 8
      %s161 = scalar_lea.vmem %s2, %s160
      %p162 = pneg %p109
      %p163 = pneg %p106
      %p164 = scmp.lt.s32.totalorder %s15, 1
      %s165 = scalar_select %p164, %s15, 1
      %s166 = smul.addr %s165, 2
      %s167 = scalar_lea.vmem %s3, %s166
      %p168 = scmp.lt.s32.totalorder %s15, 1
      %s169 = scalar_select %p168, %s15, 1
      %s170 = smul.addr %s169, 32
      %s171 = smul.addr %s170, 8
      %s172 = scalar_lea.vmem %s0, %s171
      %p173 = scmp.lt.s32.totalorder %s15, 1
      %s174 = scalar_select %p173, %s15, 1
      %s175 = smul.addr %s174, 32
      %s176 = smul.addr %s175, 8
      %s177 = scalar_lea.vmem %s2, %s176
      %p178 = scmp.lt.s32.totalorder %s15, 1
      %s179 = scalar_select %p178, %s15, 1
      %s180 = smul.addr %s179, 2
      %s181 = scalar_lea.vmem %s3, %s180
      %v182 = vld [vmem:[%s172] sm:$0xff]
      %v183 = vld [vmem:[%s172 + $0x8] sm:$0xff]
      %v184 = vld [vmem:[%s172 + $0x10] sm:$0xff]
      %v185 = vld [vmem:[%s172 + $0x18] sm:$0xff]
      %v186 = vld [vmem:[%s172 + $0x20] sm:$0xff]
      %v187 = vld [vmem:[%s172 + $0x28] sm:$0xff]
      %v188 = vld [vmem:[%s172 + $0x30] sm:$0xff]
      %v189 = vld [vmem:[%s172 + $0x38] sm:$0xff]
      %v190 = vld [vmem:[%s172 + $0x40] sm:$0xff]
      %v191 = vld [vmem:[%s172 + $0x48] sm:$0xff]
      %v192 = vld [vmem:[%s172 + $0x50] sm:$0xff]
      %v193 = vld [vmem:[%s172 + $0x58] sm:$0xff]
      %v194 = vld [vmem:[%s172 + $0x60] sm:$0xff]
      %v195 = vld [vmem:[%s172 + $0x68] sm:$0xff]
      %v196 = vld [vmem:[%s172 + $0x70] sm:$0xff]
      %v197 = vld [vmem:[%s172 + $0x78] sm:$0xff]
      %v198 = vld [vmem:[%s172 + $0x80] sm:$0xff]
      %v199 = vld [vmem:[%s172 + $0x88] sm:$0xff]
      %v200 = vld [vmem:[%s172 + $0x90] sm:$0xff]
      %v201 = vld [vmem:[%s172 + $0x98] sm:$0xff]
      %v202 = vld [vmem:[%s172 + $0xa0] sm:$0xff]
      %v203 = vld [vmem:[%s172 + $0xa8] sm:$0xff]
      %v204 = vld [vmem:[%s172 + $0xb0] sm:$0xff]
      %v205 = vld [vmem:[%s172 + $0xb8] sm:$0xff]
      %v206 = vld [vmem:[%s172 + $0xc0] sm:$0xff]
      %v207 = vld [vmem:[%s172 + $0xc8] sm:$0xff]
      %v208 = vld [vmem:[%s172 + $0xd0] sm:$0xff]
      %v209 = vld [vmem:[%s172 + $0xd8] sm:$0xff]
      %v210 = vld [vmem:[%s172 + $0xe0] sm:$0xff]
      %v211 = vld [vmem:[%s172 + $0xe8] sm:$0xff]
      %v212 = vld [vmem:[%s172 + $0xf0] sm:$0xff]
      %v213 = vld [vmem:[%s172 + $0xf8] sm:$0xff]
      %vm214 = vcmask 64512
      %215 = vst.msk [vmem:[#allocation2] sm:$0xff] %vm214, 0.0
      %216 = vst.msk [vmem:[#allocation2 + $0x8] sm:$0xff] %vm214, 0.0
      %vm217 = vcmask 58368
      %218 = vst.msk [vmem:[#allocation2 + $0x10] sm:$0x3] %vm217, 0.0
      %s219 = scalar_lea.vmem [#allocation2], 408
      %220 = vst.msk [vmem:[%s219] sm:$0xff] %vm214, 0.0
      %221 = vst.msk [vmem:[%s219 + $0x8] sm:$0xff] %vm214, 0.0
      %222 = vst.msk [vmem:[%s219 + $0x10] sm:$0x3] %vm217, 0.0
      %vm223 = vcmask 57344
      %224 = vst.msk [vmem:[#allocation2] sm:$0x1] %vm223, 0.0
      %225 = vst.msk [vmem:[#allocation2 + $0x18] sm:$0x1] %vm223, 0.0
      %226 = vst.msk [vmem:[#allocation2 + $0x30] sm:$0x1] %vm223, 0.0
      %227 = vst.msk [vmem:[#allocation2 + $0x48] sm:$0x1] %vm223, 0.0
      %228 = vst.msk [vmem:[#allocation2 + $0x60] sm:$0x1] %vm223, 0.0
      %229 = vst.msk [vmem:[#allocation2 + $0x78] sm:$0x1] %vm223, 0.0
      %230 = vst.msk [vmem:[#allocation2 + $0x90] sm:$0x1] %vm223, 0.0
      %231 = vst.msk [vmem:[#allocation2 + $0xa8] sm:$0x1] %vm223, 0.0
      %232 = vst.msk [vmem:[#allocation2 + $0xc0] sm:$0x1] %vm223, 0.0
      %233 = vst.msk [vmem:[#allocation2 + $0xd8] sm:$0x1] %vm223, 0.0
      %234 = vst.msk [vmem:[#allocation2 + $0xf0] sm:$0x1] %vm223, 0.0
      %235 = vst.msk [vmem:[#allocation2 + $0x108] sm:$0x1] %vm223, 0.0
      %236 = vst.msk [vmem:[#allocation2 + $0x120] sm:$0x1] %vm223, 0.0
      %237 = vst.msk [vmem:[#allocation2 + $0x138] sm:$0x1] %vm223, 0.0
      %238 = vst.msk [vmem:[#allocation2 + $0x150] sm:$0x1] %vm223, 0.0
      %239 = vst.msk [vmem:[#allocation2 + $0x168] sm:$0x1] %vm223, 0.0
      %240 = vst.msk [vmem:[#allocation2 + $0x180] sm:$0x1] %vm223, 0.0
      %241 = vst.msk [vmem:[#allocation2 + $0x198] sm:$0x1] %vm223, 0.0
      %242 = vst.msk [vmem:[#allocation2 + $0x11] sm:$0x1] %vm223, 0.0
      %243 = vst.msk [vmem:[#allocation2 + $0x29] sm:$0x1] %vm223, 0.0
      %244 = vst.msk [vmem:[#allocation2 + $0x41] sm:$0x1] %vm223, 0.0
      %245 = vst.msk [vmem:[#allocation2 + $0x59] sm:$0x1] %vm223, 0.0
      %246 = vst.msk [vmem:[#allocation2 + $0x71] sm:$0x1] %vm223, 0.0
      %247 = vst.msk [vmem:[#allocation2 + $0x89] sm:$0x1] %vm223, 0.0
      %248 = vst.msk [vmem:[#allocation2 + $0xa1] sm:$0x1] %vm223, 0.0
      %249 = vst.msk [vmem:[#allocation2 + $0xb9] sm:$0x1] %vm223, 0.0
      %250 = vst.msk [vmem:[#allocation2 + $0xd1] sm:$0x1] %vm223, 0.0
      %251 = vst.msk [vmem:[#allocation2 + $0xe9] sm:$0x1] %vm223, 0.0
      %252 = vst.msk [vmem:[#allocation2 + $0x101] sm:$0x1] %vm223, 0.0
      %253 = vst.msk [vmem:[#allocation2 + $0x119] sm:$0x1] %vm223, 0.0
      %254 = vst.msk [vmem:[#allocation2 + $0x131] sm:$0x1] %vm223, 0.0
      %255 = vst.msk [vmem:[#allocation2 + $0x149] sm:$0x1] %vm223, 0.0
      %256 = vst.msk [vmem:[#allocation2 + $0x161] sm:$0x1] %vm223, 0.0
      %257 = vst.msk [vmem:[#allocation2 + $0x179] sm:$0x1] %vm223, 0.0
      %258 = vst.msk [vmem:[#allocation2 + $0x191] sm:$0x1] %vm223, 0.0
      %259 = vst.msk [vmem:[#allocation2 + $0x1a9] sm:$0x1] %vm223, 0.0
      %s260 = scalar_lea.vmem [#allocation2], 24
      %261 = vst.msk [vmem:[%s260 + $0x1] sm:$0xff] %vm214, %v182
      %262 = vst.msk [vmem:[%s260 + $0x9] sm:$0xff] %vm214, %v183
      %263 = vst.msk [vmem:[%s260 + $0x19] sm:$0xff] %vm214, %v184
      %264 = vst.msk [vmem:[%s260 + $0x21] sm:$0xff] %vm214, %v185
      %265 = vst.msk [vmem:[%s260 + $0x31] sm:$0xff] %vm214, %v186
      %266 = vst.msk [vmem:[%s260 + $0x39] sm:$0xff] %vm214, %v187
      %267 = vst.msk [vmem:[%s260 + $0x49] sm:$0xff] %vm214, %v188
      %268 = vst.msk [vmem:[%s260 + $0x51] sm:$0xff] %vm214, %v189
      %269 = vst.msk [vmem:[%s260 + $0x61] sm:$0xff] %vm214, %v190
      %270 = vst.msk [vmem:[%s260 + $0x69] sm:$0xff] %vm214, %v191
      %271 = vst.msk [vmem:[%s260 + $0x79] sm:$0xff] %vm214, %v192
      %272 = vst.msk [vmem:[%s260 + $0x81] sm:$0xff] %vm214, %v193
      %273 = vst.msk [vmem:[%s260 + $0x91] sm:$0xff] %vm214, %v194
      %274 = vst.msk [vmem:[%s260 + $0x99] sm:$0xff] %vm214, %v195
      %275 = vst.msk [vmem:[%s260 + $0xa9] sm:$0xff] %vm214, %v196
      %276 = vst.msk [vmem:[%s260 + $0xb1] sm:$0xff] %vm214, %v197
      %277 = vst.msk [vmem:[%s260 + $0xc1] sm:$0xff] %vm214, %v198
      %278 = vst.msk [vmem:[%s260 + $0xc9] sm:$0xff] %vm214, %v199
      %279 = vst.msk [vmem:[%s260 + $0xd9] sm:$0xff] %vm214, %v200
      %280 = vst.msk [vmem:[%s260 + $0xe1] sm:$0xff] %vm214, %v201
      %281 = vst.msk [vmem:[%s260 + $0xf1] sm:$0xff] %vm214, %v202
      %282 = vst.msk [vmem:[%s260 + $0xf9] sm:$0xff] %vm214, %v203
      %283 = vst.msk [vmem:[%s260 + $0x109] sm:$0xff] %vm214, %v204
      %284 = vst.msk [vmem:[%s260 + $0x111] sm:$0xff] %vm214, %v205
      %285 = vst.msk [vmem:[%s260 + $0x121] sm:$0xff] %vm214, %v206
      %286 = vst.msk [vmem:[%s260 + $0x129] sm:$0xff] %vm214, %v207
      %287 = vst.msk [vmem:[%s260 + $0x139] sm:$0xff] %vm214, %v208
      %288 = vst.msk [vmem:[%s260 + $0x141] sm:$0xff] %vm214, %v209
      %289 = vst.msk [vmem:[%s260 + $0x151] sm:$0xff] %vm214, %v210
      %290 = vst.msk [vmem:[%s260 + $0x159] sm:$0xff] %vm214, %v211
      %291 = vst.msk [vmem:[%s260 + $0x169] sm:$0xff] %vm214, %v212
      %292 = vst.msk [vmem:[%s260 + $0x171] sm:$0xff] %vm214, %v213
      %v293 = vld [vmem:[#allocation2] sm:$0xff]
      %v294 = vld [vmem:[#allocation2 + $0x8] sm:$0xff]
      %v295 = vld [vmem:[#allocation2 + $0x18] sm:$0xff]
      %v296 = vld [vmem:[#allocation2 + $0x20] sm:$0xff]
      %v297 = vld [vmem:[#allocation2 + $0x30] sm:$0xff]
      %v298 = vld [vmem:[#allocation2 + $0x38] sm:$0xff]
      %v299 = vld [vmem:[#allocation2 + $0x48] sm:$0xff]
      %v300 = vld [vmem:[#allocation2 + $0x50] sm:$0xff]
      %v301 = vld [vmem:[#allocation2 + $0x60] sm:$0xff]
      %v302 = vld [vmem:[#allocation2 + $0x68] sm:$0xff]
      %v303 = vld [vmem:[#allocation2 + $0x78] sm:$0xff]
      %v304 = vld [vmem:[#allocation2 + $0x80] sm:$0xff]
      %v305 = vld [vmem:[#allocation2 + $0x90] sm:$0xff]
      %v306 = vld [vmem:[#allocation2 + $0x98] sm:$0xff]
      %v307 = vld [vmem:[#allocation2 + $0xa8] sm:$0xff]
      %v308 = vld [vmem:[#allocation2 + $0xb0] sm:$0xff]
      %v309 = vld [vmem:[#allocation2 + $0xc0] sm:$0xff]
      %v310 = vld [vmem:[#allocation2 + $0xc8] sm:$0xff]
      %v311 = vld [vmem:[#allocation2 + $0xd8] sm:$0xff]
      %v312 = vld [vmem:[#allocation2 + $0xe0] sm:$0xff]
      %v313 = vld [vmem:[#allocation2 + $0xf0] sm:$0xff]
      %v314 = vld [vmem:[#allocation2 + $0xf8] sm:$0xff]
      %v315 = vld [vmem:[#allocation2 + $0x108] sm:$0xff]
      %v316 = vld [vmem:[#allocation2 + $0x110] sm:$0xff]
      %v317 = vld [vmem:[#allocation2 + $0x120] sm:$0xff]
      %v318 = vld [vmem:[#allocation2 + $0x128] sm:$0xff]
      %v319 = vld [vmem:[#allocation2 + $0x138] sm:$0xff]
      %v320 = vld [vmem:[#allocation2 + $0x140] sm:$0xff]
      %v321 = vld [vmem:[#allocation2 + $0x150] sm:$0xff]
      %v322 = vld [vmem:[#allocation2 + $0x158] sm:$0xff]
      %v323 = vld [vmem:[#allocation2 + $0x168] sm:$0xff]
      %v324 = vld [vmem:[#allocation2 + $0x170] sm:$0xff]
      %325 = vst.msk [vmem:[#allocation3] sm:$0xff] %vm214, %v293
      %326 = vst.msk [vmem:[#allocation3 + $0x8] sm:$0xff] %vm214, %v294
      %327 = vst.msk [vmem:[#allocation3 + $0x10] sm:$0xff] %vm214, %v295
      %328 = vst.msk [vmem:[#allocation3 + $0x18] sm:$0xff] %vm214, %v296
      %329 = vst.msk [vmem:[#allocation3 + $0x20] sm:$0xff] %vm214, %v297
      %330 = vst.msk [vmem:[#allocation3 + $0x28] sm:$0xff] %vm214, %v298
      %331 = vst.msk [vmem:[#allocation3 + $0x30] sm:$0xff] %vm214, %v299
      %332 = vst.msk [vmem:[#allocation3 + $0x38] sm:$0xff] %vm214, %v300
      %333 = vst.msk [vmem:[#allocation3 + $0x40] sm:$0xff] %vm214, %v301
      %334 = vst.msk [vmem:[#allocation3 + $0x48] sm:$0xff] %vm214, %v302
      %335 = vst.msk [vmem:[#allocation3 + $0x50] sm:$0xff] %vm214, %v303
      %336 = vst.msk [vmem:[#allocation3 + $0x58] sm:$0xff] %vm214, %v304
      %337 = vst.msk [vmem:[#allocation3 + $0x60] sm:$0xff] %vm214, %v305
      %338 = vst.msk [vmem:[#allocation3 + $0x68] sm:$0xff] %vm214, %v306
      %339 = vst.msk [vmem:[#allocation3 + $0x70] sm:$0xff] %vm214, %v307
      %340 = vst.msk [vmem:[#allocation3 + $0x78] sm:$0xff] %vm214, %v308
      %341 = vst.msk [vmem:[#allocation3 + $0x80] sm:$0xff] %vm214, %v309
      %342 = vst.msk [vmem:[#allocation3 + $0x88] sm:$0xff] %vm214, %v310
      %343 = vst.msk [vmem:[#allocation3 + $0x90] sm:$0xff] %vm214, %v311
      %344 = vst.msk [vmem:[#allocation3 + $0x98] sm:$0xff] %vm214, %v312
      %345 = vst.msk [vmem:[#allocation3 + $0xa0] sm:$0xff] %vm214, %v313
      %346 = vst.msk [vmem:[#allocation3 + $0xa8] sm:$0xff] %vm214, %v314
      %347 = vst.msk [vmem:[#allocation3 + $0xb0] sm:$0xff] %vm214, %v315
      %348 = vst.msk [vmem:[#allocation3 + $0xb8] sm:$0xff] %vm214, %v316
      %349 = vst.msk [vmem:[#allocation3 + $0xc0] sm:$0xff] %vm214, %v317
      %350 = vst.msk [vmem:[#allocation3 + $0xc8] sm:$0xff] %vm214, %v318
      %351 = vst.msk [vmem:[#allocation3 + $0xd0] sm:$0xff] %vm214, %v319
      %352 = vst.msk [vmem:[#allocation3 + $0xd8] sm:$0xff] %vm214, %v320
      %353 = vst.msk [vmem:[#allocation3 + $0xe0] sm:$0xff] %vm214, %v321
      %354 = vst.msk [vmem:[#allocation3 + $0xe8] sm:$0xff] %vm214, %v322
      %355 = vst.msk [vmem:[#allocation3 + $0xf0] sm:$0xff] %vm214, %v323
      %356 = vst.msk [vmem:[#allocation3 + $0xf8] sm:$0xff] %vm214, %v324
      %v357 = vld [vmem:[#allocation2 + $0x1] sm:$0xff]
      %v358 = vld [vmem:[#allocation2 + $0x9] sm:$0xff]
      %v359 = vld [vmem:[#allocation2 + $0x19] sm:$0xff]
      %v360 = vld [vmem:[#allocation2 + $0x21] sm:$0xff]
      %v361 = vld [vmem:[#allocation2 + $0x31] sm:$0xff]
      %v362 = vld [vmem:[#allocation2 + $0x39] sm:$0xff]
      %v363 = vld [vmem:[#allocation2 + $0x49] sm:$0xff]
      %v364 = vld [vmem:[#allocation2 + $0x51] sm:$0xff]
      %v365 = vld [vmem:[#allocation2 + $0x61] sm:$0xff]
      %v366 = vld [vmem:[#allocation2 + $0x69] sm:$0xff]
      %v367 = vld [vmem:[#allocation2 + $0x79] sm:$0xff]
      %v368 = vld [vmem:[#allocation2 + $0x81] sm:$0xff]
      %v369 = vld [vmem:[#allocation2 + $0x91] sm:$0xff]
      %v370 = vld [vmem:[#allocation2 + $0x99] sm:$0xff]
      %v371 = vld [vmem:[#allocation2 + $0xa9] sm:$0xff]
      %v372 = vld [vmem:[#allocation2 + $0xb1] sm:$0xff]
      %v373 = vld [vmem:[#allocation2 + $0xc1] sm:$0xff]
      %v374 = vld [vmem:[#allocation2 + $0xc9] sm:$0xff]
      %v375 = vld [vmem:[#allocation2 + $0xd9] sm:$0xff]
      %v376 = vld [vmem:[#allocation2 + $0xe1] sm:$0xff]
      %v377 = vld [vmem:[#allocation2 + $0xf1] sm:$0xff]
      %v378 = vld [vmem:[#allocation2 + $0xf9] sm:$0xff]
      %v379 = vld [vmem:[#allocation2 + $0x109] sm:$0xff]
      %v380 = vld [vmem:[#allocation2 + $0x111] sm:$0xff]
      %v381 = vld [vmem:[#allocation2 + $0x121] sm:$0xff]
      %v382 = vld [vmem:[#allocation2 + $0x129] sm:$0xff]
      %v383 = vld [vmem:[#allocation2 + $0x139] sm:$0xff]
      %v384 = vld [vmem:[#allocation2 + $0x141] sm:$0xff]
      %v385 = vld [vmem:[#allocation2 + $0x151] sm:$0xff]
      %v386 = vld [vmem:[#allocation2 + $0x159] sm:$0xff]
      %v387 = vld [vmem:[#allocation2 + $0x169] sm:$0xff]
      %v388 = vld [vmem:[#allocation2 + $0x171] sm:$0xff]
      %421 = vrot.lane.b32.xlu0 %v357, 8
      %v422 = vpop.permute.xlu0 %421
      %423 = vrot.lane.b32.xlu0 %v358, 8
      %v424 = vpop.permute.xlu0 %423
      %425 = vrot.lane.b32.xlu0 %v359, 8
      %v426 = vpop.permute.xlu0 %425
      %427 = vrot.lane.b32.xlu0 %v360, 8
      %v428 = vpop.permute.xlu0 %427
      %429 = vrot.lane.b32.xlu0 %v361, 8
      %v430 = vpop.permute.xlu0 %429
      %431 = vrot.lane.b32.xlu0 %v362, 8
      %v432 = vpop.permute.xlu0 %431
      %433 = vrot.lane.b32.xlu0 %v363, 8
      %v434 = vpop.permute.xlu0 %433
      %435 = vrot.lane.b32.xlu0 %v364, 8
      %v436 = vpop.permute.xlu0 %435
      %437 = vrot.lane.b32.xlu0 %v365, 8
      %v438 = vpop.permute.xlu0 %437
      %439 = vrot.lane.b32.xlu0 %v366, 8
      %v440 = vpop.permute.xlu0 %439
      %441 = vrot.lane.b32.xlu0 %v367, 8
      %v442 = vpop.permute.xlu0 %441
      %443 = vrot.lane.b32.xlu0 %v368, 8
      %v444 = vpop.permute.xlu0 %443
      %445 = vrot.lane.b32.xlu0 %v369, 8
      %v446 = vpop.permute.xlu0 %445
      %447 = vrot.lane.b32.xlu0 %v370, 8
      %v448 = vpop.permute.xlu0 %447
      %449 = vrot.lane.b32.xlu0 %v371, 8
      %v450 = vpop.permute.xlu0 %449
      %451 = vrot.lane.b32.xlu0 %v372, 8
      %v452 = vpop.permute.xlu0 %451
      %453 = vrot.lane.b32.xlu0 %v373, 8
      %v454 = vpop.permute.xlu0 %453
      %455 = vrot.lane.b32.xlu0 %v374, 8
      %v456 = vpop.permute.xlu0 %455
      %457 = vrot.lane.b32.xlu0 %v375, 8
      %v458 = vpop.permute.xlu0 %457
      %459 = vrot.lane.b32.xlu0 %v376, 8
      %v460 = vpop.permute.xlu0 %459
      %461 = vrot.lane.b32.xlu0 %v377, 8
      %v462 = vpop.permute.xlu0 %461
      %463 = vrot.lane.b32.xlu0 %v378, 8
      %v464 = vpop.permute.xlu0 %463
      %465 = vrot.lane.b32.xlu0 %v379, 8
      %v466 = vpop.permute.xlu0 %465
      %467 = vrot.lane.b32.xlu0 %v380, 8
      %v468 = vpop.permute.xlu0 %467
      %469 = vrot.lane.b32.xlu0 %v381, 8
      %v470 = vpop.permute.xlu0 %469
      %471 = vrot.lane.b32.xlu0 %v382, 8
      %v472 = vpop.permute.xlu0 %471
      %473 = vrot.lane.b32.xlu0 %v383, 8
      %v474 = vpop.permute.xlu0 %473
      %475 = vrot.lane.b32.xlu0 %v384, 8
      %v476 = vpop.permute.xlu0 %475
      %477 = vrot.lane.b32.xlu0 %v385, 8
      %v478 = vpop.permute.xlu0 %477
      %479 = vrot.lane.b32.xlu0 %v386, 8
      %v480 = vpop.permute.xlu0 %479
      %481 = vrot.lane.b32.xlu0 %v387, 8
      %v482 = vpop.permute.xlu0 %481
      %483 = vrot.lane.b32.xlu0 %v388, 8
      %v484 = vpop.permute.xlu0 %483
      %vm517 = vcmask 130112
      %518 = vst.msk [vmem:[#allocation3] sm:$0xff] %vm517, %v422
      %519 = vst.msk [vmem:[#allocation3 + $0x8] sm:$0xff] %vm517, %v424
      %520 = vst.msk [vmem:[#allocation3 + $0x10] sm:$0xff] %vm517, %v426
      %521 = vst.msk [vmem:[#allocation3 + $0x18] sm:$0xff] %vm517, %v428
      %522 = vst.msk [vmem:[#allocation3 + $0x20] sm:$0xff] %vm517, %v430
      %523 = vst.msk [vmem:[#allocation3 + $0x28] sm:$0xff] %vm517, %v432
      %524 = vst.msk [vmem:[#allocation3 + $0x30] sm:$0xff] %vm517, %v434
      %525 = vst.msk [vmem:[#allocation3 + $0x38] sm:$0xff] %vm517, %v436
      %526 = vst.msk [vmem:[#allocation3 + $0x40] sm:$0xff] %vm517, %v438
      %527 = vst.msk [vmem:[#allocation3 + $0x48] sm:$0xff] %vm517, %v440
      %528 = vst.msk [vmem:[#allocation3 + $0x50] sm:$0xff] %vm517, %v442
      %529 = vst.msk [vmem:[#allocation3 + $0x58] sm:$0xff] %vm517, %v444
      %530 = vst.msk [vmem:[#allocation3 + $0x60] sm:$0xff] %vm517, %v446
      %531 = vst.msk [vmem:[#allocation3 + $0x68] sm:$0xff] %vm517, %v448
      %532 = vst.msk [vmem:[#allocation3 + $0x70] sm:$0xff] %vm517, %v450
      %533 = vst.msk [vmem:[#allocation3 + $0x78] sm:$0xff] %vm517, %v452
      %534 = vst.msk [vmem:[#allocation3 + $0x80] sm:$0xff] %vm517, %v454
      %535 = vst.msk [vmem:[#allocation3 + $0x88] sm:$0xff] %vm517, %v456
      %536 = vst.msk [vmem:[#allocation3 + $0x90] sm:$0xff] %vm517, %v458
      %537 = vst.msk [vmem:[#allocation3 + $0x98] sm:$0xff] %vm517, %v460
      %538 = vst.msk [vmem:[#allocation3 + $0xa0] sm:$0xff] %vm517, %v462
      %539 = vst.msk [vmem:[#allocation3 + $0xa8] sm:$0xff] %vm517, %v464
      %540 = vst.msk [vmem:[#allocation3 + $0xb0] sm:$0xff] %vm517, %v466
      %541 = vst.msk [vmem:[#allocation3 + $0xb8] sm:$0xff] %vm517, %v468
      %542 = vst.msk [vmem:[#allocation3 + $0xc0] sm:$0xff] %vm517, %v470
      %543 = vst.msk [vmem:[#allocation3 + $0xc8] sm:$0xff] %vm517, %v472
      %544 = vst.msk [vmem:[#allocation3 + $0xd0] sm:$0xff] %vm517, %v474
      %545 = vst.msk [vmem:[#allocation3 + $0xd8] sm:$0xff] %vm517, %v476
      %546 = vst.msk [vmem:[#allocation3 + $0xe0] sm:$0xff] %vm517, %v478
      %547 = vst.msk [vmem:[#allocation3 + $0xe8] sm:$0xff] %vm517, %v480
      %548 = vst.msk [vmem:[#allocation3 + $0xf0] sm:$0xff] %vm517, %v482
      %549 = vst.msk [vmem:[#allocation3 + $0xf8] sm:$0xff] %vm517, %v484
      %v550 = vld [vmem:[#allocation2 + $0x2] sm:$0xff]
      %v551 = vld [vmem:[#allocation2 + $0xa] sm:$0xff]
      %v552 = vld [vmem:[#allocation2 + $0x1a] sm:$0xff]
      %v553 = vld [vmem:[#allocation2 + $0x22] sm:$0xff]
      %v554 = vld [vmem:[#allocation2 + $0x32] sm:$0xff]
      %v555 = vld [vmem:[#allocation2 + $0x3a] sm:$0xff]
      %v556 = vld [vmem:[#allocation2 + $0x4a] sm:$0xff]
      %v557 = vld [vmem:[#allocation2 + $0x52] sm:$0xff]
      %v558 = vld [vmem:[#allocation2 + $0x62] sm:$0xff]
      %v559 = vld [vmem:[#allocation2 + $0x6a] sm:$0xff]
      %v560 = vld [vmem:[#allocation2 + $0x7a] sm:$0xff]
      %v561 = vld [vmem:[#allocation2 + $0x82] sm:$0xff]
      %v562 = vld [vmem:[#allocation2 + $0x92] sm:$0xff]
      %v563 = vld [vmem:[#allocation2 + $0x9a] sm:$0xff]
      %v564 = vld [vmem:[#allocation2 + $0xaa] sm:$0xff]
      %v565 = vld [vmem:[#allocation2 + $0xb2] sm:$0xff]
      %v566 = vld [vmem:[#allocation2 + $0xc2] sm:$0xff]
      %v567 = vld [vmem:[#allocation2 + $0xca] sm:$0xff]
      %v568 = vld [vmem:[#allocation2 + $0xda] sm:$0xff]
      %v569 = vld [vmem:[#allocation2 + $0xe2] sm:$0xff]
      %v570 = vld [vmem:[#allocation2 + $0xf2] sm:$0xff]
      %v571 = vld [vmem:[#allocation2 + $0xfa] sm:$0xff]
      %v572 = vld [vmem:[#allocation2 + $0x10a] sm:$0xff]
      %v573 = vld [vmem:[#allocation2 + $0x112] sm:$0xff]
      %v574 = vld [vmem:[#allocation2 + $0x122] sm:$0xff]
      %v575 = vld [vmem:[#allocation2 + $0x12a] sm:$0xff]
      %v576 = vld [vmem:[#allocation2 + $0x13a] sm:$0xff]
      %v577 = vld [vmem:[#allocation2 + $0x142] sm:$0xff]
      %v578 = vld [vmem:[#allocation2 + $0x152] sm:$0xff]
      %v579 = vld [vmem:[#allocation2 + $0x15a] sm:$0xff]
      %v580 = vld [vmem:[#allocation2 + $0x16a] sm:$0xff]
      %v581 = vld [vmem:[#allocation2 + $0x172] sm:$0xff]
      %614 = vrot.lane.b32.xlu0 %v550, 16
      %v615 = vpop.permute.xlu0 %614
      %616 = vrot.lane.b32.xlu0 %v551, 16
      %v617 = vpop.permute.xlu0 %616
      %618 = vrot.lane.b32.xlu0 %v552, 16
      %v619 = vpop.permute.xlu0 %618
      %620 = vrot.lane.b32.xlu0 %v553, 16
      %v621 = vpop.permute.xlu0 %620
      %622 = vrot.lane.b32.xlu0 %v554, 16
      %v623 = vpop.permute.xlu0 %622
      %624 = vrot.lane.b32.xlu0 %v555, 16
      %v625 = vpop.permute.xlu0 %624
      %626 = vrot.lane.b32.xlu0 %v556, 16
      %v627 = vpop.permute.xlu0 %626
      %628 = vrot.lane.b32.xlu0 %v557, 16
      %v629 = vpop.permute.xlu0 %628
      %630 = vrot.lane.b32.xlu0 %v558, 16
      %v631 = vpop.permute.xlu0 %630
      %632 = vrot.lane.b32.xlu0 %v559, 16
      %v633 = vpop.permute.xlu0 %632
      %634 = vrot.lane.b32.xlu0 %v560, 16
      %v635 = vpop.permute.xlu0 %634
      %636 = vrot.lane.b32.xlu0 %v561, 16
      %v637 = vpop.permute.xlu0 %636
      %638 = vrot.lane.b32.xlu0 %v562, 16
      %v639 = vpop.permute.xlu0 %638
      %640 = vrot.lane.b32.xlu0 %v563, 16
      %v641 = vpop.permute.xlu0 %640
      %642 = vrot.lane.b32.xlu0 %v564, 16
      %v643 = vpop.permute.xlu0 %642
      %644 = vrot.lane.b32.xlu0 %v565, 16
      %v645 = vpop.permute.xlu0 %644
      %646 = vrot.lane.b32.xlu0 %v566, 16
      %v647 = vpop.permute.xlu0 %646
      %648 = vrot.lane.b32.xlu0 %v567, 16
      %v649 = vpop.permute.xlu0 %648
      %650 = vrot.lane.b32.xlu0 %v568, 16
      %v651 = vpop.permute.xlu0 %650
      %652 = vrot.lane.b32.xlu0 %v569, 16
      %v653 = vpop.permute.xlu0 %652
      %654 = vrot.lane.b32.xlu0 %v570, 16
      %v655 = vpop.permute.xlu0 %654
      %656 = vrot.lane.b32.xlu0 %v571, 16
      %v657 = vpop.permute.xlu0 %656
      %658 = vrot.lane.b32.xlu0 %v572, 16
      %v659 = vpop.permute.xlu0 %658
      %660 = vrot.lane.b32.xlu0 %v573, 16
      %v661 = vpop.permute.xlu0 %660
      %662 = vrot.lane.b32.xlu0 %v574, 16
      %v663 = vpop.permute.xlu0 %662
      %664 = vrot.lane.b32.xlu0 %v575, 16
      %v665 = vpop.permute.xlu0 %664
      %666 = vrot.lane.b32.xlu0 %v576, 16
      %v667 = vpop.permute.xlu0 %666
      %668 = vrot.lane.b32.xlu0 %v577, 16
      %v669 = vpop.permute.xlu0 %668
      %670 = vrot.lane.b32.xlu0 %v578, 16
      %v671 = vpop.permute.xlu0 %670
      %672 = vrot.lane.b32.xlu0 %v579, 16
      %v673 = vpop.permute.xlu0 %672
      %674 = vrot.lane.b32.xlu0 %v580, 16
      %v675 = vpop.permute.xlu0 %674
      %676 = vrot.lane.b32.xlu0 %v581, 16
      %v677 = vpop.permute.xlu0 %676
      %vm710 = vcmask 195712
      %711 = vst.msk [vmem:[#allocation3] sm:$0xff] %vm710, %v615
      %712 = vst.msk [vmem:[#allocation3 + $0x8] sm:$0xff] %vm710, %v617
      %713 = vst.msk [vmem:[#allocation3 + $0x10] sm:$0xff] %vm710, %v619
      %714 = vst.msk [vmem:[#allocation3 + $0x18] sm:$0xff] %vm710, %v621
      %715 = vst.msk [vmem:[#allocation3 + $0x20] sm:$0xff] %vm710, %v623
      %716 = vst.msk [vmem:[#allocation3 + $0x28] sm:$0xff] %vm710, %v625
      %717 = vst.msk [vmem:[#allocation3 + $0x30] sm:$0xff] %vm710, %v627
      %718 = vst.msk [vmem:[#allocation3 + $0x38] sm:$0xff] %vm710, %v629
      %719 = vst.msk [vmem:[#allocation3 + $0x40] sm:$0xff] %vm710, %v631
      %720 = vst.msk [vmem:[#allocation3 + $0x48] sm:$0xff] %vm710, %v633
      %721 = vst.msk [vmem:[#allocation3 + $0x50] sm:$0xff] %vm710, %v635
      %722 = vst.msk [vmem:[#allocation3 + $0x58] sm:$0xff] %vm710, %v637
      %723 = vst.msk [vmem:[#allocation3 + $0x60] sm:$0xff] %vm710, %v639
      %724 = vst.msk [vmem:[#allocation3 + $0x68] sm:$0xff] %vm710, %v641
      %725 = vst.msk [vmem:[#allocation3 + $0x70] sm:$0xff] %vm710, %v643
      %726 = vst.msk [vmem:[#allocation3 + $0x78] sm:$0xff] %vm710, %v645
      %727 = vst.msk [vmem:[#allocation3 + $0x80] sm:$0xff] %vm710, %v647
      %728 = vst.msk [vmem:[#allocation3 + $0x88] sm:$0xff] %vm710, %v649
      %729 = vst.msk [vmem:[#allocation3 + $0x90] sm:$0xff] %vm710, %v651
      %730 = vst.msk [vmem:[#allocation3 + $0x98] sm:$0xff] %vm710, %v653
      %731 = vst.msk [vmem:[#allocation3 + $0xa0] sm:$0xff] %vm710, %v655
      %732 = vst.msk [vmem:[#allocation3 + $0xa8] sm:$0xff] %vm710, %v657
      %733 = vst.msk [vmem:[#allocation3 + $0xb0] sm:$0xff] %vm710, %v659
      %734 = vst.msk [vmem:[#allocation3 + $0xb8] sm:$0xff] %vm710, %v661
      %735 = vst.msk [vmem:[#allocation3 + $0xc0] sm:$0xff] %vm710, %v663
      %736 = vst.msk [vmem:[#allocation3 + $0xc8] sm:$0xff] %vm710, %v665
      %737 = vst.msk [vmem:[#allocation3 + $0xd0] sm:$0xff] %vm710, %v667
      %738 = vst.msk [vmem:[#allocation3 + $0xd8] sm:$0xff] %vm710, %v669
      %739 = vst.msk [vmem:[#allocation3 + $0xe0] sm:$0xff] %vm710, %v671
      %740 = vst.msk [vmem:[#allocation3 + $0xe8] sm:$0xff] %vm710, %v673
      %741 = vst.msk [vmem:[#allocation3 + $0xf0] sm:$0xff] %vm710, %v675
      %742 = vst.msk [vmem:[#allocation3 + $0xf8] sm:$0xff] %vm710, %v677
      %v743 = vld [vmem:[%s260] sm:$0xff]
      %v744 = vld [vmem:[%s260 + $0x8] sm:$0xff]
      %v745 = vld [vmem:[%s260 + $0x18] sm:$0xff]
      %v746 = vld [vmem:[%s260 + $0x20] sm:$0xff]
      %v747 = vld [vmem:[%s260 + $0x30] sm:$0xff]
      %v748 = vld [vmem:[%s260 + $0x38] sm:$0xff]
      %v749 = vld [vmem:[%s260 + $0x48] sm:$0xff]
      %v750 = vld [vmem:[%s260 + $0x50] sm:$0xff]
      %v751 = vld [vmem:[%s260 + $0x60] sm:$0xff]
      %v752 = vld [vmem:[%s260 + $0x68] sm:$0xff]
      %v753 = vld [vmem:[%s260 + $0x78] sm:$0xff]
      %v754 = vld [vmem:[%s260 + $0x80] sm:$0xff]
      %v755 = vld [vmem:[%s260 + $0x90] sm:$0xff]
      %v756 = vld [vmem:[%s260 + $0x98] sm:$0xff]
      %v757 = vld [vmem:[%s260 + $0xa8] sm:$0xff]
      %v758 = vld [vmem:[%s260 + $0xb0] sm:$0xff]
      %v759 = vld [vmem:[%s260 + $0xc0] sm:$0xff]
      %v760 = vld [vmem:[%s260 + $0xc8] sm:$0xff]
      %v761 = vld [vmem:[%s260 + $0xd8] sm:$0xff]
      %v762 = vld [vmem:[%s260 + $0xe0] sm:$0xff]
      %v763 = vld [vmem:[%s260 + $0xf0] sm:$0xff]
      %v764 = vld [vmem:[%s260 + $0xf8] sm:$0xff]
      %v765 = vld [vmem:[%s260 + $0x108] sm:$0xff]
      %v766 = vld [vmem:[%s260 + $0x110] sm:$0xff]
      %v767 = vld [vmem:[%s260 + $0x120] sm:$0xff]
      %v768 = vld [vmem:[%s260 + $0x128] sm:$0xff]
      %v769 = vld [vmem:[%s260 + $0x138] sm:$0xff]
      %v770 = vld [vmem:[%s260 + $0x140] sm:$0xff]
      %v771 = vld [vmem:[%s260 + $0x150] sm:$0xff]
      %v772 = vld [vmem:[%s260 + $0x158] sm:$0xff]
      %v773 = vld [vmem:[%s260 + $0x168] sm:$0xff]
      %v774 = vld [vmem:[%s260 + $0x170] sm:$0xff]
      %807 = vrot.lane.b32.xlu0 %v743, 24
      %v808 = vpop.permute.xlu0 %807
      %809 = vrot.lane.b32.xlu0 %v744, 24
      %v810 = vpop.permute.xlu0 %809
      %811 = vrot.lane.b32.xlu0 %v745, 24
      %v812 = vpop.permute.xlu0 %811
      %813 = vrot.lane.b32.xlu0 %v746, 24
      %v814 = vpop.permute.xlu0 %813
      %815 = vrot.lane.b32.xlu0 %v747, 24
      %v816 = vpop.permute.xlu0 %815
      %817 = vrot.lane.b32.xlu0 %v748, 24
      %v818 = vpop.permute.xlu0 %817
      %819 = vrot.lane.b32.xlu0 %v749, 24
      %v820 = vpop.permute.xlu0 %819
      %821 = vrot.lane.b32.xlu0 %v750, 24
      %v822 = vpop.permute.xlu0 %821
      %823 = vrot.lane.b32.xlu0 %v751, 24
      %v824 = vpop.permute.xlu0 %823
      %825 = vrot.lane.b32.xlu0 %v752, 24
      %v826 = vpop.permute.xlu0 %825
      %827 = vrot.lane.b32.xlu0 %v753, 24
      %v828 = vpop.permute.xlu0 %827
      %829 = vrot.lane.b32.xlu0 %v754, 24
      %v830 = vpop.permute.xlu0 %829
      %831 = vrot.lane.b32.xlu0 %v755, 24
      %v832 = vpop.permute.xlu0 %831
      %833 = vrot.lane.b32.xlu0 %v756, 24
      %v834 = vpop.permute.xlu0 %833
      %835 = vrot.lane.b32.xlu0 %v757, 24
      %v836 = vpop.permute.xlu0 %835
      %837 = vrot.lane.b32.xlu0 %v758, 24
      %v838 = vpop.permute.xlu0 %837
      %839 = vrot.lane.b32.xlu0 %v759, 24
      %v840 = vpop.permute.xlu0 %839
      %841 = vrot.lane.b32.xlu0 %v760, 24
      %v842 = vpop.permute.xlu0 %841
      %843 = vrot.lane.b32.xlu0 %v761, 24
      %v844 = vpop.permute.xlu0 %843
      %845 = vrot.lane.b32.xlu0 %v762, 24
      %v846 = vpop.permute.xlu0 %845
      %847 = vrot.lane.b32.xlu0 %v763, 24
      %v848 = vpop.permute.xlu0 %847
      %849 = vrot.lane.b32.xlu0 %v764, 24
      %v850 = vpop.permute.xlu0 %849
      %851 = vrot.lane.b32.xlu0 %v765, 24
      %v852 = vpop.permute.xlu0 %851
      %853 = vrot.lane.b32.xlu0 %v766, 24
      %v854 = vpop.permute.xlu0 %853
      %855 = vrot.lane.b32.xlu0 %v767, 24
      %v856 = vpop.permute.xlu0 %855
      %857 = vrot.lane.b32.xlu0 %v768, 24
      %v858 = vpop.permute.xlu0 %857
      %859 = vrot.lane.b32.xlu0 %v769, 24
      %v860 = vpop.permute.xlu0 %859
      %861 = vrot.lane.b32.xlu0 %v770, 24
      %v862 = vpop.permute.xlu0 %861
      %863 = vrot.lane.b32.xlu0 %v771, 24
      %v864 = vpop.permute.xlu0 %863
      %865 = vrot.lane.b32.xlu0 %v772, 24
      %v866 = vpop.permute.xlu0 %865
      %867 = vrot.lane.b32.xlu0 %v773, 24
      %v868 = vpop.permute.xlu0 %867
      %869 = vrot.lane.b32.xlu0 %v774, 24
      %v870 = vpop.permute.xlu0 %869
      %vm903 = vcmask 261312
      %904 = vst.msk [vmem:[#allocation3] sm:$0xff] %vm903, %v808
      %905 = vst.msk [vmem:[#allocation3 + $0x8] sm:$0xff] %vm903, %v810
      %906 = vst.msk [vmem:[#allocation3 + $0x10] sm:$0xff] %vm903, %v812
      %907 = vst.msk [vmem:[#allocation3 + $0x18] sm:$0xff] %vm903, %v814
      %908 = vst.msk [vmem:[#allocation3 + $0x20] sm:$0xff] %vm903, %v816
      %909 = vst.msk [vmem:[#allocation3 + $0x28] sm:$0xff] %vm903, %v818
      %910 = vst.msk [vmem:[#allocation3 + $0x30] sm:$0xff] %vm903, %v820
      %911 = vst.msk [vmem:[#allocation3 + $0x38] sm:$0xff] %vm903, %v822
      %912 = vst.msk [vmem:[#allocation3 + $0x40] sm:$0xff] %vm903, %v824
      %913 = vst.msk [vmem:[#allocation3 + $0x48] sm:$0xff] %vm903, %v826
      %914 = vst.msk [vmem:[#allocation3 + $0x50] sm:$0xff] %vm903, %v828
      %915 = vst.msk [vmem:[#allocation3 + $0x58] sm:$0xff] %vm903, %v830
      %916 = vst.msk [vmem:[#allocation3 + $0x60] sm:$0xff] %vm903, %v832
      %917 = vst.msk [vmem:[#allocation3 + $0x68] sm:$0xff] %vm903, %v834
      %918 = vst.msk [vmem:[#allocation3 + $0x70] sm:$0xff] %vm903, %v836
      %919 = vst.msk [vmem:[#allocation3 + $0x78] sm:$0xff] %vm903, %v838
      %920 = vst.msk [vmem:[#allocation3 + $0x80] sm:$0xff] %vm903, %v840
      %921 = vst.msk [vmem:[#allocation3 + $0x88] sm:$0xff] %vm903, %v842
      %922 = vst.msk [vmem:[#allocation3 + $0x90] sm:$0xff] %vm903, %v844
      %923 = vst.msk [vmem:[#allocation3 + $0x98] sm:$0xff] %vm903, %v846
      %924 = vst.msk [vmem:[#allocation3 + $0xa0] sm:$0xff] %vm903, %v848
      %925 = vst.msk [vmem:[#allocation3 + $0xa8] sm:$0xff] %vm903, %v850
      %926 = vst.msk [vmem:[#allocation3 + $0xb0] sm:$0xff] %vm903, %v852
      %927 = vst.msk [vmem:[#allocation3 + $0xb8] sm:$0xff] %vm903, %v854
      %928 = vst.msk [vmem:[#allocation3 + $0xc0] sm:$0xff] %vm903, %v856
      %929 = vst.msk [vmem:[#allocation3 + $0xc8] sm:$0xff] %vm903, %v858
      %930 = vst.msk [vmem:[#allocation3 + $0xd0] sm:$0xff] %vm903, %v860
      %931 = vst.msk [vmem:[#allocation3 + $0xd8] sm:$0xff] %vm903, %v862
      %932 = vst.msk [vmem:[#allocation3 + $0xe0] sm:$0xff] %vm903, %v864
      %933 = vst.msk [vmem:[#allocation3 + $0xe8] sm:$0xff] %vm903, %v866
      %934 = vst.msk [vmem:[#allocation3 + $0xf0] sm:$0xff] %vm903, %v868
      %935 = vst.msk [vmem:[#allocation3 + $0xf8] sm:$0xff] %vm903, %v870
      %v936 = vld [vmem:[%s260 + $0x1] sm:$0xff]
      %v937 = vld [vmem:[%s260 + $0x9] sm:$0xff]
      %v938 = vld [vmem:[%s260 + $0x19] sm:$0xff]
      %v939 = vld [vmem:[%s260 + $0x21] sm:$0xff]
      %v940 = vld [vmem:[%s260 + $0x31] sm:$0xff]
      %v941 = vld [vmem:[%s260 + $0x39] sm:$0xff]
      %v942 = vld [vmem:[%s260 + $0x49] sm:$0xff]
      %v943 = vld [vmem:[%s260 + $0x51] sm:$0xff]
      %v944 = vld [vmem:[%s260 + $0x61] sm:$0xff]
      %v945 = vld [vmem:[%s260 + $0x69] sm:$0xff]
      %v946 = vld [vmem:[%s260 + $0x79] sm:$0xff]
      %v947 = vld [vmem:[%s260 + $0x81] sm:$0xff]
      %v948 = vld [vmem:[%s260 + $0x91] sm:$0xff]
      %v949 = vld [vmem:[%s260 + $0x99] sm:$0xff]
      %v950 = vld [vmem:[%s260 + $0xa9] sm:$0xff]
      %v951 = vld [vmem:[%s260 + $0xb1] sm:$0xff]
      %v952 = vld [vmem:[%s260 + $0xc1] sm:$0xff]
      %v953 = vld [vmem:[%s260 + $0xc9] sm:$0xff]
      %v954 = vld [vmem:[%s260 + $0xd9] sm:$0xff]
      %v955 = vld [vmem:[%s260 + $0xe1] sm:$0xff]
      %v956 = vld [vmem:[%s260 + $0xf1] sm:$0xff]
      %v957 = vld [vmem:[%s260 + $0xf9] sm:$0xff]
      %v958 = vld [vmem:[%s260 + $0x109] sm:$0xff]
      %v959 = vld [vmem:[%s260 + $0x111] sm:$0xff]
      %v960 = vld [vmem:[%s260 + $0x121] sm:$0xff]
      %v961 = vld [vmem:[%s260 + $0x129] sm:$0xff]
      %v962 = vld [vmem:[%s260 + $0x139] sm:$0xff]
      %v963 = vld [vmem:[%s260 + $0x141] sm:$0xff]
      %v964 = vld [vmem:[%s260 + $0x151] sm:$0xff]
      %v965 = vld [vmem:[%s260 + $0x159] sm:$0xff]
      %v966 = vld [vmem:[%s260 + $0x169] sm:$0xff]
      %v967 = vld [vmem:[%s260 + $0x171] sm:$0xff]
      %1000 = vrot.lane.b32.xlu0 %v936, 32
      %v1001 = vpop.permute.xlu0 %1000
      %1002 = vrot.lane.b32.xlu0 %v937, 32
      %v1003 = vpop.permute.xlu0 %1002
      %1004 = vrot.lane.b32.xlu0 %v938, 32
      %v1005 = vpop.permute.xlu0 %1004
      %1006 = vrot.lane.b32.xlu0 %v939, 32
      %v1007 = vpop.permute.xlu0 %1006
      %1008 = vrot.lane.b32.xlu0 %v940, 32
      %v1009 = vpop.permute.xlu0 %1008
      %1010 = vrot.lane.b32.xlu0 %v941, 32
      %v1011 = vpop.permute.xlu0 %1010
      %1012 = vrot.lane.b32.xlu0 %v942, 32
      %v1013 = vpop.permute.xlu0 %1012
      %1014 = vrot.lane.b32.xlu0 %v943, 32
      %v1015 = vpop.permute.xlu0 %1014
      %1016 = vrot.lane.b32.xlu0 %v944, 32
      %v1017 = vpop.permute.xlu0 %1016
      %1018 = vrot.lane.b32.xlu0 %v945, 32
      %v1019 = vpop.permute.xlu0 %1018
      %1020 = vrot.lane.b32.xlu0 %v946, 32
      %v1021 = vpop.permute.xlu0 %1020
      %1022 = vrot.lane.b32.xlu0 %v947, 32
      %v1023 = vpop.permute.xlu0 %1022
      %1024 = vrot.lane.b32.xlu0 %v948, 32
      %v1025 = vpop.permute.xlu0 %1024
      %1026 = vrot.lane.b32.xlu0 %v949, 32
      %v1027 = vpop.permute.xlu0 %1026
      %1028 = vrot.lane.b32.xlu0 %v950, 32
      %v1029 = vpop.permute.xlu0 %1028
      %1030 = vrot.lane.b32.xlu0 %v951, 32
      %v1031 = vpop.permute.xlu0 %1030
      %1032 = vrot.lane.b32.xlu0 %v952, 32
      %v1033 = vpop.permute.xlu0 %1032
      %1034 = vrot.lane.b32.xlu0 %v953, 32
      %v1035 = vpop.permute.xlu0 %1034
      %1036 = vrot.lane.b32.xlu0 %v954, 32
      %v1037 = vpop.permute.xlu0 %1036
      %1038 = vrot.lane.b32.xlu0 %v955, 32
      %v1039 = vpop.permute.xlu0 %1038
      %1040 = vrot.lane.b32.xlu0 %v956, 32
      %v1041 = vpop.permute.xlu0 %1040
      %1042 = vrot.lane.b32.xlu0 %v957, 32
      %v1043 = vpop.permute.xlu0 %1042
      %1044 = vrot.lane.b32.xlu0 %v958, 32
      %v1045 = vpop.permute.xlu0 %1044
      %1046 = vrot.lane.b32.xlu0 %v959, 32
      %v1047 = vpop.permute.xlu0 %1046
      %1048 = vrot.lane.b32.xlu0 %v960, 32
      %v1049 = vpop.permute.xlu0 %1048
      %1050 = vrot.lane.b32.xlu0 %v961, 32
      %v1051 = vpop.permute.xlu0 %1050
      %1052 = vrot.lane.b32.xlu0 %v962, 32
      %v1053 = vpop.permute.xlu0 %1052
      %1054 = vrot.lane.b32.xlu0 %v963, 32
      %v1055 = vpop.permute.xlu0 %1054
      %1056 = vrot.lane.b32.xlu0 %v964, 32
      %v1057 = vpop.permute.xlu0 %1056
      %1058 = vrot.lane.b32.xlu0 %v965, 32
      %v1059 = vpop.permute.xlu0 %1058
      %1060 = vrot.lane.b32.xlu0 %v966, 32
      %v1061 = vpop.permute.xlu0 %1060
      %1062 = vrot.lane.b32.xlu0 %v967, 32
      %v1063 = vpop.permute.xlu0 %1062
      %vm1096 = vcmask 326912
      %1097 = vst.msk [vmem:[#allocation3] sm:$0xff] %vm1096, %v1001
      %1098 = vst.msk [vmem:[#allocation3 + $0x8] sm:$0xff] %vm1096, %v1003
      %1099 = vst.msk [vmem:[#allocation3 + $0x10] sm:$0xff] %vm1096, %v1005
      %1100 = vst.msk [vmem:[#allocation3 + $0x18] sm:$0xff] %vm1096, %v1007
      %1101 = vst.msk [vmem:[#allocation3 + $0x20] sm:$0xff] %vm1096, %v1009
      %1102 = vst.msk [vmem:[#allocation3 + $0x28] sm:$0xff] %vm1096, %v1011
      %1103 = vst.msk [vmem:[#allocation3 + $0x30] sm:$0xff] %vm1096, %v1013
      %1104 = vst.msk [vmem:[#allocation3 + $0x38] sm:$0xff] %vm1096, %v1015
      %1105 = vst.msk [vmem:[#allocation3 + $0x40] sm:$0xff] %vm1096, %v1017
      %1106 = vst.msk [vmem:[#allocation3 + $0x48] sm:$0xff] %vm1096, %v1019
      %1107 = vst.msk [vmem:[#allocation3 + $0x50] sm:$0xff] %vm1096, %v1021
      %1108 = vst.msk [vmem:[#allocation3 + $0x58] sm:$0xff] %vm1096, %v1023
      %1109 = vst.msk [vmem:[#allocation3 + $0x60] sm:$0xff] %vm1096, %v1025
      %1110 = vst.msk [vmem:[#allocation3 + $0x68] sm:$0xff] %vm1096, %v1027
      %1111 = vst.msk [vmem:[#allocation3 + $0x70] sm:$0xff] %vm1096, %v1029
      %1112 = vst.msk [vmem:[#allocation3 + $0x78] sm:$0xff] %vm1096, %v1031
      %1113 = vst.msk [vmem:[#allocation3 + $0x80] sm:$0xff] %vm1096, %v1033
      %1114 = vst.msk [vmem:[#allocation3 + $0x88] sm:$0xff] %vm1096, %v1035
      %1115 = vst.msk [vmem:[#allocation3 + $0x90] sm:$0xff] %vm1096, %v1037
      %1116 = vst.msk [vmem:[#allocation3 + $0x98] sm:$0xff] %vm1096, %v1039
      %1117 = vst.msk [vmem:[#allocation3 + $0xa0] sm:$0xff] %vm1096, %v1041
      %1118 = vst.msk [vmem:[#allocation3 + $0xa8] sm:$0xff] %vm1096, %v1043
      %1119 = vst.msk [vmem:[#allocation3 + $0xb0] sm:$0xff] %vm1096, %v1045
      %1120 = vst.msk [vmem:[#allocation3 + $0xb8] sm:$0xff] %vm1096, %v1047
      %1121 = vst.msk [vmem:[#allocation3 + $0xc0] sm:$0xff] %vm1096, %v1049
      %1122 = vst.msk [vmem:[#allocation3 + $0xc8] sm:$0xff] %vm1096, %v1051
      %1123 = vst.msk [vmem:[#allocation3 + $0xd0] sm:$0xff] %vm1096, %v1053
      %1124 = vst.msk [vmem:[#allocation3 + $0xd8] sm:$0xff] %vm1096, %v1055
      %1125 = vst.msk [vmem:[#allocation3 + $0xe0] sm:$0xff] %vm1096, %v1057
      %1126 = vst.msk [vmem:[#allocation3 + $0xe8] sm:$0xff] %vm1096, %v1059
      %1127 = vst.msk [vmem:[#allocation3 + $0xf0] sm:$0xff] %vm1096, %v1061
      %1128 = vst.msk [vmem:[#allocation3 + $0xf8] sm:$0xff] %vm1096, %v1063
      %v1129 = vld [vmem:[%s260 + $0x2] sm:$0xff]
      %v1130 = vld [vmem:[%s260 + $0xa] sm:$0xff]
      %v1131 = vld [vmem:[%s260 + $0x1a] sm:$0xff]
      %v1132 = vld [vmem:[%s260 + $0x22] sm:$0xff]
      %v1133 = vld [vmem:[%s260 + $0x32] sm:$0xff]
      %v1134 = vld [vmem:[%s260 + $0x3a] sm:$0xff]
      %v1135 = vld [vmem:[%s260 + $0x4a] sm:$0xff]
      %v1136 = vld [vmem:[%s260 + $0x52] sm:$0xff]
      %v1137 = vld [vmem:[%s260 + $0x62] sm:$0xff]
      %v1138 = vld [vmem:[%s260 + $0x6a] sm:$0xff]
      %v1139 = vld [vmem:[%s260 + $0x7a] sm:$0xff]
      %v1140 = vld [vmem:[%s260 + $0x82] sm:$0xff]
      %v1141 = vld [vmem:[%s260 + $0x92] sm:$0xff]
      %v1142 = vld [vmem:[%s260 + $0x9a] sm:$0xff]
      %v1143 = vld [vmem:[%s260 + $0xaa] sm:$0xff]
      %v1144 = vld [vmem:[%s260 + $0xb2] sm:$0xff]
      %v1145 = vld [vmem:[%s260 + $0xc2] sm:$0xff]
      %v1146 = vld [vmem:[%s260 + $0xca] sm:$0xff]
      %v1147 = vld [vmem:[%s260 + $0xda] sm:$0xff]
      %v1148 = vld [vmem:[%s260 + $0xe2] sm:$0xff]
      %v1149 = vld [vmem:[%s260 + $0xf2] sm:$0xff]
      %v1150 = vld [vmem:[%s260 + $0xfa] sm:$0xff]
      %v1151 = vld [vmem:[%s260 + $0x10a] sm:$0xff]
      %v1152 = vld [vmem:[%s260 + $0x112] sm:$0xff]
      %v1153 = vld [vmem:[%s260 + $0x122] sm:$0xff]
      %v1154 = vld [vmem:[%s260 + $0x12a] sm:$0xff]
      %v1155 = vld [vmem:[%s260 + $0x13a] sm:$0xff]
      %v1156 = vld [vmem:[%s260 + $0x142] sm:$0xff]
      %v1157 = vld [vmem:[%s260 + $0x152] sm:$0xff]
      %v1158 = vld [vmem:[%s260 + $0x15a] sm:$0xff]
      %v1159 = vld [vmem:[%s260 + $0x16a] sm:$0xff]
      %v1160 = vld [vmem:[%s260 + $0x172] sm:$0xff]
      %1193 = vrot.lane.b32.xlu0 %v1129, 40
      %v1194 = vpop.permute.xlu0 %1193
      %1195 = vrot.lane.b32.xlu0 %v1130, 40
      %v1196 = vpop.permute.xlu0 %1195
      %1197 = vrot.lane.b32.xlu0 %v1131, 40
      %v1198 = vpop.permute.xlu0 %1197
      %1199 = vrot.lane.b32.xlu0 %v1132, 40
      %v1200 = vpop.permute.xlu0 %1199
      %1201 = vrot.lane.b32.xlu0 %v1133, 40
      %v1202 = vpop.permute.xlu0 %1201
      %1203 = vrot.lane.b32.xlu0 %v1134, 40
      %v1204 = vpop.permute.xlu0 %1203
      %1205 = vrot.lane.b32.xlu0 %v1135, 40
      %v1206 = vpop.permute.xlu0 %1205
      %1207 = vrot.lane.b32.xlu0 %v1136, 40
      %v1208 = vpop.permute.xlu0 %1207
      %1209 = vrot.lane.b32.xlu0 %v1137, 40
      %v1210 = vpop.permute.xlu0 %1209
      %1211 = vrot.lane.b32.xlu0 %v1138, 40
      %v1212 = vpop.permute.xlu0 %1211
      %1213 = vrot.lane.b32.xlu0 %v1139, 40
      %v1214 = vpop.permute.xlu0 %1213
      %1215 = vrot.lane.b32.xlu0 %v1140, 40
      %v1216 = vpop.permute.xlu0 %1215
      %1217 = vrot.lane.b32.xlu0 %v1141, 40
      %v1218 = vpop.permute.xlu0 %1217
      %1219 = vrot.lane.b32.xlu0 %v1142, 40
      %v1220 = vpop.permute.xlu0 %1219
      %1221 = vrot.lane.b32.xlu0 %v1143, 40
      %v1222 = vpop.permute.xlu0 %1221
      %1223 = vrot.lane.b32.xlu0 %v1144, 40
      %v1224 = vpop.permute.xlu0 %1223
      %1225 = vrot.lane.b32.xlu0 %v1145, 40
      %v1226 = vpop.permute.xlu0 %1225
      %1227 = vrot.lane.b32.xlu0 %v1146, 40
      %v1228 = vpop.permute.xlu0 %1227
      %1229 = vrot.lane.b32.xlu0 %v1147, 40
      %v1230 = vpop.permute.xlu0 %1229
      %1231 = vrot.lane.b32.xlu0 %v1148, 40
      %v1232 = vpop.permute.xlu0 %1231
      %1233 = vrot.lane.b32.xlu0 %v1149, 40
      %v1234 = vpop.permute.xlu0 %1233
      %1235 = vrot.lane.b32.xlu0 %v1150, 40
      %v1236 = vpop.permute.xlu0 %1235
      %1237 = vrot.lane.b32.xlu0 %v1151, 40
      %v1238 = vpop.permute.xlu0 %1237
      %1239 = vrot.lane.b32.xlu0 %v1152, 40
      %v1240 = vpop.permute.xlu0 %1239
      %1241 = vrot.lane.b32.xlu0 %v1153, 40
      %v1242 = vpop.permute.xlu0 %1241
      %1243 = vrot.lane.b32.xlu0 %v1154, 40
      %v1244 = vpop.permute.xlu0 %1243
      %1245 = vrot.lane.b32.xlu0 %v1155, 40
      %v1246 = vpop.permute.xlu0 %1245
      %1247 = vrot.lane.b32.xlu0 %v1156, 40
      %v1248 = vpop.permute.xlu0 %1247
      %1249 = vrot.lane.b32.xlu0 %v1157, 40
      %v1250 = vpop.permute.xlu0 %1249
      %1251 = vrot.lane.b32.xlu0 %v1158, 40
      %v1252 = vpop.permute.xlu0 %1251
      %1253 = vrot.lane.b32.xlu0 %v1159, 40
      %v1254 = vpop.permute.xlu0 %1253
      %1255 = vrot.lane.b32.xlu0 %v1160, 40
      %v1256 = vpop.permute.xlu0 %1255
      %vm1289 = vcmask 392512
      %1290 = vst.msk [vmem:[#allocation3] sm:$0xff] %vm1289, %v1194
      %1291 = vst.msk [vmem:[#allocation3 + $0x8] sm:$0xff] %vm1289, %v1196
      %1292 = vst.msk [vmem:[#allocation3 + $0x10] sm:$0xff] %vm1289, %v1198
      %1293 = vst.msk [vmem:[#allocation3 + $0x18] sm:$0xff] %vm1289, %v1200
      %1294 = vst.msk [vmem:[#allocation3 + $0x20] sm:$0xff] %vm1289, %v1202
      %1295 = vst.msk [vmem:[#allocation3 + $0x28] sm:$0xff] %vm1289, %v1204
      %1296 = vst.msk [vmem:[#allocation3 + $0x30] sm:$0xff] %vm1289, %v1206
      %1297 = vst.msk [vmem:[#allocation3 + $0x38] sm:$0xff] %vm1289, %v1208
      %1298 = vst.msk [vmem:[#allocation3 + $0x40] sm:$0xff] %vm1289, %v1210
      %1299 = vst.msk [vmem:[#allocation3 + $0x48] sm:$0xff] %vm1289, %v1212
      %1300 = vst.msk [vmem:[#allocation3 + $0x50] sm:$0xff] %vm1289, %v1214
      %1301 = vst.msk [vmem:[#allocation3 + $0x58] sm:$0xff] %vm1289, %v1216
      %1302 = vst.msk [vmem:[#allocation3 + $0x60] sm:$0xff] %vm1289, %v1218
      %1303 = vst.msk [vmem:[#allocation3 + $0x68] sm:$0xff] %vm1289, %v1220
      %1304 = vst.msk [vmem:[#allocation3 + $0x70] sm:$0xff] %vm1289, %v1222
      %1305 = vst.msk [vmem:[#allocation3 + $0x78] sm:$0xff] %vm1289, %v1224
      %1306 = vst.msk [vmem:[#allocation3 + $0x80] sm:$0xff] %vm1289, %v1226
      %1307 = vst.msk [vmem:[#allocation3 + $0x88] sm:$0xff] %vm1289, %v1228
      %1308 = vst.msk [vmem:[#allocation3 + $0x90] sm:$0xff] %vm1289, %v1230
      %1309 = vst.msk [vmem:[#allocation3 + $0x98] sm:$0xff] %vm1289, %v1232
      %1310 = vst.msk [vmem:[#allocation3 + $0xa0] sm:$0xff] %vm1289, %v1234
      %1311 = vst.msk [vmem:[#allocation3 + $0xa8] sm:$0xff] %vm1289, %v1236
      %1312 = vst.msk [vmem:[#allocation3 + $0xb0] sm:$0xff] %vm1289, %v1238
      %1313 = vst.msk [vmem:[#allocation3 + $0xb8] sm:$0xff] %vm1289, %v1240
      %1314 = vst.msk [vmem:[#allocation3 + $0xc0] sm:$0xff] %vm1289, %v1242
      %1315 = vst.msk [vmem:[#allocation3 + $0xc8] sm:$0xff] %vm1289, %v1244
      %1316 = vst.msk [vmem:[#allocation3 + $0xd0] sm:$0xff] %vm1289, %v1246
      %1317 = vst.msk [vmem:[#allocation3 + $0xd8] sm:$0xff] %vm1289, %v1248
      %1318 = vst.msk [vmem:[#allocation3 + $0xe0] sm:$0xff] %vm1289, %v1250
      %1319 = vst.msk [vmem:[#allocation3 + $0xe8] sm:$0xff] %vm1289, %v1252
      %1320 = vst.msk [vmem:[#allocation3 + $0xf0] sm:$0xff] %vm1289, %v1254
      %1321 = vst.msk [vmem:[#allocation3 + $0xf8] sm:$0xff] %vm1289, %v1256
      %s1322 = scalar_lea.vmem [#allocation2], 48
      %v1323 = vld [vmem:[%s1322] sm:$0xff]
      %v1324 = vld [vmem:[%s1322 + $0x8] sm:$0xff]
      %v1325 = vld [vmem:[%s1322 + $0x18] sm:$0xff]
      %v1326 = vld [vmem:[%s1322 + $0x20] sm:$0xff]
      %v1327 = vld [vmem:[%s1322 + $0x30] sm:$0xff]
      %v1328 = vld [vmem:[%s1322 + $0x38] sm:$0xff]
      %v1329 = vld [vmem:[%s1322 + $0x48] sm:$0xff]
      %v1330 = vld [vmem:[%s1322 + $0x50] sm:$0xff]
      %v1331 = vld [vmem:[%s1322 + $0x60] sm:$0xff]
      %v1332 = vld [vmem:[%s1322 + $0x68] sm:$0xff]
      %v1333 = vld [vmem:[%s1322 + $0x78] sm:$0xff]
      %v1334 = vld [vmem:[%s1322 + $0x80] sm:$0xff]
      %v1335 = vld [vmem:[%s1322 + $0x90] sm:$0xff]
      %v1336 = vld [vmem:[%s1322 + $0x98] sm:$0xff]
      %v1337 = vld [vmem:[%s1322 + $0xa8] sm:$0xff]
      %v1338 = vld [vmem:[%s1322 + $0xb0] sm:$0xff]
      %v1339 = vld [vmem:[%s1322 + $0xc0] sm:$0xff]
      %v1340 = vld [vmem:[%s1322 + $0xc8] sm:$0xff]
      %v1341 = vld [vmem:[%s1322 + $0xd8] sm:$0xff]
      %v1342 = vld [vmem:[%s1322 + $0xe0] sm:$0xff]
      %v1343 = vld [vmem:[%s1322 + $0xf0] sm:$0xff]
      %v1344 = vld [vmem:[%s1322 + $0xf8] sm:$0xff]
      %v1345 = vld [vmem:[%s1322 + $0x108] sm:$0xff]
      %v1346 = vld [vmem:[%s1322 + $0x110] sm:$0xff]
      %v1347 = vld [vmem:[%s1322 + $0x120] sm:$0xff]
      %v1348 = vld [vmem:[%s1322 + $0x128] sm:$0xff]
      %v1349 = vld [vmem:[%s1322 + $0x138] sm:$0xff]
      %v1350 = vld [vmem:[%s1322 + $0x140] sm:$0xff]
      %v1351 = vld [vmem:[%s1322 + $0x150] sm:$0xff]
      %v1352 = vld [vmem:[%s1322 + $0x158] sm:$0xff]
      %v1353 = vld [vmem:[%s1322 + $0x168] sm:$0xff]
      %v1354 = vld [vmem:[%s1322 + $0x170] sm:$0xff]
      %1387 = vrot.lane.b32.xlu0 %v1323, 48
      %v1388 = vpop.permute.xlu0 %1387
      %1389 = vrot.lane.b32.xlu0 %v1324, 48
      %v1390 = vpop.permute.xlu0 %1389
      %1391 = vrot.lane.b32.xlu0 %v1325, 48
      %v1392 = vpop.permute.xlu0 %1391
      %1393 = vrot.lane.b32.xlu0 %v1326, 48
      %v1394 = vpop.permute.xlu0 %1393
      %1395 = vrot.lane.b32.xlu0 %v1327, 48
      %v1396 = vpop.permute.xlu0 %1395
      %1397 = vrot.lane.b32.xlu0 %v1328, 48
      %v1398 = vpop.permute.xlu0 %1397
      %1399 = vrot.lane.b32.xlu0 %v1329, 48
      %v1400 = vpop.permute.xlu0 %1399
      %1401 = vrot.lane.b32.xlu0 %v1330, 48
      %v1402 = vpop.permute.xlu0 %1401
      %1403 = vrot.lane.b32.xlu0 %v1331, 48
      %v1404 = vpop.permute.xlu0 %1403
      %1405 = vrot.lane.b32.xlu0 %v1332, 48
      %v1406 = vpop.permute.xlu0 %1405
      %1407 = vrot.lane.b32.xlu0 %v1333, 48
      %v1408 = vpop.permute.xlu0 %1407
      %1409 = vrot.lane.b32.xlu0 %v1334, 48
      %v1410 = vpop.permute.xlu0 %1409
      %1411 = vrot.lane.b32.xlu0 %v1335, 48
      %v1412 = vpop.permute.xlu0 %1411
      %1413 = vrot.lane.b32.xlu0 %v1336, 48
      %v1414 = vpop.permute.xlu0 %1413
      %1415 = vrot.lane.b32.xlu0 %v1337, 48
      %v1416 = vpop.permute.xlu0 %1415
      %1417 = vrot.lane.b32.xlu0 %v1338, 48
      %v1418 = vpop.permute.xlu0 %1417
      %1419 = vrot.lane.b32.xlu0 %v1339, 48
      %v1420 = vpop.permute.xlu0 %1419
      %1421 = vrot.lane.b32.xlu0 %v1340, 48
      %v1422 = vpop.permute.xlu0 %1421
      %1423 = vrot.lane.b32.xlu0 %v1341, 48
      %v1424 = vpop.permute.xlu0 %1423
      %1425 = vrot.lane.b32.xlu0 %v1342, 48
      %v1426 = vpop.permute.xlu0 %1425
      %1427 = vrot.lane.b32.xlu0 %v1343, 48
      %v1428 = vpop.permute.xlu0 %1427
      %1429 = vrot.lane.b32.xlu0 %v1344, 48
      %v1430 = vpop.permute.xlu0 %1429
      %1431 = vrot.lane.b32.xlu0 %v1345, 48
      %v1432 = vpop.permute.xlu0 %1431
      %1433 = vrot.lane.b32.xlu0 %v1346, 48
      %v1434 = vpop.permute.xlu0 %1433
      %1435 = vrot.lane.b32.xlu0 %v1347, 48
      %v1436 = vpop.permute.xlu0 %1435
      %1437 = vrot.lane.b32.xlu0 %v1348, 48
      %v1438 = vpop.permute.xlu0 %1437
      %1439 = vrot.lane.b32.xlu0 %v1349, 48
      %v1440 = vpop.permute.xlu0 %1439
      %1441 = vrot.lane.b32.xlu0 %v1350, 48
      %v1442 = vpop.permute.xlu0 %1441
      %1443 = vrot.lane.b32.xlu0 %v1351, 48
      %v1444 = vpop.permute.xlu0 %1443
      %1445 = vrot.lane.b32.xlu0 %v1352, 48
      %v1446 = vpop.permute.xlu0 %1445
      %1447 = vrot.lane.b32.xlu0 %v1353, 48
      %v1448 = vpop.permute.xlu0 %1447
      %1449 = vrot.lane.b32.xlu0 %v1354, 48
      %v1450 = vpop.permute.xlu0 %1449
      %vm1483 = vcmask 458112
      %1484 = vst.msk [vmem:[#allocation3] sm:$0xff] %vm1483, %v1388
      %1485 = vst.msk [vmem:[#allocation3 + $0x8] sm:$0xff] %vm1483, %v1390
      %1486 = vst.msk [vmem:[#allocation3 + $0x10] sm:$0xff] %vm1483, %v1392
      %1487 = vst.msk [vmem:[#allocation3 + $0x18] sm:$0xff] %vm1483, %v1394
      %1488 = vst.msk [vmem:[#allocation3 + $0x20] sm:$0xff] %vm1483, %v1396
      %1489 = vst.msk [vmem:[#allocation3 + $0x28] sm:$0xff] %vm1483, %v1398
      %1490 = vst.msk [vmem:[#allocation3 + $0x30] sm:$0xff] %vm1483, %v1400
      %1491 = vst.msk [vmem:[#allocation3 + $0x38] sm:$0xff] %vm1483, %v1402
      %1492 = vst.msk [vmem:[#allocation3 + $0x40] sm:$0xff] %vm1483, %v1404
      %1493 = vst.msk [vmem:[#allocation3 + $0x48] sm:$0xff] %vm1483, %v1406
      %1494 = vst.msk [vmem:[#allocation3 + $0x50] sm:$0xff] %vm1483, %v1408
      %1495 = vst.msk [vmem:[#allocation3 + $0x58] sm:$0xff] %vm1483, %v1410
      %1496 = vst.msk [vmem:[#allocation3 + $0x60] sm:$0xff] %vm1483, %v1412
      %1497 = vst.msk [vmem:[#allocation3 + $0x68] sm:$0xff] %vm1483, %v1414
      %1498 = vst.msk [vmem:[#allocation3 + $0x70] sm:$0xff] %vm1483, %v1416
      %1499 = vst.msk [vmem:[#allocation3 + $0x78] sm:$0xff] %vm1483, %v1418
      %1500 = vst.msk [vmem:[#allocation3 + $0x80] sm:$0xff] %vm1483, %v1420
      %1501 = vst.msk [vmem:[#allocation3 + $0x88] sm:$0xff] %vm1483, %v1422
      %1502 = vst.msk [vmem:[#allocation3 + $0x90] sm:$0xff] %vm1483, %v1424
      %1503 = vst.msk [vmem:[#allocation3 + $0x98] sm:$0xff] %vm1483, %v1426
      %1504 = vst.msk [vmem:[#allocation3 + $0xa0] sm:$0xff] %vm1483, %v1428
      %1505 = vst.msk [vmem:[#allocation3 + $0xa8] sm:$0xff] %vm1483, %v1430
      %1506 = vst.msk [vmem:[#allocation3 + $0xb0] sm:$0xff] %vm1483, %v1432
      %1507 = vst.msk [vmem:[#allocation3 + $0xb8] sm:$0xff] %vm1483, %v1434
      %1508 = vst.msk [vmem:[#allocation3 + $0xc0] sm:$0xff] %vm1483, %v1436
      %1509 = vst.msk [vmem:[#allocation3 + $0xc8] sm:$0xff] %vm1483, %v1438
      %1510 = vst.msk [vmem:[#allocation3 + $0xd0] sm:$0xff] %vm1483, %v1440
      %1511 = vst.msk [vmem:[#allocation3 + $0xd8] sm:$0xff] %vm1483, %v1442
      %1512 = vst.msk [vmem:[#allocation3 + $0xe0] sm:$0xff] %vm1483, %v1444
      %1513 = vst.msk [vmem:[#allocation3 + $0xe8] sm:$0xff] %vm1483, %v1446
      %1514 = vst.msk [vmem:[#allocation3 + $0xf0] sm:$0xff] %vm1483, %v1448
      %1515 = vst.msk [vmem:[#allocation3 + $0xf8] sm:$0xff] %vm1483, %v1450
      %v1516 = vld [vmem:[%s1322 + $0x1] sm:$0xff]
      %v1517 = vld [vmem:[%s1322 + $0x9] sm:$0xff]
      %v1518 = vld [vmem:[%s1322 + $0x19] sm:$0xff]
      %v1519 = vld [vmem:[%s1322 + $0x21] sm:$0xff]
      %v1520 = vld [vmem:[%s1322 + $0x31] sm:$0xff]
      %v1521 = vld [vmem:[%s1322 + $0x39] sm:$0xff]
      %v1522 = vld [vmem:[%s1322 + $0x49] sm:$0xff]
      %v1523 = vld [vmem:[%s1322 + $0x51] sm:$0xff]
      %v1524 = vld [vmem:[%s1322 + $0x61] sm:$0xff]
      %v1525 = vld [vmem:[%s1322 + $0x69] sm:$0xff]
      %v1526 = vld [vmem:[%s1322 + $0x79] sm:$0xff]
      %v1527 = vld [vmem:[%s1322 + $0x81] sm:$0xff]
      %v1528 = vld [vmem:[%s1322 + $0x91] sm:$0xff]
      %v1529 = vld [vmem:[%s1322 + $0x99] sm:$0xff]
      %v1530 = vld [vmem:[%s1322 + $0xa9] sm:$0xff]
      %v1531 = vld [vmem:[%s1322 + $0xb1] sm:$0xff]
      %v1532 = vld [vmem:[%s1322 + $0xc1] sm:$0xff]
      %v1533 = vld [vmem:[%s1322 + $0xc9] sm:$0xff]
      %v1534 = vld [vmem:[%s1322 + $0xd9] sm:$0xff]
      %v1535 = vld [vmem:[%s1322 + $0xe1] sm:$0xff]
      %v1536 = vld [vmem:[%s1322 + $0xf1] sm:$0xff]
      %v1537 = vld [vmem:[%s1322 + $0xf9] sm:$0xff]
      %v1538 = vld [vmem:[%s1322 + $0x109] sm:$0xff]
      %v1539 = vld [vmem:[%s1322 + $0x111] sm:$0xff]
      %v1540 = vld [vmem:[%s1322 + $0x121] sm:$0xff]
      %v1541 = vld [vmem:[%s1322 + $0x129] sm:$0xff]
      %v1542 = vld [vmem:[%s1322 + $0x139] sm:$0xff]
      %v1543 = vld [vmem:[%s1322 + $0x141] sm:$0xff]
      %v1544 = vld [vmem:[%s1322 + $0x151] sm:$0xff]
      %v1545 = vld [vmem:[%s1322 + $0x159] sm:$0xff]
      %v1546 = vld [vmem:[%s1322 + $0x169] sm:$0xff]
      %v1547 = vld [vmem:[%s1322 + $0x171] sm:$0xff]
      %1580 = vrot.lane.b32.xlu0 %v1516, 56
      %v1581 = vpop.permute.xlu0 %1580
      %1582 = vrot.lane.b32.xlu0 %v1517, 56
      %v1583 = vpop.permute.xlu0 %1582
      %1584 = vrot.lane.b32.xlu0 %v1518, 56
      %v1585 = vpop.permute.xlu0 %1584
      %1586 = vrot.lane.b32.xlu0 %v1519, 56
      %v1587 = vpop.permute.xlu0 %1586
      %1588 = vrot.lane.b32.xlu0 %v1520, 56
      %v1589 = vpop.permute.xlu0 %1588
      %1590 = vrot.lane.b32.xlu0 %v1521, 56
      %v1591 = vpop.permute.xlu0 %1590
      %1592 = vrot.lane.b32.xlu0 %v1522, 56
      %v1593 = vpop.permute.xlu0 %1592
      %1594 = vrot.lane.b32.xlu0 %v1523, 56
      %v1595 = vpop.permute.xlu0 %1594
      %1596 = vrot.lane.b32.xlu0 %v1524, 56
      %v1597 = vpop.permute.xlu0 %1596
      %1598 = vrot.lane.b32.xlu0 %v1525, 56
      %v1599 = vpop.permute.xlu0 %1598
      %1600 = vrot.lane.b32.xlu0 %v1526, 56
      %v1601 = vpop.permute.xlu0 %1600
      %1602 = vrot.lane.b32.xlu0 %v1527, 56
      %v1603 = vpop.permute.xlu0 %1602
      %1604 = vrot.lane.b32.xlu0 %v1528, 56
      %v1605 = vpop.permute.xlu0 %1604
      %1606 = vrot.lane.b32.xlu0 %v1529, 56
      %v1607 = vpop.permute.xlu0 %1606
      %1608 = vrot.lane.b32.xlu0 %v1530, 56
      %v1609 = vpop.permute.xlu0 %1608
      %1610 = vrot.lane.b32.xlu0 %v1531, 56
      %v1611 = vpop.permute.xlu0 %1610
      %1612 = vrot.lane.b32.xlu0 %v1532, 56
      %v1613 = vpop.permute.xlu0 %1612
      %1614 = vrot.lane.b32.xlu0 %v1533, 56
      %v1615 = vpop.permute.xlu0 %1614
      %1616 = vrot.lane.b32.xlu0 %v1534, 56
      %v1617 = vpop.permute.xlu0 %1616
      %1618 = vrot.lane.b32.xlu0 %v1535, 56
      %v1619 = vpop.permute.xlu0 %1618
      %1620 = vrot.lane.b32.xlu0 %v1536, 56
      %v1621 = vpop.permute.xlu0 %1620
      %1622 = vrot.lane.b32.xlu0 %v1537, 56
      %v1623 = vpop.permute.xlu0 %1622
      %1624 = vrot.lane.b32.xlu0 %v1538, 56
      %v1625 = vpop.permute.xlu0 %1624
      %1626 = vrot.lane.b32.xlu0 %v1539, 56
      %v1627 = vpop.permute.xlu0 %1626
      %1628 = vrot.lane.b32.xlu0 %v1540, 56
      %v1629 = vpop.permute.xlu0 %1628
      %1630 = vrot.lane.b32.xlu0 %v1541, 56
      %v1631 = vpop.permute.xlu0 %1630
      %1632 = vrot.lane.b32.xlu0 %v1542, 56
      %v1633 = vpop.permute.xlu0 %1632
      %1634 = vrot.lane.b32.xlu0 %v1543, 56
      %v1635 = vpop.permute.xlu0 %1634
      %1636 = vrot.lane.b32.xlu0 %v1544, 56
      %v1637 = vpop.permute.xlu0 %1636
      %1638 = vrot.lane.b32.xlu0 %v1545, 56
      %v1639 = vpop.permute.xlu0 %1638
      %1640 = vrot.lane.b32.xlu0 %v1546, 56
      %v1641 = vpop.permute.xlu0 %1640
      %1642 = vrot.lane.b32.xlu0 %v1547, 56
      %v1643 = vpop.permute.xlu0 %1642
      %vm1676 = vcmask 523712
      %1677 = vst.msk [vmem:[#allocation3] sm:$0xff] %vm1676, %v1581
      %1678 = vst.msk [vmem:[#allocation3 + $0x8] sm:$0xff] %vm1676, %v1583
      %1679 = vst.msk [vmem:[#allocation3 + $0x10] sm:$0xff] %vm1676, %v1585
      %1680 = vst.msk [vmem:[#allocation3 + $0x18] sm:$0xff] %vm1676, %v1587
      %1681 = vst.msk [vmem:[#allocation3 + $0x20] sm:$0xff] %vm1676, %v1589
      %1682 = vst.msk [vmem:[#allocation3 + $0x28] sm:$0xff] %vm1676, %v1591
      %1683 = vst.msk [vmem:[#allocation3 + $0x30] sm:$0xff] %vm1676, %v1593
      %1684 = vst.msk [vmem:[#allocation3 + $0x38] sm:$0xff] %vm1676, %v1595
      %1685 = vst.msk [vmem:[#allocation3 + $0x40] sm:$0xff] %vm1676, %v1597
      %1686 = vst.msk [vmem:[#allocation3 + $0x48] sm:$0xff] %vm1676, %v1599
      %1687 = vst.msk [vmem:[#allocation3 + $0x50] sm:$0xff] %vm1676, %v1601
      %1688 = vst.msk [vmem:[#allocation3 + $0x58] sm:$0xff] %vm1676, %v1603
      %1689 = vst.msk [vmem:[#allocation3 + $0x60] sm:$0xff] %vm1676, %v1605
      %1690 = vst.msk [vmem:[#allocation3 + $0x68] sm:$0xff] %vm1676, %v1607
      %1691 = vst.msk [vmem:[#allocation3 + $0x70] sm:$0xff] %vm1676, %v1609
      %1692 = vst.msk [vmem:[#allocation3 + $0x78] sm:$0xff] %vm1676, %v1611
      %1693 = vst.msk [vmem:[#allocation3 + $0x80] sm:$0xff] %vm1676, %v1613
      %1694 = vst.msk [vmem:[#allocation3 + $0x88] sm:$0xff] %vm1676, %v1615
      %1695 = vst.msk [vmem:[#allocation3 + $0x90] sm:$0xff] %vm1676, %v1617
      %1696 = vst.msk [vmem:[#allocation3 + $0x98] sm:$0xff] %vm1676, %v1619
      %1697 = vst.msk [vmem:[#allocation3 + $0xa0] sm:$0xff] %vm1676, %v1621
      %1698 = vst.msk [vmem:[#allocation3 + $0xa8] sm:$0xff] %vm1676, %v1623
      %1699 = vst.msk [vmem:[#allocation3 + $0xb0] sm:$0xff] %vm1676, %v1625
      %1700 = vst.msk [vmem:[#allocation3 + $0xb8] sm:$0xff] %vm1676, %v1627
      %1701 = vst.msk [vmem:[#allocation3 + $0xc0] sm:$0xff] %vm1676, %v1629
      %1702 = vst.msk [vmem:[#allocation3 + $0xc8] sm:$0xff] %vm1676, %v1631
      %1703 = vst.msk [vmem:[#allocation3 + $0xd0] sm:$0xff] %vm1676, %v1633
      %1704 = vst.msk [vmem:[#allocation3 + $0xd8] sm:$0xff] %vm1676, %v1635
      %1705 = vst.msk [vmem:[#allocation3 + $0xe0] sm:$0xff] %vm1676, %v1637
      %1706 = vst.msk [vmem:[#allocation3 + $0xe8] sm:$0xff] %vm1676, %v1639
      %1707 = vst.msk [vmem:[#allocation3 + $0xf0] sm:$0xff] %vm1676, %v1641
      %1708 = vst.msk [vmem:[#allocation3 + $0xf8] sm:$0xff] %vm1676, %v1643
      %v1709 = vld [vmem:[%s1322 + $0x2] sm:$0xff]
      %v1710 = vld [vmem:[%s1322 + $0xa] sm:$0xff]
      %v1711 = vld [vmem:[%s1322 + $0x1a] sm:$0xff]
      %v1712 = vld [vmem:[%s1322 + $0x22] sm:$0xff]
      %v1713 = vld [vmem:[%s1322 + $0x32] sm:$0xff]
      %v1714 = vld [vmem:[%s1322 + $0x3a] sm:$0xff]
      %v1715 = vld [vmem:[%s1322 + $0x4a] sm:$0xff]
      %v1716 = vld [vmem:[%s1322 + $0x52] sm:$0xff]
      %v1717 = vld [vmem:[%s1322 + $0x62] sm:$0xff]
      %v1718 = vld [vmem:[%s1322 + $0x6a] sm:$0xff]
      %v1719 = vld [vmem:[%s1322 + $0x7a] sm:$0xff]
      %v1720 = vld [vmem:[%s1322 + $0x82] sm:$0xff]
      %v1721 = vld [vmem:[%s1322 + $0x92] sm:$0xff]
      %v1722 = vld [vmem:[%s1322 + $0x9a] sm:$0xff]
      %v1723 = vld [vmem:[%s1322 + $0xaa] sm:$0xff]
      %v1724 = vld [vmem:[%s1322 + $0xb2] sm:$0xff]
      %v1725 = vld [vmem:[%s1322 + $0xc2] sm:$0xff]
      %v1726 = vld [vmem:[%s1322 + $0xca] sm:$0xff]
      %v1727 = vld [vmem:[%s1322 + $0xda] sm:$0xff]
      %v1728 = vld [vmem:[%s1322 + $0xe2] sm:$0xff]
      %v1729 = vld [vmem:[%s1322 + $0xf2] sm:$0xff]
      %v1730 = vld [vmem:[%s1322 + $0xfa] sm:$0xff]
      %v1731 = vld [vmem:[%s1322 + $0x10a] sm:$0xff]
      %v1732 = vld [vmem:[%s1322 + $0x112] sm:$0xff]
      %v1733 = vld [vmem:[%s1322 + $0x122] sm:$0xff]
      %v1734 = vld [vmem:[%s1322 + $0x12a] sm:$0xff]
      %v1735 = vld [vmem:[%s1322 + $0x13a] sm:$0xff]
      %v1736 = vld [vmem:[%s1322 + $0x142] sm:$0xff]
      %v1737 = vld [vmem:[%s1322 + $0x152] sm:$0xff]
      %v1738 = vld [vmem:[%s1322 + $0x15a] sm:$0xff]
      %v1739 = vld [vmem:[%s1322 + $0x16a] sm:$0xff]
      %v1740 = vld [vmem:[%s1322 + $0x172] sm:$0xff]
      %1773 = vrot.lane.b32.xlu0 %v1709, 64
      %v1774 = vpop.permute.xlu0 %1773
      %1775 = vrot.lane.b32.xlu0 %v1710, 64
      %v1776 = vpop.permute.xlu0 %1775
      %1777 = vrot.lane.b32.xlu0 %v1711, 64
      %v1778 = vpop.permute.xlu0 %1777
      %1779 = vrot.lane.b32.xlu0 %v1712, 64
      %v1780 = vpop.permute.xlu0 %1779
      %1781 = vrot.lane.b32.xlu0 %v1713, 64
      %v1782 = vpop.permute.xlu0 %1781
      %1783 = vrot.lane.b32.xlu0 %v1714, 64
      %v1784 = vpop.permute.xlu0 %1783
      %1785 = vrot.lane.b32.xlu0 %v1715, 64
      %v1786 = vpop.permute.xlu0 %1785
      %1787 = vrot.lane.b32.xlu0 %v1716, 64
      %v1788 = vpop.permute.xlu0 %1787
      %1789 = vrot.lane.b32.xlu0 %v1717, 64
      %v1790 = vpop.permute.xlu0 %1789
      %1791 = vrot.lane.b32.xlu0 %v1718, 64
      %v1792 = vpop.permute.xlu0 %1791
      %1793 = vrot.lane.b32.xlu0 %v1719, 64
      %v1794 = vpop.permute.xlu0 %1793
      %1795 = vrot.lane.b32.xlu0 %v1720, 64
      %v1796 = vpop.permute.xlu0 %1795
      %1797 = vrot.lane.b32.xlu0 %v1721, 64
      %v1798 = vpop.permute.xlu0 %1797
      %1799 = vrot.lane.b32.xlu0 %v1722, 64
      %v1800 = vpop.permute.xlu0 %1799
      %1801 = vrot.lane.b32.xlu0 %v1723, 64
      %v1802 = vpop.permute.xlu0 %1801
      %1803 = vrot.lane.b32.xlu0 %v1724, 64
      %v1804 = vpop.permute.xlu0 %1803
      %1805 = vrot.lane.b32.xlu0 %v1725, 64
      %v1806 = vpop.permute.xlu0 %1805
      %1807 = vrot.lane.b32.xlu0 %v1726, 64
      %v1808 = vpop.permute.xlu0 %1807
      %1809 = vrot.lane.b32.xlu0 %v1727, 64
      %v1810 = vpop.permute.xlu0 %1809
      %1811 = vrot.lane.b32.xlu0 %v1728, 64
      %v1812 = vpop.permute.xlu0 %1811
      %1813 = vrot.lane.b32.xlu0 %v1729, 64
      %v1814 = vpop.permute.xlu0 %1813
      %1815 = vrot.lane.b32.xlu0 %v1730, 64
      %v1816 = vpop.permute.xlu0 %1815
      %1817 = vrot.lane.b32.xlu0 %v1731, 64
      %v1818 = vpop.permute.xlu0 %1817
      %1819 = vrot.lane.b32.xlu0 %v1732, 64
      %v1820 = vpop.permute.xlu0 %1819
      %1821 = vrot.lane.b32.xlu0 %v1733, 64
      %v1822 = vpop.permute.xlu0 %1821
      %1823 = vrot.lane.b32.xlu0 %v1734, 64
      %v1824 = vpop.permute.xlu0 %1823
      %1825 = vrot.lane.b32.xlu0 %v1735, 64
      %v1826 = vpop.permute.xlu0 %1825
      %1827 = vrot.lane.b32.xlu0 %v1736, 64
      %v1828 = vpop.permute.xlu0 %1827
      %1829 = vrot.lane.b32.xlu0 %v1737, 64
      %v1830 = vpop.permute.xlu0 %1829
      %1831 = vrot.lane.b32.xlu0 %v1738, 64
      %v1832 = vpop.permute.xlu0 %1831
      %1833 = vrot.lane.b32.xlu0 %v1739, 64
      %v1834 = vpop.permute.xlu0 %1833
      %1835 = vrot.lane.b32.xlu0 %v1740, 64
      %v1836 = vpop.permute.xlu0 %1835
      %vm1869 = vcmask 589312
      %1870 = vst.msk [vmem:[#allocation3] sm:$0xff] %vm1869, %v1774
      %1871 = vst.msk [vmem:[#allocation3 + $0x8] sm:$0xff] %vm1869, %v1776
      %1872 = vst.msk [vmem:[#allocation3 + $0x10] sm:$0xff] %vm1869, %v1778
      %1873 = vst.msk [vmem:[#allocation3 + $0x18] sm:$0xff] %vm1869, %v1780
      %1874 = vst.msk [vmem:[#allocation3 + $0x20] sm:$0xff] %vm1869, %v1782
      %1875 = vst.msk [vmem:[#allocation3 + $0x28] sm:$0xff] %vm1869, %v1784
      %1876 = vst.msk [vmem:[#allocation3 + $0x30] sm:$0xff] %vm1869, %v1786
      %1877 = vst.msk [vmem:[#allocation3 + $0x38] sm:$0xff] %vm1869, %v1788
      %1878 = vst.msk [vmem:[#allocation3 + $0x40] sm:$0xff] %vm1869, %v1790
      %1879 = vst.msk [vmem:[#allocation3 + $0x48] sm:$0xff] %vm1869, %v1792
      %1880 = vst.msk [vmem:[#allocation3 + $0x50] sm:$0xff] %vm1869, %v1794
      %1881 = vst.msk [vmem:[#allocation3 + $0x58] sm:$0xff] %vm1869, %v1796
      %1882 = vst.msk [vmem:[#allocation3 + $0x60] sm:$0xff] %vm1869, %v1798
      %1883 = vst.msk [vmem:[#allocation3 + $0x68] sm:$0xff] %vm1869, %v1800
      %1884 = vst.msk [vmem:[#allocation3 + $0x70] sm:$0xff] %vm1869, %v1802
      %1885 = vst.msk [vmem:[#allocation3 + $0x78] sm:$0xff] %vm1869, %v1804
      %1886 = vst.msk [vmem:[#allocation3 + $0x80] sm:$0xff] %vm1869, %v1806
      %1887 = vst.msk [vmem:[#allocation3 + $0x88] sm:$0xff] %vm1869, %v1808
      %1888 = vst.msk [vmem:[#allocation3 + $0x90] sm:$0xff] %vm1869, %v1810
      %1889 = vst.msk [vmem:[#allocation3 + $0x98] sm:$0xff] %vm1869, %v1812
      %1890 = vst.msk [vmem:[#allocation3 + $0xa0] sm:$0xff] %vm1869, %v1814
      %1891 = vst.msk [vmem:[#allocation3 + $0xa8] sm:$0xff] %vm1869, %v1816
      %1892 = vst.msk [vmem:[#allocation3 + $0xb0] sm:$0xff] %vm1869, %v1818
      %1893 = vst.msk [vmem:[#allocation3 + $0xb8] sm:$0xff] %vm1869, %v1820
      %1894 = vst.msk [vmem:[#allocation3 + $0xc0] sm:$0xff] %vm1869, %v1822
      %1895 = vst.msk [vmem:[#allocation3 + $0xc8] sm:$0xff] %vm1869, %v1824
      %1896 = vst.msk [vmem:[#allocation3 + $0xd0] sm:$0xff] %vm1869, %v1826
      %1897 = vst.msk [vmem:[#allocation3 + $0xd8] sm:$0xff] %vm1869, %v1828
      %1898 = vst.msk [vmem:[#allocation3 + $0xe0] sm:$0xff] %vm1869, %v1830
      %1899 = vst.msk [vmem:[#allocation3 + $0xe8] sm:$0xff] %vm1869, %v1832
      %1900 = vst.msk [vmem:[#allocation3 + $0xf0] sm:$0xff] %vm1869, %v1834
      %1901 = vst.msk [vmem:[#allocation3 + $0xf8] sm:$0xff] %vm1869, %v1836
      %v1902 = vld [vmem:[#allocation3] sm:$0xff]
      %v1903 = vld [vmem:[#allocation3 + $0x8] sm:$0xff]
      %v1904 = vld [vmem:[#allocation3 + $0x10] sm:$0xff]
      %v1905 = vld [vmem:[#allocation3 + $0x18] sm:$0xff]
      %v1906 = vld [vmem:[#allocation3 + $0x20] sm:$0xff]
      %v1907 = vld [vmem:[#allocation3 + $0x28] sm:$0xff]
      %v1908 = vld [vmem:[#allocation3 + $0x30] sm:$0xff]
      %v1909 = vld [vmem:[#allocation3 + $0x38] sm:$0xff]
      %v1910 = vld [vmem:[#allocation3 + $0x40] sm:$0xff]
      %v1911 = vld [vmem:[#allocation3 + $0x48] sm:$0xff]
      %v1912 = vld [vmem:[#allocation3 + $0x50] sm:$0xff]
      %v1913 = vld [vmem:[#allocation3 + $0x58] sm:$0xff]
      %v1914 = vld [vmem:[#allocation3 + $0x60] sm:$0xff]
      %v1915 = vld [vmem:[#allocation3 + $0x68] sm:$0xff]
      %v1916 = vld [vmem:[#allocation3 + $0x70] sm:$0xff]
      %v1917 = vld [vmem:[#allocation3 + $0x78] sm:$0xff]
      %v1918 = vld [vmem:[#allocation3 + $0x80] sm:$0xff]
      %v1919 = vld [vmem:[#allocation3 + $0x88] sm:$0xff]
      %v1920 = vld [vmem:[#allocation3 + $0x90] sm:$0xff]
      %v1921 = vld [vmem:[#allocation3 + $0x98] sm:$0xff]
      %v1922 = vld [vmem:[#allocation3 + $0xa0] sm:$0xff]
      %v1923 = vld [vmem:[#allocation3 + $0xa8] sm:$0xff]
      %v1924 = vld [vmem:[#allocation3 + $0xb0] sm:$0xff]
      %v1925 = vld [vmem:[#allocation3 + $0xb8] sm:$0xff]
      %v1926 = vld [vmem:[#allocation3 + $0xc0] sm:$0xff]
      %v1927 = vld [vmem:[#allocation3 + $0xc8] sm:$0xff]
      %v1928 = vld [vmem:[#allocation3 + $0xd0] sm:$0xff]
      %v1929 = vld [vmem:[#allocation3 + $0xd8] sm:$0xff]
      %v1930 = vld [vmem:[#allocation3 + $0xe0] sm:$0xff]
      %v1931 = vld [vmem:[#allocation3 + $0xe8] sm:$0xff]
      %v1932 = vld [vmem:[#allocation3 + $0xf0] sm:$0xff]
      %v1933 = vld [vmem:[#allocation3 + $0xf8] sm:$0xff]
      %v1934 = vld [vmem:[%s1] sm:$0xff]
      %v1935 = vld [vmem:[%s1 + $0x8] sm:$0xff]
      %v1936 = vld [vmem:[%s1 + $0x10] sm:$0xff]
      %v1937 = vld [vmem:[%s1 + $0x18] sm:$0xff]
      %v1938 = vld [vmem:[%s1 + $0x20] sm:$0xff]
      %v1939 = vld [vmem:[%s1 + $0x28] sm:$0xff]
      %v1940 = vld [vmem:[%s1 + $0x30] sm:$0xff]
      %v1941 = vld [vmem:[%s1 + $0x38] sm:$0xff]
      %v1942 = vld [vmem:[%s1 + $0x40] sm:$0xff]
      %vm1943 = vcmask 588800
      %v1945 = vsel %vm1943, %v1902, 0
      %v1948 = vsel %vm1943, %v1903, 0
      %v1951 = vsel %vm1943, %v1904, 0
      %v1954 = vsel %vm1943, %v1905, 0
      %v1957 = vsel %vm1943, %v1906, 0
      %v1960 = vsel %vm1943, %v1907, 0
      %v1963 = vsel %vm1943, %v1908, 0
      %v1966 = vsel %vm1943, %v1909, 0
      %v1969 = vsel %vm1943, %v1910, 0
      %v1972 = vsel %vm1943, %v1911, 0
      %v1975 = vsel %vm1943, %v1912, 0
      %v1978 = vsel %vm1943, %v1913, 0
      %v1981 = vsel %vm1943, %v1914, 0
      %v1984 = vsel %vm1943, %v1915, 0
      %v1987 = vsel %vm1943, %v1916, 0
      %v1990 = vsel %vm1943, %v1917, 0
      %v1993 = vsel %vm1943, %v1918, 0
      %v1996 = vsel %vm1943, %v1919, 0
      %v1999 = vsel %vm1943, %v1920, 0
      %v2002 = vsel %vm1943, %v1921, 0
      %v2005 = vsel %vm1943, %v1922, 0
      %v2008 = vsel %vm1943, %v1923, 0
      %v2011 = vsel %vm1943, %v1924, 0
      %v2014 = vsel %vm1943, %v1925, 0
      %v2017 = vsel %vm1943, %v1926, 0
      %v2020 = vsel %vm1943, %v1927, 0
      %v2023 = vsel %vm1943, %v1928, 0
      %v2026 = vsel %vm1943, %v1929, 0
      %v2029 = vsel %vm1943, %v1930, 0
      %v2032 = vsel %vm1943, %v1931, 0
      %v2035 = vsel %vm1943, %v1932, 0
      %v2038 = vsel %vm1943, %v1933, 0
      %2040 = vmatprep.subr.mxu0 0.0
      %2041 = vmatpush1.msra.mxu0 %v1934
      %2042 = vmatprep.subr.mxu0 0.0
      %2043 = vmatpush1.msra.mxu0 %v1935
      %2044 = vmatprep.subr.mxu0 0.0
      %2045 = vmatpush1.msra.mxu0 %v1936
      %2046 = vmatprep.subr.mxu0 0.0
      %2047 = vmatpush1.msra.mxu0 %v1937
      %2048 = vmatprep.subr.mxu0 0.0
      %2049 = vmatpush1.msra.mxu0 %v1938
      %2050 = vmatprep.subr.mxu0 0.0
      %2051 = vmatpush1.msra.mxu0 %v1939
      %2052 = vmatprep.subr.mxu0 0.0
      %2053 = vmatpush1.msra.mxu0 %v1940
      %2054 = vmatprep.subr.mxu0 0.0
      %2055 = vmatpush1.msra.mxu0 %v1941
      %2056 = vmatprep.subr.mxu0 0.0
      %2057 = vmatpush1.msra.mxu0 %v1942
      %2058 = vmatprep.subr.mxu0 0.0
      %2059 = vmatpush1.msra.mxu0 0.0
      %2060 = vmatprep.subr.mxu0 0.0
      %2061 = vmatpush1.msra.mxu0 0.0
      %2062 = vmatprep.subr.mxu0 0.0
      %2063 = vmatpush1.msra.mxu0 0.0
      %2064 = vmatprep.subr.mxu0 0.0
      %2065 = vmatpush1.msra.mxu0 0.0
      %2066 = vmatprep.subr.mxu0 0.0
      %2067 = vmatpush1.msra.mxu0 0.0
      %2068 = vmatprep.subr.mxu0 0.0
      %2069 = vmatpush1.msra.mxu0 0.0
      %2070 = vmatprep.subr.mxu0 0.0
      %2071 = vmatpush1.msra.mxu0 0.0
      %2072 = vmatprep.subr.mxu0 0.0
      %2073 = vmatpush1.msra.mxu0 0.0
      %2074 = vmatprep.subr.mxu0 0.0
      %2075 = vmatpush1.msra.mxu0 0.0
      %2076 = vmatprep.subr.mxu0 0.0
      %2077 = vmatpush1.msra.mxu0 0.0
      %2078 = vmatprep.subr.mxu0 0.0
      %2079 = vmatpush1.msra.mxu0 0.0
      %2080 = vmatprep.subr.mxu0 0.0
      %2081 = vmatpush1.msra.mxu0 0.0
      %2082 = vmatprep.subr.mxu0 0.0
      %2083 = vmatpush1.msra.mxu0 0.0
      %2084 = vmatprep.subr.mxu0 0.0
      %2085 = vmatpush1.msra.mxu0 0.0
      %2086 = vmatprep.subr.mxu0 0.0
      %2087 = vmatpush1.msra.mxu0 0.0
      %2088 = vmatprep.subr.mxu0 0.0
      %2089 = vmatpush1.msra.mxu0 0.0
      %2090 = vmatprep.subr.mxu0 0.0
      %2091 = vmatpush1.msra.mxu0 0.0
      %2092 = vmatprep.subr.mxu0 0.0
      %2093 = vmatpush1.msra.mxu0 0.0
      %2094 = vmatprep.subr.mxu0 0.0
      %2095 = vmatpush1.msra.mxu0 0.0
      %2096 = vmatprep.subr.mxu0 0.0
      %2097 = vmatpush1.msra.mxu0 0.0
      %2098 = vmatprep.subr.mxu0 0.0
      %2099 = vmatpush1.msra.mxu0 0.0
      %2100 = vmatprep.subr.mxu0 0.0
      %2101 = vmatpush1.msra.mxu0 0.0
      %2102 = vmatprep.subr.mxu0 0.0
      %2103 = vmatpush1.msra.mxu0 0.0
      %2104 = vmatprep.mubr.f32.mxu0 0.0
      %2105 = vmatmul.mubr.f32.gmra.mrb[0].mxu0 %v1945
      %v2106 = vpop.f32.mrb[0].mxu0
      %v2107 = vadd.f32 0.0, %v2106
      %v2108 = vpop.f32.mrb[0].mxu0
      %2109 = vmatprep.mubr.f32.mxu0 0.0
      %2110 = vmatmul.mubr.f32.gmra.mrb[0].mxu0 %v1948
      %v2111 = vpop.f32.mrb[0].mxu0
      %v2112 = vadd.f32 0.0, %v2111
      %v2113 = vpop.f32.mrb[0].mxu0
      %2114 = vmatprep.mubr.f32.mxu0 0.0
      %2115 = vmatmul.mubr.f32.gmra.mrb[0].mxu0 %v1951
      %v2116 = vpop.f32.mrb[0].mxu0
      %v2117 = vadd.f32 0.0, %v2116
      %v2118 = vpop.f32.mrb[0].mxu0
      %2119 = vmatprep.mubr.f32.mxu0 0.0
      %2120 = vmatmul.mubr.f32.gmra.mrb[0].mxu0 %v1954
      %v2121 = vpop.f32.mrb[0].mxu0
      %v2122 = vadd.f32 0.0, %v2121
      %v2123 = vpop.f32.mrb[0].mxu0
      %2124 = vmatprep.mubr.f32.mxu0 0.0
      %2125 = vmatmul.mubr.f32.gmra.mrb[0].mxu0 %v1957
      %v2126 = vpop.f32.mrb[0].mxu0
      %v2127 = vadd.f32 0.0, %v2126
      %v2128 = vpop.f32.mrb[0].mxu0
      %2129 = vmatprep.mubr.f32.mxu0 0.0
      %2130 = vmatmul.mubr.f32.gmra.mrb[0].mxu0 %v1960
      %v2131 = vpop.f32.mrb[0].mxu0
      %v2132 = vadd.f32 0.0, %v2131
      %v2133 = vpop.f32.mrb[0].mxu0
      %2134 = vmatprep.mubr.f32.mxu0 0.0
      %2135 = vmatmul.mubr.f32.gmra.mrb[0].mxu0 %v1963
      %v2136 = vpop.f32.mrb[0].mxu0
      %v2137 = vadd.f32 0.0, %v2136
      %v2138 = vpop.f32.mrb[0].mxu0
      %2139 = vmatprep.mubr.f32.mxu0 0.0
      %2140 = vmatmul.mubr.f32.gmra.mrb[0].mxu0 %v1966
      %v2141 = vpop.f32.mrb[0].mxu0
      %v2142 = vadd.f32 0.0, %v2141
      %v2143 = vpop.f32.mrb[0].mxu0
      %2144 = vmatprep.mubr.f32.mxu0 0.0
      %2145 = vmatmul.mubr.f32.gmra.mrb[0].mxu0 %v1969
      %v2146 = vpop.f32.mrb[0].mxu0
      %v2147 = vadd.f32 0.0, %v2146
      %v2148 = vpop.f32.mrb[0].mxu0
      %2149 = vmatprep.mubr.f32.mxu0 0.0
      %2150 = vmatmul.mubr.f32.gmra.mrb[0].mxu0 %v1972
      %v2151 = vpop.f32.mrb[0].mxu0
      %v2152 = vadd.f32 0.0, %v2151
      %v2153 = vpop.f32.mrb[0].mxu0
      %2154 = vmatprep.mubr.f32.mxu0 0.0
      %2155 = vmatmul.mubr.f32.gmra.mrb[0].mxu0 %v1975
      %v2156 = vpop.f32.mrb[0].mxu0
      %v2157 = vadd.f32 0.0, %v2156
      %v2158 = vpop.f32.mrb[0].mxu0
      %2159 = vmatprep.mubr.f32.mxu0 0.0
      %2160 = vmatmul.mubr.f32.gmra.mrb[0].mxu0 %v1978
      %v2161 = vpop.f32.mrb[0].mxu0
      %v2162 = vadd.f32 0.0, %v2161
      %v2163 = vpop.f32.mrb[0].mxu0
      %2164 = vmatprep.mubr.f32.mxu0 0.0
      %2165 = vmatmul.mubr.f32.gmra.mrb[0].mxu0 %v1981
      %v2166 = vpop.f32.mrb[0].mxu0
      %v2167 = vadd.f32 0.0, %v2166
      %v2168 = vpop.f32.mrb[0].mxu0
      %2169 = vmatprep.mubr.f32.mxu0 0.0
      %2170 = vmatmul.mubr.f32.gmra.mrb[0].mxu0 %v1984
      %v2171 = vpop.f32.mrb[0].mxu0
      %v2172 = vadd.f32 0.0, %v2171
      %v2173 = vpop.f32.mrb[0].mxu0
      %2174 = vmatprep.mubr.f32.mxu0 0.0
      %2175 = vmatmul.mubr.f32.gmra.mrb[0].mxu0 %v1987
      %v2176 = vpop.f32.mrb[0].mxu0
      %v2177 = vadd.f32 0.0, %v2176
      %v2178 = vpop.f32.mrb[0].mxu0
      %2179 = vmatprep.mubr.f32.mxu0 0.0
      %2180 = vmatmul.mubr.f32.gmra.mrb[0].mxu0 %v1990
      %v2181 = vpop.f32.mrb[0].mxu0
      %v2182 = vadd.f32 0.0, %v2181
      %v2183 = vpop.f32.mrb[0].mxu0
      %2184 = vmatprep.mubr.f32.mxu0 0.0
      %2185 = vmatmul.mubr.f32.gmra.mrb[0].mxu0 %v1993
      %v2186 = vpop.f32.mrb[0].mxu0
      %v2187 = vadd.f32 0.0, %v2186
      %v2188 = vpop.f32.mrb[0].mxu0
      %2189 = vmatprep.mubr.f32.mxu0 0.0
      %2190 = vmatmul.mubr.f32.gmra.mrb[0].mxu0 %v1996
      %v2191 = vpop.f32.mrb[0].mxu0
      %v2192 = vadd.f32 0.0, %v2191
      %v2193 = vpop.f32.mrb[0].mxu0
      %2194 = vmatprep.mubr.f32.mxu0 0.0
      %2195 = vmatmul.mubr.f32.gmra.mrb[0].mxu0 %v1999
      %v2196 = vpop.f32.mrb[0].mxu0
      %v2197 = vadd.f32 0.0, %v2196
      %v2198 = vpop.f32.mrb[0].mxu0
      %2199 = vmatprep.mubr.f32.mxu0 0.0
      %2200 = vmatmul.mubr.f32.gmra.mrb[0].mxu0 %v2002
      %v2201 = vpop.f32.mrb[0].mxu0
      %v2202 = vadd.f32 0.0, %v2201
      %v2203 = vpop.f32.mrb[0].mxu0
      %2204 = vmatprep.mubr.f32.mxu0 0.0
      %2205 = vmatmul.mubr.f32.gmra.mrb[0].mxu0 %v2005
      %v2206 = vpop.f32.mrb[0].mxu0
      %v2207 = vadd.f32 0.0, %v2206
      %v2208 = vpop.f32.mrb[0].mxu0
      %2209 = vmatprep.mubr.f32.mxu0 0.0
      %2210 = vmatmul.mubr.f32.gmra.mrb[0].mxu0 %v2008
      %v2211 = vpop.f32.mrb[0].mxu0
      %v2212 = vadd.f32 0.0, %v2211
      %v2213 = vpop.f32.mrb[0].mxu0
      %2214 = vmatprep.mubr.f32.mxu0 0.0
      %2215 = vmatmul.mubr.f32.gmra.mrb[0].mxu0 %v2011
      %v2216 = vpop.f32.mrb[0].mxu0
      %v2217 = vadd.f32 0.0, %v2216
      %v2218 = vpop.f32.mrb[0].mxu0
      %2219 = vmatprep.mubr.f32.mxu0 0.0
      %2220 = vmatmul.mubr.f32.gmra.mrb[0].mxu0 %v2014
      %v2221 = vpop.f32.mrb[0].mxu0
      %v2222 = vadd.f32 0.0, %v2221
      %v2223 = vpop.f32.mrb[0].mxu0
      %2224 = vmatprep.mubr.f32.mxu0 0.0
      %2225 = vmatmul.mubr.f32.gmra.mrb[0].mxu0 %v2017
      %v2226 = vpop.f32.mrb[0].mxu0
      %v2227 = vadd.f32 0.0, %v2226
      %v2228 = vpop.f32.mrb[0].mxu0
      %2229 = vmatprep.mubr.f32.mxu0 0.0
      %2230 = vmatmul.mubr.f32.gmra.mrb[0].mxu0 %v2020
      %v2231 = vpop.f32.mrb[0].mxu0
      %v2232 = vadd.f32 0.0, %v2231
      %v2233 = vpop.f32.mrb[0].mxu0
      %2234 = vmatprep.mubr.f32.mxu0 0.0
      %2235 = vmatmul.mubr.f32.gmra.mrb[0].mxu0 %v2023
      %v2236 = vpop.f32.mrb[0].mxu0
      %v2237 = vadd.f32 0.0, %v2236
      %v2238 = vpop.f32.mrb[0].mxu0
      %2239 = vmatprep.mubr.f32.mxu0 0.0
      %2240 = vmatmul.mubr.f32.gmra.mrb[0].mxu0 %v2026
      %v2241 = vpop.f32.mrb[0].mxu0
      %v2242 = vadd.f32 0.0, %v2241
      %v2243 = vpop.f32.mrb[0].mxu0
      %2244 = vmatprep.mubr.f32.mxu0 0.0
      %2245 = vmatmul.mubr.f32.gmra.mrb[0].mxu0 %v2029
      %v2246 = vpop.f32.mrb[0].mxu0
      %v2247 = vadd.f32 0.0, %v2246
      %v2248 = vpop.f32.mrb[0].mxu0
      %2249 = vmatprep.mubr.f32.mxu0 0.0
      %2250 = vmatmul.mubr.f32.gmra.mrb[0].mxu0 %v2032
      %v2251 = vpop.f32.mrb[0].mxu0
      %v2252 = vadd.f32 0.0, %v2251
      %v2253 = vpop.f32.mrb[0].mxu0
      %2254 = vmatprep.mubr.f32.mxu0 0.0
      %2255 = vmatmul.mubr.f32.gmra.mrb[0].mxu0 %v2035
      %v2256 = vpop.f32.mrb[0].mxu0
      %v2257 = vadd.f32 0.0, %v2256
      %v2258 = vpop.f32.mrb[0].mxu0
      %2259 = vmatprep.mubr.f32.mxu0 0.0
      %2260 = vmatmul.mubr.f32.gmra.mrb[0].mxu0 %v2038
      %v2261 = vpop.f32.mrb[0].mxu0
      %v2262 = vadd.f32 0.0, %v2261
      %v2263 = vpop.f32.mrb[0].mxu0
      %2264 = vdwg.mxu0
      %v2265 = vsel %vm214, %v2107, 0.0
      %v2266 = vsel %vm214, %v2112, 0.0
      %v2267 = vadd.f32 %v2265, %v2266
      %v2268 = vsel %vm214, %v2117, 0.0
      %v2269 = vadd.f32 %v2267, %v2268
      %v2270 = vsel %vm214, %v2122, 0.0
      %v2271 = vadd.f32 %v2269, %v2270
      %v2272 = vsel %vm214, %v2127, 0.0
      %v2273 = vadd.f32 %v2271, %v2272
      %v2274 = vsel %vm214, %v2132, 0.0
      %v2275 = vadd.f32 %v2273, %v2274
      %v2276 = vsel %vm214, %v2137, 0.0
      %v2277 = vadd.f32 %v2275, %v2276
      %v2278 = vsel %vm214, %v2142, 0.0
      %v2279 = vadd.f32 %v2277, %v2278
      %v2280 = vsel %vm214, %v2147, 0.0
      %v2281 = vadd.f32 %v2279, %v2280
      %v2282 = vsel %vm214, %v2152, 0.0
      %v2283 = vadd.f32 %v2281, %v2282
      %v2284 = vsel %vm214, %v2157, 0.0
      %v2285 = vadd.f32 %v2283, %v2284
      %v2286 = vsel %vm214, %v2162, 0.0
      %v2287 = vadd.f32 %v2285, %v2286
      %v2288 = vsel %vm214, %v2167, 0.0
      %v2289 = vadd.f32 %v2287, %v2288
      %v2290 = vsel %vm214, %v2172, 0.0
      %v2291 = vadd.f32 %v2289, %v2290
      %v2292 = vsel %vm214, %v2177, 0.0
      %v2293 = vadd.f32 %v2291, %v2292
      %v2294 = vsel %vm214, %v2182, 0.0
      %v2295 = vadd.f32 %v2293, %v2294
      %v2296 = vsel %vm214, %v2187, 0.0
      %v2297 = vadd.f32 %v2295, %v2296
      %v2298 = vsel %vm214, %v2192, 0.0
      %v2299 = vadd.f32 %v2297, %v2298
      %v2300 = vsel %vm214, %v2197, 0.0
      %v2301 = vadd.f32 %v2299, %v2300
      %v2302 = vsel %vm214, %v2202, 0.0
      %v2303 = vadd.f32 %v2301, %v2302
      %v2304 = vsel %vm214, %v2207, 0.0
      %v2305 = vadd.f32 %v2303, %v2304
      %v2306 = vsel %vm214, %v2212, 0.0
      %v2307 = vadd.f32 %v2305, %v2306
      %v2308 = vsel %vm214, %v2217, 0.0
      %v2309 = vadd.f32 %v2307, %v2308
      %v2310 = vsel %vm214, %v2222, 0.0
      %v2311 = vadd.f32 %v2309, %v2310
      %v2312 = vsel %vm214, %v2227, 0.0
      %v2313 = vadd.f32 %v2311, %v2312
      %v2314 = vsel %vm214, %v2232, 0.0
      %v2315 = vadd.f32 %v2313, %v2314
      %v2316 = vsel %vm214, %v2237, 0.0
      %v2317 = vadd.f32 %v2315, %v2316
      %v2318 = vsel %vm214, %v2242, 0.0
      %v2319 = vadd.f32 %v2317, %v2318
      %v2320 = vsel %vm214, %v2247, 0.0
      %v2321 = vadd.f32 %v2319, %v2320
      %v2322 = vsel %vm214, %v2252, 0.0
      %v2323 = vadd.f32 %v2321, %v2322
      %v2324 = vsel %vm214, %v2257, 0.0
      %v2325 = vadd.f32 %v2323, %v2324
      %v2326 = vsel %vm214, %v2262, 0.0
      %v2327 = vadd.f32 %v2325, %v2326
      %v2328 = vrot.slane %v2327, 4
      %v2329 = vadd.f32 %v2327, %v2328
      %v2330 = vrot.slane %v2329, 2
      %v2331 = vadd.f32 %v2329, %v2330
      %v2332 = vrot.slane %v2331, 1
      %v2333 = vadd.f32 %v2331, %v2332
      %2334 = vst.msk [vmem:[%s181] sm:$0x1] %vm223, %v2333
      %v2335 = vmul.f32 %v2107, %v2107
      %v2336 = vmul.f32 %v2112, %v2112
      %v2337 = vmul.f32 %v2117, %v2117
      %v2338 = vmul.f32 %v2122, %v2122
      %v2339 = vmul.f32 %v2127, %v2127
      %v2340 = vmul.f32 %v2132, %v2132
      %v2341 = vmul.f32 %v2137, %v2137
      %v2342 = vmul.f32 %v2142, %v2142
      %v2343 = vmul.f32 %v2147, %v2147
      %v2344 = vmul.f32 %v2152, %v2152
      %v2345 = vmul.f32 %v2157, %v2157
      %v2346 = vmul.f32 %v2162, %v2162
      %v2347 = vmul.f32 %v2167, %v2167
      %v2348 = vmul.f32 %v2172, %v2172
      %v2349 = vmul.f32 %v2177, %v2177
      %v2350 = vmul.f32 %v2182, %v2182
      %v2351 = vmul.f32 %v2187, %v2187
      %v2352 = vmul.f32 %v2192, %v2192
      %v2353 = vmul.f32 %v2197, %v2197
      %v2354 = vmul.f32 %v2202, %v2202
      %v2355 = vmul.f32 %v2207, %v2207
      %v2356 = vmul.f32 %v2212, %v2212
      %v2357 = vmul.f32 %v2217, %v2217
      %v2358 = vmul.f32 %v2222, %v2222
      %v2359 = vmul.f32 %v2227, %v2227
      %v2360 = vmul.f32 %v2232, %v2232
      %v2361 = vmul.f32 %v2237, %v2237
      %v2362 = vmul.f32 %v2242, %v2242
      %v2363 = vmul.f32 %v2247, %v2247
      %v2364 = vmul.f32 %v2252, %v2252
      %v2365 = vmul.f32 %v2257, %v2257
      %v2366 = vmul.f32 %v2262, %v2262
      %v2367 = vsel %vm214, %v2335, 0.0
      %v2368 = vsel %vm214, %v2336, 0.0
      %v2369 = vadd.f32 %v2367, %v2368
      %v2370 = vsel %vm214, %v2337, 0.0
      %v2371 = vadd.f32 %v2369, %v2370
      %v2372 = vsel %vm214, %v2338, 0.0
      %v2373 = vadd.f32 %v2371, %v2372
      %v2374 = vsel %vm214, %v2339, 0.0
      %v2375 = vadd.f32 %v2373, %v2374
      %v2376 = vsel %vm214, %v2340, 0.0
      %v2377 = vadd.f32 %v2375, %v2376
      %v2378 = vsel %vm214, %v2341, 0.0
      %v2379 = vadd.f32 %v2377, %v2378
      %v2380 = vsel %vm214, %v2342, 0.0
      %v2381 = vadd.f32 %v2379, %v2380
      %v2382 = vsel %vm214, %v2343, 0.0
      %v2383 = vadd.f32 %v2381, %v2382
      %v2384 = vsel %vm214, %v2344, 0.0
      %v2385 = vadd.f32 %v2383, %v2384
      %v2386 = vsel %vm214, %v2345, 0.0
      %v2387 = vadd.f32 %v2385, %v2386
      %v2388 = vsel %vm214, %v2346, 0.0
      %v2389 = vadd.f32 %v2387, %v2388
      %v2390 = vsel %vm214, %v2347, 0.0
      %v2391 = vadd.f32 %v2389, %v2390
      %v2392 = vsel %vm214, %v2348, 0.0
      %v2393 = vadd.f32 %v2391, %v2392
      %v2394 = vsel %vm214, %v2349, 0.0
      %v2395 = vadd.f32 %v2393, %v2394
      %v2396 = vsel %vm214, %v2350, 0.0
      %v2397 = vadd.f32 %v2395, %v2396
      %v2398 = vsel %vm214, %v2351, 0.0
      %v2399 = vadd.f32 %v2397, %v2398
      %v2400 = vsel %vm214, %v2352, 0.0
      %v2401 = vadd.f32 %v2399, %v2400
      %v2402 = vsel %vm214, %v2353, 0.0
      %v2403 = vadd.f32 %v2401, %v2402
      %v2404 = vsel %vm214, %v2354, 0.0
      %v2405 = vadd.f32 %v2403, %v2404
      %v2406 = vsel %vm214, %v2355, 0.0
      %v2407 = vadd.f32 %v2405, %v2406
      %v2408 = vsel %vm214, %v2356, 0.0
      %v2409 = vadd.f32 %v2407, %v2408
      %v2410 = vsel %vm214, %v2357, 0.0
      %v2411 = vadd.f32 %v2409, %v2410
      %v2412 = vsel %vm214, %v2358, 0.0
      %v2413 = vadd.f32 %v2411, %v2412
      %v2414 = vsel %vm214, %v2359, 0.0
      %v2415 = vadd.f32 %v2413, %v2414
      %v2416 = vsel %vm214, %v2360, 0.0
      %v2417 = vadd.f32 %v2415, %v2416
      %v2418 = vsel %vm214, %v2361, 0.0
      %v2419 = vadd.f32 %v2417, %v2418
      %v2420 = vsel %vm214, %v2362, 0.0
      %v2421 = vadd.f32 %v2419, %v2420
      %v2422 = vsel %vm214, %v2363, 0.0
      %v2423 = vadd.f32 %v2421, %v2422
      %v2424 = vsel %vm214, %v2364, 0.0
      %v2425 = vadd.f32 %v2423, %v2424
      %v2426 = vsel %vm214, %v2365, 0.0
      %v2427 = vadd.f32 %v2425, %v2426
      %v2428 = vsel %vm214, %v2366, 0.0
      %v2429 = vadd.f32 %v2427, %v2428
      %v2430 = vrot.slane %v2429, 4
      %v2431 = vadd.f32 %v2429, %v2430
      %v2432 = vrot.slane %v2431, 2
      %v2433 = vadd.f32 %v2431, %v2432
      %v2434 = vrot.slane %v2433, 1
      %v2435 = vadd.f32 %v2433, %v2434
      %2436 = vst.msk [vmem:[%s181 + $0x1] sm:$0x1] %vm223, %v2435
      %2437 = vst.msk [vmem:[%s177] sm:$0xff] %vm214, %v2107
      %2438 = vst.msk [vmem:[%s177 + $0x8] sm:$0xff] %vm214, %v2112
      %2439 = vst.msk [vmem:[%s177 + $0x10] sm:$0xff] %vm214, %v2117
      %2440 = vst.msk [vmem:[%s177 + $0x18] sm:$0xff] %vm214, %v2122
      %2441 = vst.msk [vmem:[%s177 + $0x20] sm:$0xff] %vm214, %v2127
      %2442 = vst.msk [vmem:[%s177 + $0x28] sm:$0xff] %vm214, %v2132
      %2443 = vst.msk [vmem:[%s177 + $0x30] sm:$0xff] %vm214, %v2137
      %2444 = vst.msk [vmem:[%s177 + $0x38] sm:$0xff] %vm214, %v2142
      %2445 = vst.msk [vmem:[%s177 + $0x40] sm:$0xff] %vm214, %v2147
      %2446 = vst.msk [vmem:[%s177 + $0x48] sm:$0xff] %vm214, %v2152
      %2447 = vst.msk [vmem:[%s177 + $0x50] sm:$0xff] %vm214, %v2157
      %2448 = vst.msk [vmem:[%s177 + $0x58] sm:$0xff] %vm214, %v2162
      %2449 = vst.msk [vmem:[%s177 + $0x60] sm:$0xff] %vm214, %v2167
      %2450 = vst.msk [vmem:[%s177 + $0x68] sm:$0xff] %vm214, %v2172
      %2451 = vst.msk [vmem:[%s177 + $0x70] sm:$0xff] %vm214, %v2177
      %2452 = vst.msk [vmem:[%s177 + $0x78] sm:$0xff] %vm214, %v2182
      %2453 = vst.msk [vmem:[%s177 + $0x80] sm:$0xff] %vm214, %v2187
      %2454 = vst.msk [vmem:[%s177 + $0x88] sm:$0xff] %vm214, %v2192
      %2455 = vst.msk [vmem:[%s177 + $0x90] sm:$0xff] %vm214, %v2197
      %2456 = vst.msk [vmem:[%s177 + $0x98] sm:$0xff] %vm214, %v2202
      %2457 = vst.msk [vmem:[%s177 + $0xa0] sm:$0xff] %vm214, %v2207
      %2458 = vst.msk [vmem:[%s177 + $0xa8] sm:$0xff] %vm214, %v2212
      %2459 = vst.msk [vmem:[%s177 + $0xb0] sm:$0xff] %vm214, %v2217
      %2460 = vst.msk [vmem:[%s177 + $0xb8] sm:$0xff] %vm214, %v2222
      %2461 = vst.msk [vmem:[%s177 + $0xc0] sm:$0xff] %vm214, %v2227
      %2462 = vst.msk [vmem:[%s177 + $0xc8] sm:$0xff] %vm214, %v2232
      %2463 = vst.msk [vmem:[%s177 + $0xd0] sm:$0xff] %vm214, %v2237
      %2464 = vst.msk [vmem:[%s177 + $0xd8] sm:$0xff] %vm214, %v2242
      %2465 = vst.msk [vmem:[%s177 + $0xe0] sm:$0xff] %vm214, %v2247
      %2466 = vst.msk [vmem:[%s177 + $0xe8] sm:$0xff] %vm214, %v2252
      %2467 = vst.msk [vmem:[%s177 + $0xf0] sm:$0xff] %vm214, %v2257
      %2468 = vst.msk [vmem:[%s177 + $0xf8] sm:$0xff] %vm214, %v2262
      %p2469 = scmp.lt.s32.totalorder %s15, 1
      %s2470 = scalar_select %p2469, %s15, 1
      %s2471 = smul.addr %s2470, 32
      %s2472 = smul.addr %s2471, 8
      %s2473 = scalar_lea.vmem %s2, %s2472
      %p2474 = scmp.lt.s32.totalorder %s15, 1
      %s2475 = scalar_select %p2474, %s15, 1
      %s2476 = smul.addr %s2475, 2
      %s2477 = scalar_lea.vmem %s3, %s2476
      // Predicated region
      $region29: #{resblock2d_forward.3} parent=27 // pred_check
        %p2478 = pneg %p80
      $region30: #{resblock2d_forward.3} parent=27 // pred_check_branch
        %2480 = sbr.rel (%p2478) target = $region32
      $region31: #{resblock2d_forward.3} parent=27 // pred_region
        _
      $region32: #{resblock2d_forward.3} parent=27 // pred_fallthru
        _
      // Predicated region
      $region33: #{resblock2d_forward.3} parent=27 // pred_check
        %p2481 = pneg %p106
      $region34: #{resblock2d_forward.3} parent=27 // pred_check_branch
        %2483 = sbr.rel (%p2481) target = $region36
      $region35: #{resblock2d_forward.3} parent=27 // pred_region
        _
      $region36: #{resblock2d_forward.3} parent=27 // pred_fallthru
        _
    $region28: #{resblock2d_forward.3} parent=5 // pred_fallthru
      _
    %p2484 = scmp.le.s32.totalorder 2, %s10
    // Predicated region
    $region37: #{resblock2d_forward.3} parent=5 // pred_check
      %p2485 = pneg %p2484
    $region38: #{resblock2d_forward.3} parent=5 // pred_check_branch
      %2487 = sbr.rel (%p2485) target = $region40
    $region39: #{resblock2d_forward.3} parent=5 // pred_region
      %s2488 = ssub.s32 %s10, 2
      // Predicated region
      $region41: #{resblock2d_forward.3} parent=39 // pred_check
        %p2489 = pneg %p86
      $region42: #{resblock2d_forward.3} parent=39 // pred_check_branch
        %2491 = sbr.rel (%p2489) target = $region44
      $region43: #{resblock2d_forward.3} parent=39 // pred_region
        %p2492 = scmp.lt.s32.totalorder %s16, 1
        %s2493 = scalar_select %p2492, %s16, 1
        %s2494 = smul.addr %s2493, 32
        %s2495 = smul.addr %s2494, 8
        %s2496 = scalar_lea.vmem %s2, %s2495
      $region44: #{resblock2d_forward.3} parent=39 // pred_fallthru
        _
      // Predicated region
      $region45: #{resblock2d_forward.3} parent=39 // pred_check
        %p2497 = pneg %p112
      $region46: #{resblock2d_forward.3} parent=39 // pred_check_branch
        %2499 = sbr.rel (%p2497) target = $region48
      $region47: #{resblock2d_forward.3} parent=39 // pred_region
        %p2500 = scmp.lt.s32.totalorder %s16, 1
        %s2501 = scalar_select %p2500, %s16, 1
        %s2502 = smul.addr %s2501, 2
        %s2503 = scalar_lea.vmem %s3, %s2502
      $region48: #{resblock2d_forward.3} parent=39 // pred_fallthru
        _
    $region40: #{resblock2d_forward.3} parent=5 // pred_fallthru
      _
  $region6: #{resblock2d_forward.3} parent=0 // loop_footer
    %s14 = sadd.s32 1, %s10
  $region7: #{resblock2d_forward.3} parent=0 // loop_footer_branch
    %9 = sbr.rel target = $region3
  $region8: #{resblock2d_forward.3} parent=0 // loop_exit
    _

// kernel: resblock2d_forward.4
$region0: #{resblock2d_forward.4}
  #allocation0 [shape = 'u32[]', space=smem, size = 0x4, offset = 0x4, fixed_abs, tag = 'smem constant byte address 0x4 - core index']
  #allocation1 [shape = 'u32[144,128]{1,0:T(1,128)}', space=vmem, size = 0x12000, scoped, tag = 'internal scratch']
  #allocation2 [shape = 'f32[18,18,8]{2,1,0:T(8,128)}', space=vmem, size = 0x36000, scoped, tag = 'scratch operand']
  #allocation3 [shape = 'f32[256,72]{1,0:T(8,128)}', space=vmem, size = 0x20000, scoped, tag = 'scratch operand']
  %s0 = inlined_call_operand.vmem [shape: f32[2,16,16,8], index: 0, kind: input, shape index: {}]
  %s1 = inlined_call_operand.vmem [shape: f32[72,8], index: 1, kind: input, shape index: {}]
  %s2 = inlined_call_operand.vmem [shape: f32[1,8], index: 2, kind: input, shape index: {}]
  %s3 = inlined_call_operand.vmem [shape: f32[1,8], index: 3, kind: input, shape index: {}]
  %s4 = inlined_call_operand.vmem [shape: f32[2,16,16,8], index: 4, kind: output, shape index: {0}]
  %s5 = inlined_call_operand.vmem [shape: f32[2,2,8], index: 5, kind: output, shape index: {1}]
  %6 = xla_tuple %s4, %s5
  %s7 = sld [smem:[#allocation0]]
  $region57: #{resblock2d_forward.4} parent=0
    _
  %s9 = ssub.s32 1, %s7
  %s10 = scalar_select 0, %s9, %s7
  loop: start=0, step=1, limit=4
  $region2: #{resblock2d_forward.4} parent=0 // loop_pre_header
    _
  $region3: #{resblock2d_forward.4} parent=0 // loop_header
    %s12 = sphi 0, %s16
    %p13 = scmp.ge.s32.totalorder %s12, 4
    %s22 = sphi 0, %s24
    %s25 = sphi 0, %s22
    %s26 = sphi 0, %s25
    %s42 = sphi 0, %s26
    %s46 = sphi 0, %s46
    %s48 = sphi 0, %s46
    %s49 = sphi 0, %s48
    %s63 = sphi 0, %s49
    %s67 = sphi 0, %s67
    %s69 = sphi 0, %s67
    %s70 = sphi 0, %s69
    %s84 = sphi 0, %s70
    %s88 = sphi 0, %s88
    %s90 = sphi 0, %s88
    %s91 = sphi 0, %s90
    %s105 = sphi 0, %s91
    %s111 = sphi 0, %s113
    %s114 = sphi 0, %s111
    %s115 = sphi 0, %s114
    %s131 = sphi 0, %s115
    %s137 = sphi 0, %s139
    %s140 = sphi 0, %s137
    %s141 = sphi 0, %s140
    %s157 = sphi 0, %s141
  $region4: #{resblock2d_forward.4} parent=0 // loop_header_branch
    %15 = sbr.rel (%p13) target = $region8
  $region5: #{resblock2d_forward.4} parent=0 // loop_body
    %s17 = ssub.s32 %s12, 1
    %s18 = ssub.s32 %s12, 2
    %s19 = sadd.s32 %s12, 1
    %s20 = ssub.s32 %s12, %s19
    %p21 = scmp.eq.s32.totalorder %s20, 0
    %s23 = sadd.s32 %s22, 1
    %s24 = scalar_select %p21, %s22, %s23
    %p27 = pneg %p21
    %p28 = scmp.eq.s32.totalorder %s12, 1
    %p29 = por %p27, %p28
    %p30 = scmp.ne.s32.totalorder %s22, %s25
    %p31 = scmp.eq.s32.totalorder %s12, 0
    %p32 = por %p30, %p31
    %p33 = scmp.ne.s32.totalorder %s22, %s25
    %p34 = scmp.eq.s32.totalorder %s17, 1
    %p35 = por %p33, %p34
    %p36 = scmp.ne.s32.totalorder %s25, %s26
    %p37 = scmp.eq.s32.totalorder %s17, 0
    %p38 = por %p36, %p37
    %p39 = scmp.ne.s32.totalorder %s25, %s26
    %p40 = scmp.eq.s32.totalorder %s18, 1
    %p41 = por %p39, %p40
    %p43 = scmp.ne.s32.totalorder %s26, %s42
    %p44 = scmp.eq.s32.totalorder %s18, 0
    %p45 = por %p43, %p44
    %s47 = sadd.s32 %s46, 1
    %p50 = scmp.eq.s32.totalorder %s12, 1
    %p51 = scmp.ne.s32.totalorder %s46, %s48
    %p52 = scmp.eq.s32.totalorder %s12, 0
    %p53 = por %p51, %p52
    %p54 = scmp.ne.s32.totalorder %s46, %s48
    %p55 = scmp.eq.s32.totalorder %s17, 1
    %p56 = por %p54, %p55
    %p57 = scmp.ne.s32.totalorder %s48, %s49
    %p58 = scmp.eq.s32.totalorder %s17, 0
    %p59 = por %p57, %p58
    %p60 = scmp.ne.s32.totalorder %s48, %s49
    %p61 = scmp.eq.s32.totalorder %s18, 1
    %p62 = por %p60, %p61
    %p64 = scmp.ne.s32.totalorder %s49, %s63
    %p65 = scmp.eq.s32.totalorder %s18, 0
    %p66 = por %p64, %p65
    %s68 = sadd.s32 %s67, 1
    %p71 = scmp.eq.s32.totalorder %s12, 1
    %p72 = scmp.ne.s32.totalorder %s67, %s69
    %p73 = scmp.eq.s32.totalorder %s12, 0
    %p74 = por %p72, %p73
    %p75 = scmp.ne.s32.totalorder %s67, %s69
    %p76 = scmp.eq.s32.totalorder %s17, 1
    %p77 = por %p75, %p76
    %p78 = scmp.ne.s32.totalorder %s69, %s70
    %p79 = scmp.eq.s32.totalorder %s17, 0
    %p80 = por %p78, %p79
    %p81 = scmp.ne.s32.totalorder %s69, %s70
    %p82 = scmp.eq.s32.totalorder %s18, 1
    %p83 = por %p81, %p82
    %p85 = scmp.ne.s32.totalorder %s70, %s84
    %p86 = scmp.eq.s32.totalorder %s18, 0
    %p87 = por %p85, %p86
    %s89 = sadd.s32 %s88, 1
    %p92 = scmp.eq.s32.totalorder %s12, 1
    %p93 = scmp.ne.s32.totalorder %s88, %s90
    %p94 = scmp.eq.s32.totalorder %s12, 0
    %p95 = por %p93, %p94
    %p96 = scmp.ne.s32.totalorder %s88, %s90
    %p97 = scmp.eq.s32.totalorder %s17, 1
    %p98 = por %p96, %p97
    %p99 = scmp.ne.s32.totalorder %s90, %s91
    %p100 = scmp.eq.s32.totalorder %s17, 0
    %p101 = por %p99, %p100
    %p102 = scmp.ne.s32.totalorder %s90, %s91
    %p103 = scmp.eq.s32.totalorder %s18, 1
    %p104 = por %p102, %p103
    %p106 = scmp.ne.s32.totalorder %s91, %s105
    %p107 = scmp.eq.s32.totalorder %s18, 0
    %p108 = por %p106, %p107
    %s109 = ssub.s32 %s12, %s19
    %p110 = scmp.eq.s32.totalorder %s109, 0
    %s112 = sadd.s32 %s111, 1
    %s113 = scalar_select %p110, %s111, %s112
    %p116 = pneg %p110
    %p117 = scmp.eq.s32.totalorder %s12, 1
    %p118 = por %p116, %p117
    %p119 = scmp.ne.s32.totalorder %s111, %s114
    %p120 = scmp.eq.s32.totalorder %s12, 0
    %p121 = por %p119, %p120
    %p122 = scmp.ne.s32.totalorder %s111, %s114
    %p123 = scmp.eq.s32.totalorder %s17, 1
    %p124 = por %p122, %p123
    %p125 = scmp.ne.s32.totalorder %s114, %s115
    %p126 = scmp.eq.s32.totalorder %s17, 0
    %p127 = por %p125, %p126
    %p128 = scmp.ne.s32.totalorder %s114, %s115
    %p129 = scmp.eq.s32.totalorder %s18, 1
    %p130 = por %p128, %p129
    %p132 = scmp.ne.s32.totalorder %s115, %s131
    %p133 = scmp.eq.s32.totalorder %s18, 0
    %p134 = por %p132, %p133
    %s135 = ssub.s32 %s12, %s19
    %p136 = scmp.eq.s32.totalorder %s135, 0
    %s138 = sadd.s32 %s137, 1
    %s139 = scalar_select %p136, %s137, %s138
    %p142 = pneg %p136
    %p143 = scmp.eq.s32.totalorder %s12, 1
    %p144 = por %p142, %p143
    %p145 = scmp.ne.s32.totalorder %s137, %s140
    %p146 = scmp.eq.s32.totalorder %s12, 0
    %p147 = por %p145, %p146
    %p148 = scmp.ne.s32.totalorder %s137, %s140
    %p149 = scmp.eq.s32.totalorder %s17, 1
    %p150 = por %p148, %p149
    %p151 = scmp.ne.s32.totalorder %s140, %s141
    %p152 = scmp.eq.s32.totalorder %s17, 0
    %p153 = por %p151, %p152
    %p154 = scmp.ne.s32.totalorder %s140, %s141
    %p155 = scmp.eq.s32.totalorder %s18, 1
    %p156 = por %p154, %p155
    %p158 = scmp.ne.s32.totalorder %s141, %s157
    %p159 = scmp.eq.s32.totalorder %s18, 0
    %p160 = por %p158, %p159
    %p161 = scmp.le.s32.totalorder 1, %s12
    %p162 = scmp.lt.s32.totalorder %s12, 3
    %p163 = pnand %p161, %p162
    %p164 = pneg %p163
    // Predicated region
    $region9: #{resblock2d_forward.4} parent=5 // pred_check
      _
    $region10: #{resblock2d_forward.4} parent=5 // pred_check_branch
      %166 = sbr.rel (%p163) target = $region12
    $region11: #{resblock2d_forward.4} parent=5 // pred_region
      %s167 = ssub.s32 %s12, 1
      // Predicated region
      $region13: #{resblock2d_forward.4} parent=11 // pred_check
        %p168 = pneg %p59
      $region14: #{resblock2d_forward.4} parent=11 // pred_check_branch
        %170 = sbr.rel (%p168) target = $region16
      $region15: #{resblock2d_forward.4} parent=11 // pred_region
        _
      $region16: #{resblock2d_forward.4} parent=11 // pred_fallthru
        _
      // Predicated region
      $region17: #{resblock2d_forward.4} parent=11 // pred_check
        %p171 = pneg %p80
      $region18: #{resblock2d_forward.4} parent=11 // pred_check_branch
        %173 = sbr.rel (%p171) target = $region20
      $region19: #{resblock2d_forward.4} parent=11 // pred_region
        _
      $region20: #{resblock2d_forward.4} parent=11 // pred_fallthru
        _
      // Predicated region
      $region21: #{resblock2d_forward.4} parent=11 // pred_check
        %p174 = pneg %p101
      $region22: #{resblock2d_forward.4} parent=11 // pred_check_branch
        %176 = sbr.rel (%p174) target = $region24
      $region23: #{resblock2d_forward.4} parent=11 // pred_region
        _
      $region24: #{resblock2d_forward.4} parent=11 // pred_fallthru
        _
    $region12: #{resblock2d_forward.4} parent=5 // pred_fallthru
      _
    %p177 = scmp.lt.s32.totalorder %s12, 2
    // Predicated region
    $region25: #{resblock2d_forward.4} parent=5 // pred_check
      %p178 = pneg %p177
    $region26: #{resblock2d_forward.4} parent=5 // pred_check_branch
      %180 = sbr.rel (%p178) target = $region28
    $region27: #{resblock2d_forward.4} parent=5 // pred_region
      // Predicated region
      $region29: #{resblock2d_forward.4} parent=27 // pred_check
        %p181 = pneg %p32
      $region30: #{resblock2d_forward.4} parent=27 // pred_check_branch
        %183 = sbr.rel (%p181) target = $region32
      $region31: #{resblock2d_forward.4} parent=27 // pred_region
        %p184 = scmp.lt.s32.totalorder %s12, 1
        %s185 = scalar_select %p184, %s12, 1
        %s186 = smul.addr %s185, 32
        %s187 = smul.addr %s186, 8
        %s188 = scalar_lea.vmem %s0, %s187
      $region32: #{resblock2d_forward.4} parent=27 // pred_fallthru
        _
    $region28: #{resblock2d_forward.4} parent=5 // pred_fallthru
      _
    %p189 = scmp.le.s32.totalorder 1, %s12
    %p190 = scmp.lt.s32.totalorder %s12, 3
    %p191 = pnand %p189, %p190
    %p192 = pneg %p191
    // Predicated region
    $region33: #{resblock2d_forward.4} parent=5 // pred_check
      _
    $region34: #{resblock2d_forward.4} parent=5 // pred_check_branch
      %194 = sbr.rel (%p191) target = $region36
    $region35: #{resblock2d_forward.4} parent=5 // pred_region
      %s195 = ssub.s32 %s12, 1
      %p196 = scmp.lt.s32.totalorder %s17, 1
      %s197 = scalar_select %p196, %s17, 1
      %s198 = smul.addr %s197, 32
      %s199 = smul.addr %s198, 8
      %s200 = scalar_lea.vmem %s0, %s199
      %p201 = pneg %p38
      %p202 = pneg %p35
      %p203 = pneg %p59
      %p204 = pneg %p56
      %p205 = pneg %p80
      %p206 = pneg %p77
      %p207 = pneg %p101
      %p208 = pneg %p98
      %p209 = pneg %p127
      %p210 = pneg %p124
      %p211 = scmp.lt.s32.totalorder %s17, 1
      %s212 = scalar_select %p211, %s17, 1
      %s213 = smul.addr %s212, 32
      %s214 = smul.addr %s213, 8
      %s215 = scalar_lea.vmem %s4, %s214
      %p216 = pneg %p153
      %p217 = pneg %p150
      %p218 = scmp.lt.s32.totalorder %s17, 1
      %s219 = scalar_select %p218, %s17, 1
      %s220 = smul.addr %s219, 2
      %s221 = scalar_lea.vmem %s5, %s220
      %p222 = scmp.lt.s32.totalorder %s17, 1
      %s223 = scalar_select %p222, %s17, 1
      %s224 = smul.addr %s223, 32
      %s225 = smul.addr %s224, 8
      %s226 = scalar_lea.vmem %s0, %s225
      %p227 = scmp.lt.s32.totalorder %s17, 1
      %s228 = scalar_select %p227, %s17, 1
      %s229 = smul.addr %s228, 32
      %s230 = smul.addr %s229, 8
      %s231 = scalar_lea.vmem %s4, %s230
      %p232 = scmp.lt.s32.totalorder %s17, 1
      %s233 = scalar_select %p232, %s17, 1
      %s234 = smul.addr %s233, 2
      %s235 = scalar_lea.vmem %s5, %s234
      %v236 = vld [vmem:[%s226] sm:$0xff]
      %v237 = vld [vmem:[%s226 + $0x8] sm:$0xff]
      %v238 = vld [vmem:[%s226 + $0x10] sm:$0xff]
      %v239 = vld [vmem:[%s226 + $0x18] sm:$0xff]
      %v240 = vld [vmem:[%s226 + $0x20] sm:$0xff]
      %v241 = vld [vmem:[%s226 + $0x28] sm:$0xff]
      %v242 = vld [vmem:[%s226 + $0x30] sm:$0xff]
      %v243 = vld [vmem:[%s226 + $0x38] sm:$0xff]
      %v244 = vld [vmem:[%s226 + $0x40] sm:$0xff]
      %v245 = vld [vmem:[%s226 + $0x48] sm:$0xff]
      %v246 = vld [vmem:[%s226 + $0x50] sm:$0xff]
      %v247 = vld [vmem:[%s226 + $0x58] sm:$0xff]
      %v248 = vld [vmem:[%s226 + $0x60] sm:$0xff]
      %v249 = vld [vmem:[%s226 + $0x68] sm:$0xff]
      %v250 = vld [vmem:[%s226 + $0x70] sm:$0xff]
      %v251 = vld [vmem:[%s226 + $0x78] sm:$0xff]
      %v252 = vld [vmem:[%s226 + $0x80] sm:$0xff]
      %v253 = vld [vmem:[%s226 + $0x88] sm:$0xff]
      %v254 = vld [vmem:[%s226 + $0x90] sm:$0xff]
      %v255 = vld [vmem:[%s226 + $0x98] sm:$0xff]
      %v256 = vld [vmem:[%s226 + $0xa0] sm:$0xff]
      %v257 = vld [vmem:[%s226 + $0xa8] sm:$0xff]
      %v258 = vld [vmem:[%s226 + $0xb0] sm:$0xff]
      %v259 = vld [vmem:[%s226 + $0xb8] sm:$0xff]
      %v260 = vld [vmem:[%s226 + $0xc0] sm:$0xff]
      %v261 = vld [vmem:[%s226 + $0xc8] sm:$0xff]
      %v262 = vld [vmem:[%s226 + $0xd0] sm:$0xff]
      %v263 = vld [vmem:[%s226 + $0xd8] sm:$0xff]
      %v264 = vld [vmem:[%s226 + $0xe0] sm:$0xff]
      %v265 = vld [vmem:[%s226 + $0xe8] sm:$0xff]
      %v266 = vld [vmem:[%s226 + $0xf0] sm:$0xff]
      %v267 = vld [vmem:[%s226 + $0xf8] sm:$0xff]
      %v268 = vld [vmem:[%s2] sm:$0x1]
      %v270 = vlaneseq
      %v271 = vshrl.u32 %v270, 7
      %v272 = vsub.s32 0, %v271
      %v273 = vrot.slane %v268, %v272
      %v275 = vmul.f32 %v236, %v273
      %v276 = vmul.f32 %v237, %v273
      %v277 = vmul.f32 %v238, %v273
      %v278 = vmul.f32 %v239, %v273
      %v279 = vmul.f32 %v240, %v273
      %v280 = vmul.f32 %v241, %v273
      %v281 = vmul.f32 %v242, %v273
      %v282 = vmul.f32 %v243, %v273
      %v283 = vmul.f32 %v244, %v273
      %v284 = vmul.f32 %v245, %v273
      %v285 = vmul.f32 %v246, %v273
      %v286 = vmul.f32 %v247, %v273
      %v287 = vmul.f32 %v248, %v273
      %v288 = vmul.f32 %v249, %v273
      %v289 = vmul.f32 %v250, %v273
      %v290 = vmul.f32 %v251, %v273
      %v291 = vmul.f32 %v252, %v273
      %v292 = vmul.f32 %v253, %v273
      %v293 = vmul.f32 %v254, %v273
      %v294 = vmul.f32 %v255, %v273
      %v295 = vmul.f32 %v256, %v273
      %v296 = vmul.f32 %v257, %v273
      %v297 = vmul.f32 %v258, %v273
      %v298 = vmul.f32 %v259, %v273
      %v299 = vmul.f32 %v260, %v273
      %v300 = vmul.f32 %v261, %v273
      %v301 = vmul.f32 %v262, %v273
      %v302 = vmul.f32 %v263, %v273
      %v303 = vmul.f32 %v264, %v273
      %v304 = vmul.f32 %v265, %v273
      %v305 = vmul.f32 %v266, %v273
      %v306 = vmul.f32 %v267, %v273
      %v307 = vld [vmem:[%s3] sm:$0x1]
      %v309 = vlaneseq
      %v310 = vshrl.u32 %v309, 7
      %v311 = vsub.s32 0, %v310
      %v312 = vrot.slane %v307, %v311
      %v314 = vadd.f32 %v275, %v312
      %v315 = vadd.f32 %v276, %v312
      %v316 = vadd.f32 %v277, %v312
      %v317 = vadd.f32 %v278, %v312
      %v318 = vadd.f32 %v279, %v312
      %v319 = vadd.f32 %v280, %v312
      %v320 = vadd.f32 %v281, %v312
      %v321 = vadd.f32 %v282, %v312
      %v322 = vadd.f32 %v283, %v312
      %v323 = vadd.f32 %v284, %v312
      %v324 = vadd.f32 %v285, %v312
      %v325 = vadd.f32 %v286, %v312
      %v326 = vadd.f32 %v287, %v312
      %v327 = vadd.f32 %v288, %v312
      %v328 = vadd.f32 %v289, %v312
      %v329 = vadd.f32 %v290, %v312
      %v330 = vadd.f32 %v291, %v312
      %v331 = vadd.f32 %v292, %v312
      %v332 = vadd.f32 %v293, %v312
      %v333 = vadd.f32 %v294, %v312
      %v334 = vadd.f32 %v295, %v312
      %v335 = vadd.f32 %v296, %v312
      %v336 = vadd.f32 %v297, %v312
      %v337 = vadd.f32 %v298, %v312
      %v338 = vadd.f32 %v299, %v312
      %v339 = vadd.f32 %v300, %v312
      %v340 = vadd.f32 %v301, %v312
      %v341 = vadd.f32 %v302, %v312
      %v342 = vadd.f32 %v303, %v312
      %v343 = vadd.f32 %v304, %v312
      %v344 = vadd.f32 %v305, %v312
      %v345 = vadd.f32 %v306, %v312
      %v346 = vmax.f32 %v314, 0.0
      %v347 = vmax.f32 %v315, 0.0
      %v348 = vmax.f32 %v316, 0.0
      %v349 = vmax.f32 %v317, 0.0
      %v350 = vmax.f32 %v318, 0.0
      %v351 = vmax.f32 %v319, 0.0
      %v352 = vmax.f32 %v320, 0.0
      %v353 = vmax.f32 %v321, 0.0
      %v354 = vmax.f32 %v322, 0.0
      %v355 = vmax.f32 %v323, 0.0
      %v356 = vmax.f32 %v324, 0.0
      %v357 = vmax.f32 %v325, 0.0
      %v358 = vmax.f32 %v326, 0.0
      %v359 = vmax.f32 %v327, 0.0
      %v360 = vmax.f32 %v328, 0.0
      %v361 = vmax.f32 %v329, 0.0
      %v362 = vmax.f32 %v330, 0.0
      %v363 = vmax.f32 %v331, 0.0
      %v364 = vmax.f32 %v332, 0.0
      %v365 = vmax.f32 %v333, 0.0
      %v366 = vmax.f32 %v334, 0.0
      %v367 = vmax.f32 %v335, 0.0
      %v368 = vmax.f32 %v336, 0.0
      %v369 = vmax.f32 %v337, 0.0
      %v370 = vmax.f32 %v338, 0.0
      %v371 = vmax.f32 %v339, 0.0
      %v372 = vmax.f32 %v340, 0.0
      %v373 = vmax.f32 %v341, 0.0
      %v374 = vmax.f32 %v342, 0.0
      %v375 = vmax.f32 %v343, 0.0
      %v376 = vmax.f32 %v344, 0.0
      %v377 = vmax.f32 %v345, 0.0
      %vm378 = vcmask 64512
      %379 = vst.msk [vmem:[#allocation2] sm:$0xff] %vm378, 0.0
      %380 = vst.msk [vmem:[#allocation2 + $0x8] sm:$0xff] %vm378, 0.0
      %vm381 = vcmask 58368
      %382 = vst.msk [vmem:[#allocation2 + $0x10] sm:$0x3] %vm381, 0.0
      %s383 = scalar_lea.vmem [#allocation2], 408
      %384 = vst.msk [vmem:[%s383] sm:$0xff] %vm378, 0.0
      %385 = vst.msk [vmem:[%s383 + $0x8] sm:$0xff] %vm378, 0.0
      %386 = vst.msk [vmem:[%s383 + $0x10] sm:$0x3] %vm381, 0.0
      %vm387 = vcmask 57344
      %388 = vst.msk [vmem:[#allocation2] sm:$0x1] %vm387, 0.0
      %389 = vst.msk [vmem:[#allocation2 + $0x18] sm:$0x1] %vm387, 0.0
      %390 = vst.msk [vmem:[#allocation2 + $0x30] sm:$0x1] %vm387, 0.0
      %391 = vst.msk [vmem:[#allocation2 + $0x48] sm:$0x1] %vm387, 0.0
      %392 = vst.msk [vmem:[#allocation2 + $0x60] sm:$0x1] %vm387, 0.0
      %393 = vst.msk [vmem:[#allocation2 + $0x78] sm:$0x1] %vm387, 0.0
      %394 = vst.msk [vmem:[#allocation2 + $0x90] sm:$0x1] %vm387, 0.0
      %395 = vst.msk [vmem:[#allocation2 + $0xa8] sm:$0x1] %vm387, 0.0
      %396 = vst.msk [vmem:[#allocation2 + $0xc0] sm:$0x1] %vm387, 0.0
      %397 = vst.msk [vmem:[#allocation2 + $0xd8] sm:$0x1] %vm387, 0.0
      %398 = vst.msk [vmem:[#allocation2 + $0xf0] sm:$0x1] %vm387, 0.0
      %399 = vst.msk [vmem:[#allocation2 + $0x108] sm:$0x1] %vm387, 0.0
      %400 = vst.msk [vmem:[#allocation2 + $0x120] sm:$0x1] %vm387, 0.0
      %401 = vst.msk [vmem:[#allocation2 + $0x138] sm:$0x1] %vm387, 0.0
      %402 = vst.msk [vmem:[#allocation2 + $0x150] sm:$0x1] %vm387, 0.0
      %403 = vst.msk [vmem:[#allocation2 + $0x168] sm:$0x1] %vm387, 0.0
      %404 = vst.msk [vmem:[#allocation2 + $0x180] sm:$0x1] %vm387, 0.0
      %405 = vst.msk [vmem:[#allocation2 + $0x198] sm:$0x1] %vm387, 0.0
      %406 = vst.msk [vmem:[#allocation2 + $0x11] sm:$0x1] %vm387, 0.0
      %407 = vst.msk [vmem:[#allocation2 + $0x29] sm:$0x1] %vm387, 0.0
      %408 = vst.msk [vmem:[#allocation2 + $0x41] sm:$0x1] %vm387, 0.0
      %409 = vst.msk [vmem:[#allocation2 + $0x59] sm:$0x1] %vm387, 0.0
      %410 = vst.msk [vmem:[#allocation2 + $0x71] sm:$0x1] %vm387, 0.0
      %411 = vst.msk [vmem:[#allocation2 + $0x89] sm:$0x1] %vm387, 0.0
      %412 = vst.msk [vmem:[#allocation2 + $0xa1] sm:$0x1] %vm387, 0.0
      %413 = vst.msk [vmem:[#allocation2 + $0xb9] sm:$0x1] %vm387, 0.0
      %414 = vst.msk [vmem:[#allocation2 + $0xd1] sm:$0x1] %vm387, 0.0
      %415 = vst.msk [vmem:[#allocation2 + $0xe9] sm:$0x1] %vm387, 0.0
      %416 = vst.msk [vmem:[#allocation2 + $0x101] sm:$0x1] %vm387, 0.0
      %417 = vst.msk [vmem:[#allocation2 + $0x119] sm:$0x1] %vm387, 0.0
      %418 = vst.msk [vmem:[#allocation2 + $0x131] sm:$0x1] %vm387, 0.0
      %419 = vst.msk [vmem:[#allocation2 + $0x149] sm:$0x1] %vm387, 0.0
      %420 = vst.msk [vmem:[#allocation2 + $0x161] sm:$0x1] %vm387, 0.0
      %421 = vst.msk [vmem:[#allocation2 + $0x179] sm:$0x1] %vm387, 0.0
      %422 = vst.msk [vmem:[#allocation2 + $0x191] sm:$0x1] %vm387, 0.0
      %423 = vst.msk [vmem:[#allocation2 + $0x1a9] sm:$0x1] %vm387, 0.0
      %s424 = scalar_lea.vmem [#allocation2], 24
      %425 = vst.msk [vmem:[%s424 + $0x1] sm:$0xff] %vm378, %v346
      %426 = vst.msk [vmem:[%s424 + $0x9] sm:$0xff] %vm378, %v347
      %427 = vst.msk [vmem:[%s424 + $0x19] sm:$0xff] %vm378, %v348
      %428 = vst.msk [vmem:[%s424 + $0x21] sm:$0xff] %vm378, %v349
      %429 = vst.msk [vmem:[%s424 + $0x31] sm:$0xff] %vm378, %v350
      %430 = vst.msk [vmem:[%s424 + $0x39] sm:$0xff] %vm378, %v351
      %431 = vst.msk [vmem:[%s424 + $0x49] sm:$0xff] %vm378, %v352
      %432 = vst.msk [vmem:[%s424 + $0x51] sm:$0xff] %vm378, %v353
      %433 = vst.msk [vmem:[%s424 + $0x61] sm:$0xff] %vm378, %v354
      %434 = vst.msk [vmem:[%s424 + $0x69] sm:$0xff] %vm378, %v355
      %435 = vst.msk [vmem:[%s424 + $0x79] sm:$0xff] %vm378, %v356
      %436 = vst.msk [vmem:[%s424 + $0x81] sm:$0xff] %vm378, %v357
      %437 = vst.msk [vmem:[%s424 + $0x91] sm:$0xff] %vm378, %v358
      %438 = vst.msk [vmem:[%s424 + $0x99] sm:$0xff] %vm378, %v359
      %439 = vst.msk [vmem:[%s424 + $0xa9] sm:$0xff] %vm378, %v360
      %440 = vst.msk [vmem:[%s424 + $0xb1] sm:$0xff] %vm378, %v361
      %441 = vst.msk [vmem:[%s424 + $0xc1] sm:$0xff] %vm378, %v362
      %442 = vst.msk [vmem:[%s424 + $0xc9] sm:$0xff] %vm378, %v363
      %443 = vst.msk [vmem:[%s424 + $0xd9] sm:$0xff] %vm378, %v364
      %444 = vst.msk [vmem:[%s424 + $0xe1] sm:$0xff] %vm378, %v365
      %445 = vst.msk [vmem:[%s424 + $0xf1] sm:$0xff] %vm378, %v366
      %446 = vst.msk [vmem:[%s424 + $0xf9] sm:$0xff] %vm378, %v367
      %447 = vst.msk [vmem:[%s424 + $0x109] sm:$0xff] %vm378, %v368
      %448 = vst.msk [vmem:[%s424 + $0x111] sm:$0xff] %vm378, %v369
      %449 = vst.msk [vmem:[%s424 + $0x121] sm:$0xff] %vm378, %v370
      %450 = vst.msk [vmem:[%s424 + $0x129] sm:$0xff] %vm378, %v371
      %451 = vst.msk [vmem:[%s424 + $0x139] sm:$0xff] %vm378, %v372
      %452 = vst.msk [vmem:[%s424 + $0x141] sm:$0xff] %vm378, %v373
      %453 = vst.msk [vmem:[%s424 + $0x151] sm:$0xff] %vm378, %v374
      %454 = vst.msk [vmem:[%s424 + $0x159] sm:$0xff] %vm378, %v375
      %455 = vst.msk [vmem:[%s424 + $0x169] sm:$0xff] %vm378, %v376
      %456 = vst.msk [vmem:[%s424 + $0x171] sm:$0xff] %vm378, %v377
      %v457 = vld [vmem:[#allocation2] sm:$0xff]
      %v458 = vld [vmem:[#allocation2 + $0x8] sm:$0xff]
      %v459 = vld [vmem:[#allocation2 + $0x18] sm:$0xff]
      %v460 = vld [vmem:[#allocation2 + $0x20] sm:$0xff]
      %v461 = vld [vmem:[#allocation2 + $0x30] sm:$0xff]
      %v462 = vld [vmem:[#allocation2 + $0x38] sm:$0xff]
      %v463 = vld [vmem:[#allocation2 + $0x48] sm:$0xff]
      %v464 = vld [vmem:[#allocation2 + $0x50] sm:$0xff]
      %v465 = vld [vmem:[#allocation2 + $0x60] sm:$0xff]
      %v466 = vld [vmem:[#allocation2 + $0x68] sm:$0xff]
      %v467 = vld [vmem:[#allocation2 + $0x78] sm:$0xff]
      %v468 = vld [vmem:[#allocation2 + $0x80] sm:$0xff]
      %v469 = vld [vmem:[#allocation2 + $0x90] sm:$0xff]
      %v470 = vld [vmem:[#allocation2 + $0x98] sm:$0xff]
      %v471 = vld [vmem:[#allocation2 + $0xa8] sm:$0xff]
      %v472 = vld [vmem:[#allocation2 + $0xb0] sm:$0xff]
      %v473 = vld [vmem:[#allocation2 + $0xc0] sm:$0xff]
      %v474 = vld [vmem:[#allocation2 + $0xc8] sm:$0xff]
      %v475 = vld [vmem:[#allocation2 + $0xd8] sm:$0xff]
      %v476 = vld [vmem:[#allocation2 + $0xe0] sm:$0xff]
      %v477 = vld [vmem:[#allocation2 + $0xf0] sm:$0xff]
      %v478 = vld [vmem:[#allocation2 + $0xf8] sm:$0xff]
      %v479 = vld [vmem:[#allocation2 + $0x108] sm:$0xff]
      %v480 = vld [vmem:[#allocation2 + $0x110] sm:$0xff]
      %v481 = vld [vmem:[#allocation2 + $0x120] sm:$0xff]
      %v482 = vld [vmem:[#allocation2 + $0x128] sm:$0xff]
      %v483 = vld [vmem:[#allocation2 + $0x138] sm:$0xff]
      %v484 = vld [vmem:[#allocation2 + $0x140] sm:$0xff]
      %v485 = vld [vmem:[#allocation2 + $0x150] sm:$0xff]
      %v486 = vld [vmem:[#allocation2 + $0x158] sm:$0xff]
      %v487 = vld [vmem:[#allocation2 + $0x168] sm:$0xff]
      %v488 = vld [vmem:[#allocation2 + $0x170] sm:$0xff]
      %489 = vst.msk [vmem:[#allocation3] sm:$0xff] %vm378, %v457
      %490 = vst.msk [vmem:[#allocation3 + $0x8] sm:$0xff] %vm378, %v458
      %491 = vst.msk [vmem:[#allocation3 + $0x10] sm:$0xff] %vm378, %v459
      %492 = vst.msk [vmem:[#allocation3 + $0x18] sm:$0xff] %vm378, %v460
      %493 = vst.msk [vmem:[#allocation3 + $0x20] sm:$0xff] %vm378, %v461
      %494 = vst.msk [vmem:[#allocation3 + $0x28] sm:$0xff] %vm378, %v462
      %495 = vst.msk [vmem:[#allocation3 + $0x30] sm:$0xff] %vm378, %v463
      %496 = vst.msk [vmem:[#allocation3 + $0x38] sm:$0xff] %vm378, %v464
      %497 = vst.msk [vmem:[#allocation3 + $0x40] sm:$0xff] %vm378, %v465
      %498 = vst.msk [vmem:[#allocation3 + $0x48] sm:$0xff] %vm378, %v466
      %499 = vst.msk [vmem:[#allocation3 + $0x50] sm:$0xff] %vm378, %v467
      %500 = vst.msk [vmem:[#allocation3 + $0x58] sm:$0xff] %vm378, %v468
      %501 = vst.msk [vmem:[#allocation3 + $0x60] sm:$0xff] %vm378, %v469
      %502 = vst.msk [vmem:[#allocation3 + $0x68] sm:$0xff] %vm378, %v470
      %503 = vst.msk [vmem:[#allocation3 + $0x70] sm:$0xff] %vm378, %v471
      %504 = vst.msk [vmem:[#allocation3 + $0x78] sm:$0xff] %vm378, %v472
      %505 = vst.msk [vmem:[#allocation3 + $0x80] sm:$0xff] %vm378, %v473
      %506 = vst.msk [vmem:[#allocation3 + $0x88] sm:$0xff] %vm378, %v474
      %507 = vst.msk [vmem:[#allocation3 + $0x90] sm:$0xff] %vm378, %v475
      %508 = vst.msk [vmem:[#allocation3 + $0x98] sm:$0xff] %vm378, %v476
      %509 = vst.msk [vmem:[#allocation3 + $0xa0] sm:$0xff] %vm378, %v477
      %510 = vst.msk [vmem:[#allocation3 + $0xa8] sm:$0xff] %vm378, %v478
      %511 = vst.msk [vmem:[#allocation3 + $0xb0] sm:$0xff] %vm378, %v479
      %512 = vst.msk [vmem:[#allocation3 + $0xb8] sm:$0xff] %vm378, %v480
      %513 = vst.msk [vmem:[#allocation3 + $0xc0] sm:$0xff] %vm378, %v481
      %514 = vst.msk [vmem:[#allocation3 + $0xc8] sm:$0xff] %vm378, %v482
      %515 = vst.msk [vmem:[#allocation3 + $0xd0] sm:$0xff] %vm378, %v483
      %516 = vst.msk [vmem:[#allocation3 + $0xd8] sm:$0xff] %vm378, %v484
      %517 = vst.msk [vmem:[#allocation3 + $0xe0] sm:$0xff] %vm378, %v485
      %518 = vst.msk [vmem:[#allocation3 + $0xe8] sm:$0xff] %vm378, %v486
      %519 = vst.msk [vmem:[#allocation3 + $0xf0] sm:$0xff] %vm378, %v487
      %520 = vst.msk [vmem:[#allocation3 + $0xf8] sm:$0xff] %vm378, %v488
      %v521 = vld [vmem:[#allocation2 + $0x1] sm:$0xff]
      %v522 = vld [vmem:[#allocation2 + $0x9] sm:$0xff]
      %v523 = vld [vmem:[#allocation2 + $0x19] sm:$0xff]
      %v524 = vld [vmem:[#allocation2 + $0x21] sm:$0xff]
      %v525 = vld [vmem:[#allocation2 + $0x31] sm:$0xff]
      %v526 = vld [vmem:[#allocation2 + $0x39] sm:$0xff]
      %v527 = vld [vmem:[#allocation2 + $0x49] sm:$0xff]
      %v528 = vld [vmem:[#allocation2 + $0x51] sm:$0xff]
      %v529 = vld [vmem:[#allocation2 + $0x61] sm:$0xff]
      %v530 = vld [vmem:[#allocation2 + $0x69] sm:$0xff]
      %v531 = vld [vmem:[#allocation2 + $0x79] sm:$0xff]
      %v532 = vld [vmem:[#allocation2 + $0x81] sm:$0xff]
      %v533 = vld [vmem:[#allocation2 + $0x91] sm:$0xff]
      %v534 = vld [vmem:[#allocation2 + $0x99] sm:$0xff]
      %v535 = vld [vmem:[#allocation2 + $0xa9] sm:$0xff]
      %v536 = vld [vmem:[#allocation2 + $0xb1] sm:$0xff]
      %v537 = vld [vmem:[#allocation2 + $0xc1] sm:$0xff]
      %v538 = vld [vmem:[#allocation2 + $0xc9] sm:$0xff]
      %v539 = vld [vmem:[#allocation2 + $0xd9] sm:$0xff]
      %v540 = vld [vmem:[#allocation2 + $0xe1] sm:$0xff]
      %v541 = vld [vmem:[#allocation2 + $0xf1] sm:$0xff]
      %v542 = vld [vmem:[#allocation2 + $0xf9] sm:$0xff]
      %v543 = vld [vmem:[#allocation2 + $0x109] sm:$0xff]
      %v544 = vld [vmem:[#allocation2 + $0x111] sm:$0xff]
      %v545 = vld [vmem:[#allocation2 + $0x121] sm:$0xff]
      %v546 = vld [vmem:[#allocation2 + $0x129] sm:$0xff]
      %v547 = vld [vmem:[#allocation2 + $0x139] sm:$0xff]
      %v548 = vld [vmem:[#allocation2 + $0x141] sm:$0xff]
      %v549 = vld [vmem:[#allocation2 + $0x151] sm:$0xff]
      %v550 = vld [vmem:[#allocation2 + $0x159] sm:$0xff]
      %v551 = vld [vmem:[#allocation2 + $0x169] sm:$0xff]
      %v552 = vld [vmem:[#allocation2 + $0x171] sm:$0xff]
      %585 = vrot.lane.b32.xlu0 %v521, 8
      %v586 = vpop.permute.xlu0 %585
      %587 = vrot.lane.b32.xlu0 %v522, 8
      %v588 = vpop.permute.xlu0 %587
      %589 = vrot.lane.b32.xlu0 %v523, 8
      %v590 = vpop.permute.xlu0 %589
      %591 = vrot.lane.b32.xlu0 %v524, 8
      %v592 = vpop.permute.xlu0 %591
      %593 = vrot.lane.b32.xlu0 %v525, 8
      %v594 = vpop.permute.xlu0 %593
      %595 = vrot.lane.b32.xlu0 %v526, 8
      %v596 = vpop.permute.xlu0 %595
      %597 = vrot.lane.b32.xlu0 %v527, 8
      %v598 = vpop.permute.xlu0 %597
      %599 = vrot.lane.b32.xlu0 %v528, 8
      %v600 = vpop.permute.xlu0 %599
      %601 = vrot.lane.b32.xlu0 %v529, 8
      %v602 = vpop.permute.xlu0 %601
      %603 = vrot.lane.b32.xlu0 %v530, 8
      %v604 = vpop.permute.xlu0 %603
      %605 = vrot.lane.b32.xlu0 %v531, 8
      %v606 = vpop.permute.xlu0 %605
      %607 = vrot.lane.b32.xlu0 %v532, 8
      %v608 = vpop.permute.xlu0 %607
      %609 = vrot.lane.b32.xlu0 %v533, 8
      %v610 = vpop.permute.xlu0 %609
      %611 = vrot.lane.b32.xlu0 %v534, 8
      %v612 = vpop.permute.xlu0 %611
      %613 = vrot.lane.b32.xlu0 %v535, 8
      %v614 = vpop.permute.xlu0 %613
      %615 = vrot.lane.b32.xlu0 %v536, 8
      %v616 = vpop.permute.xlu0 %615
      %617 = vrot.lane.b32.xlu0 %v537, 8
      %v618 = vpop.permute.xlu0 %617
      %619 = vrot.lane.b32.xlu0 %v538, 8
      %v620 = vpop.permute.xlu0 %619
      %621 = vrot.lane.b32.xlu0 %v539, 8
      %v622 = vpop.permute.xlu0 %621
      %623 = vrot.lane.b32.xlu0 %v540, 8
      %v624 = vpop.permute.xlu0 %623
      %625 = vrot.lane.b32.xlu0 %v541, 8
      %v626 = vpop.permute.xlu0 %625
      %627 = vrot.lane.b32.xlu0 %v542, 8
      %v628 = vpop.permute.xlu0 %627
      %629 = vrot.lane.b32.xlu0 %v543, 8
      %v630 = vpop.permute.xlu0 %629
      %631 = vrot.lane.b32.xlu0 %v544, 8
      %v632 = vpop.permute.xlu0 %631
      %633 = vrot.lane.b32.xlu0 %v545, 8
      %v634 = vpop.permute.xlu0 %633
      %635 = vrot.lane.b32.xlu0 %v546, 8
      %v636 = vpop.permute.xlu0 %635
      %637 = vrot.lane.b32.xlu0 %v547, 8
      %v638 = vpop.permute.xlu0 %637
      %639 = vrot.lane.b32.xlu0 %v548, 8
      %v640 = vpop.permute.xlu0 %639
      %641 = vrot.lane.b32.xlu0 %v549, 8
      %v642 = vpop.permute.xlu0 %641
      %643 = vrot.lane.b32.xlu0 %v550, 8
      %v644 = vpop.permute.xlu0 %643
      %645 = vrot.lane.b32.xlu0 %v551, 8
      %v646 = vpop.permute.xlu0 %645
      %647 = vrot.lane.b32.xlu0 %v552, 8
      %v648 = vpop.permute.xlu0 %647
      %vm681 = vcmask 130112
      %682 = vst.msk [vmem:[#allocation3] sm:$0xff] %vm681, %v586
      %683 = vst.msk [vmem:[#allocation3 + $0x8] sm:$0xff] %vm681, %v588
      %684 = vst.msk [vmem:[#allocation3 + $0x10] sm:$0xff] %vm681, %v590
      %685 = vst.msk [vmem:[#allocation3 + $0x18] sm:$0xff] %vm681, %v592
      %686 = vst.msk [vmem:[#allocation3 + $0x20] sm:$0xff] %vm681, %v594
      %687 = vst.msk [vmem:[#allocation3 + $0x28] sm:$0xff] %vm681, %v596
      %688 = vst.msk [vmem:[#allocation3 + $0x30] sm:$0xff] %vm681, %v598
      %689 = vst.msk [vmem:[#allocation3 + $0x38] sm:$0xff] %vm681, %v600
      %690 = vst.msk [vmem:[#allocation3 + $0x40] sm:$0xff] %vm681, %v602
      %691 = vst.msk [vmem:[#allocation3 + $0x48] sm:$0xff] %vm681, %v604
      %692 = vst.msk [vmem:[#allocation3 + $0x50] sm:$0xff] %vm681, %v606
      %693 = vst.msk [vmem:[#allocation3 + $0x58] sm:$0xff] %vm681, %v608
      %694 = vst.msk [vmem:[#allocation3 + $0x60] sm:$0xff] %vm681, %v610
      %695 = vst.msk [vmem:[#allocation3 + $0x68] sm:$0xff] %vm681, %v612
      %696 = vst.msk [vmem:[#allocation3 + $0x70] sm:$0xff] %vm681, %v614
      %697 = vst.msk [vmem:[#allocation3 + $0x78] sm:$0xff] %vm681, %v616
      %698 = vst.msk [vmem:[#allocation3 + $0x80] sm:$0xff] %vm681, %v618
      %699 = vst.msk [vmem:[#allocation3 + $0x88] sm:$0xff] %vm681, %v620
      %700 = vst.msk [vmem:[#allocation3 + $0x90] sm:$0xff] %vm681, %v622
      %701 = vst.msk [vmem:[#allocation3 + $0x98] sm:$0xff] %vm681, %v624
      %702 = vst.msk [vmem:[#allocation3 + $0xa0] sm:$0xff] %vm681, %v626
      %703 = vst.msk [vmem:[#allocation3 + $0xa8] sm:$0xff] %vm681, %v628
      %704 = vst.msk [vmem:[#allocation3 + $0xb0] sm:$0xff] %vm681, %v630
      %705 = vst.msk [vmem:[#allocation3 + $0xb8] sm:$0xff] %vm681, %v632
      %706 = vst.msk [vmem:[#allocation3 + $0xc0] sm:$0xff] %vm681, %v634
      %707 = vst.msk [vmem:[#allocation3 + $0xc8] sm:$0xff] %vm681, %v636
      %708 = vst.msk [vmem:[#allocation3 + $0xd0] sm:$0xff] %vm681, %v638
      %709 = vst.msk [vmem:[#allocation3 + $0xd8] sm:$0xff] %vm681, %v640
      %710 = vst.msk [vmem:[#allocation3 + $0xe0] sm:$0xff] %vm681, %v642
      %711 = vst.msk [vmem:[#allocation3 + $0xe8] sm:$0xff] %vm681, %v644
      %712 = vst.msk [vmem:[#allocation3 + $0xf0] sm:$0xff] %vm681, %v646
      %713 = vst.msk [vmem:[#allocation3 + $0xf8] sm:$0xff] %vm681, %v648
      %v714 = vld [vmem:[#allocation2 + $0x2] sm:$0xff]
      %v715 = vld [vmem:[#allocation2 + $0xa] sm:$0xff]
      %v716 = vld [vmem:[#allocation2 + $0x1a] sm:$0xff]
      %v717 = vld [vmem:[#allocation2 + $0x22] sm:$0xff]
      %v718 = vld [vmem:[#allocation2 + $0x32] sm:$0xff]
      %v719 = vld [vmem:[#allocation2 + $0x3a] sm:$0xff]
      %v720 = vld [vmem:[#allocation2 + $0x4a] sm:$0xff]
      %v721 = vld [vmem:[#allocation2 + $0x52] sm:$0xff]
      %v722 = vld [vmem:[#allocation2 + $0x62] sm:$0xff]
      %v723 = vld [vmem:[#allocation2 + $0x6a] sm:$0xff]
      %v724 = vld [vmem:[#allocation2 + $0x7a] sm:$0xff]
      %v725 = vld [vmem:[#allocation2 + $0x82] sm:$0xff]
      %v726 = vld [vmem:[#allocation2 + $0x92] sm:$0xff]
      %v727 = vld [vmem:[#allocation2 + $0x9a] sm:$0xff]
      %v728 = vld [vmem:[#allocation2 + $0xaa] sm:$0xff]
      %v729 = vld [vmem:[#allocation2 + $0xb2] sm:$0xff]
      %v730 = vld [vmem:[#allocation2 + $0xc2] sm:$0xff]
      %v731 = vld [vmem:[#allocation2 + $0xca] sm:$0xff]
      %v732 = vld [vmem:[#allocation2 + $0xda] sm:$0xff]
      %v733 = vld [vmem:[#allocation2 + $0xe2] sm:$0xff]
      %v734 = vld [vmem:[#allocation2 + $0xf2] sm:$0xff]
      %v735 = vld [vmem:[#allocation2 + $0xfa] sm:$0xff]
      %v736 = vld [vmem:[#allocation2 + $0x10a] sm:$0xff]
      %v737 = vld [vmem:[#allocation2 + $0x112] sm:$0xff]
      %v738 = vld [vmem:[#allocation2 + $0x122] sm:$0xff]
      %v739 = vld [vmem:[#allocation2 + $0x12a] sm:$0xff]
      %v740 = vld [vmem:[#allocation2 + $0x13a] sm:$0xff]
      %v741 = vld [vmem:[#allocation2 + $0x142] sm:$0xff]
      %v742 = vld [vmem:[#allocation2 + $0x152] sm:$0xff]
      %v743 = vld [vmem:[#allocation2 + $0x15a] sm:$0xff]
      %v744 = vld [vmem:[#allocation2 + $0x16a] sm:$0xff]
      %v745 = vld [vmem:[#allocation2 + $0x172] sm:$0xff]
      %778 = vrot.lane.b32.xlu0 %v714, 16
      %v779 = vpop.permute.xlu0 %778
      %780 = vrot.lane.b32.xlu0 %v715, 16
      %v781 = vpop.permute.xlu0 %780
      %782 = vrot.lane.b32.xlu0 %v716, 16
      %v783 = vpop.permute.xlu0 %782
      %784 = vrot.lane.b32.xlu0 %v717, 16
      %v785 = vpop.permute.xlu0 %784
      %786 = vrot.lane.b32.xlu0 %v718, 16
      %v787 = vpop.permute.xlu0 %786
      %788 = vrot.lane.b32.xlu0 %v719, 16
      %v789 = vpop.permute.xlu0 %788
      %790 = vrot.lane.b32.xlu0 %v720, 16
      %v791 = vpop.permute.xlu0 %790
      %792 = vrot.lane.b32.xlu0 %v721, 16
      %v793 = vpop.permute.xlu0 %792
      %794 = vrot.lane.b32.xlu0 %v722, 16
      %v795 = vpop.permute.xlu0 %794
      %796 = vrot.lane.b32.xlu0 %v723, 16
      %v797 = vpop.permute.xlu0 %796
      %798 = vrot.lane.b32.xlu0 %v724, 16
      %v799 = vpop.permute.xlu0 %798
      %800 = vrot.lane.b32.xlu0 %v725, 16
      %v801 = vpop.permute.xlu0 %800
      %802 = vrot.lane.b32.xlu0 %v726, 16
      %v803 = vpop.permute.xlu0 %802
      %804 = vrot.lane.b32.xlu0 %v727, 16
      %v805 = vpop.permute.xlu0 %804
      %806 = vrot.lane.b32.xlu0 %v728, 16
      %v807 = vpop.permute.xlu0 %806
      %808 = vrot.lane.b32.xlu0 %v729, 16
      %v809 = vpop.permute.xlu0 %808
      %810 = vrot.lane.b32.xlu0 %v730, 16
      %v811 = vpop.permute.xlu0 %810
      %812 = vrot.lane.b32.xlu0 %v731, 16
      %v813 = vpop.permute.xlu0 %812
      %814 = vrot.lane.b32.xlu0 %v732, 16
      %v815 = vpop.permute.xlu0 %814
      %816 = vrot.lane.b32.xlu0 %v733, 16
      %v817 = vpop.permute.xlu0 %816
      %818 = vrot.lane.b32.xlu0 %v734, 16
      %v819 = vpop.permute.xlu0 %818
      %820 = vrot.lane.b32.xlu0 %v735, 16
      %v821 = vpop.permute.xlu0 %820
      %822 = vrot.lane.b32.xlu0 %v736, 16
      %v823 = vpop.permute.xlu0 %822
      %824 = vrot.lane.b32.xlu0 %v737, 16
      %v825 = vpop.permute.xlu0 %824
      %826 = vrot.lane.b32.xlu0 %v738, 16
      %v827 = vpop.permute.xlu0 %826
      %828 = vrot.lane.b32.xlu0 %v739, 16
      %v829 = vpop.permute.xlu0 %828
      %830 = vrot.lane.b32.xlu0 %v740, 16
      %v831 = vpop.permute.xlu0 %830
      %832 = vrot.lane.b32.xlu0 %v741, 16
      %v833 = vpop.permute.xlu0 %832
      %834 = vrot.lane.b32.xlu0 %v742, 16
      %v835 = vpop.permute.xlu0 %834
      %836 = vrot.lane.b32.xlu0 %v743, 16
      %v837 = vpop.permute.xlu0 %836
      %838 = vrot.lane.b32.xlu0 %v744, 16
      %v839 = vpop.permute.xlu0 %838
      %840 = vrot.lane.b32.xlu0 %v745, 16
      %v841 = vpop.permute.xlu0 %840
      %vm874 = vcmask 195712
      %875 = vst.msk [vmem:[#allocation3] sm:$0xff] %vm874, %v779
      %876 = vst.msk [vmem:[#allocation3 + $0x8] sm:$0xff] %vm874, %v781
      %877 = vst.msk [vmem:[#allocation3 + $0x10] sm:$0xff] %vm874, %v783
      %878 = vst.msk [vmem:[#allocation3 + $0x18] sm:$0xff] %vm874, %v785
      %879 = vst.msk [vmem:[#allocation3 + $0x20] sm:$0xff] %vm874, %v787
      %880 = vst.msk [vmem:[#allocation3 + $0x28] sm:$0xff] %vm874, %v789
      %881 = vst.msk [vmem:[#allocation3 + $0x30] sm:$0xff] %vm874, %v791
      %882 = vst.msk [vmem:[#allocation3 + $0x38] sm:$0xff] %vm874, %v793
      %883 = vst.msk [vmem:[#allocation3 + $0x40] sm:$0xff] %vm874, %v795
      %884 = vst.msk [vmem:[#allocation3 + $0x48] sm:$0xff] %vm874, %v797
      %885 = vst.msk [vmem:[#allocation3 + $0x50] sm:$0xff] %vm874, %v799
      %886 = vst.msk [vmem:[#allocation3 + $0x58] sm:$0xff] %vm874, %v801
      %887 = vst.msk [vmem:[#allocation3 + $0x60] sm:$0xff] %vm874, %v803
      %888 = vst.msk [vmem:[#allocation3 + $0x68] sm:$0xff] %vm874, %v805
      %889 = vst.msk [vmem:[#allocation3 + $0x70] sm:$0xff] %vm874, %v807
      %890 = vst.msk [vmem:[#allocation3 + $0x78] sm:$0xff] %vm874, %v809
      %891 = vst.msk [vmem:[#allocation3 + $0x80] sm:$0xff] %vm874, %v811
      %892 = vst.msk [vmem:[#allocation3 + $0x88] sm:$0xff] %vm874, %v813
      %893 = vst.msk [vmem:[#allocation3 + $0x90] sm:$0xff] %vm874, %v815
      %894 = vst.msk [vmem:[#allocation3 + $0x98] sm:$0xff] %vm874, %v817
      %895 = vst.msk [vmem:[#allocation3 + $0xa0] sm:$0xff] %vm874, %v819
      %896 = vst.msk [vmem:[#allocation3 + $0xa8] sm:$0xff] %vm874, %v821
      %897 = vst.msk [vmem:[#allocation3 + $0xb0] sm:$0xff] %vm874, %v823
      %898 = vst.msk [vmem:[#allocation3 + $0xb8] sm:$0xff] %vm874, %v825
      %899 = vst.msk [vmem:[#allocation3 + $0xc0] sm:$0xff] %vm874, %v827
      %900 = vst.msk [vmem:[#allocation3 + $0xc8] sm:$0xff] %vm874, %v829
      %901 = vst.msk [vmem:[#allocation3 + $0xd0] sm:$0xff] %vm874, %v831
      %902 = vst.msk [vmem:[#allocation3 + $0xd8] sm:$0xff] %vm874, %v833
      %903 = vst.msk [vmem:[#allocation3 + $0xe0] sm:$0xff] %vm874, %v835
      %904 = vst.msk [vmem:[#allocation3 + $0xe8] sm:$0xff] %vm874, %v837
      %905 = vst.msk [vmem:[#allocation3 + $0xf0] sm:$0xff] %vm874, %v839
      %906 = vst.msk [vmem:[#allocation3 + $0xf8] sm:$0xff] %vm874, %v841
      %v907 = vld [vmem:[%s424] sm:$0xff]
      %v908 = vld [vmem:[%s424 + $0x8] sm:$0xff]
      %v909 = vld [vmem:[%s424 + $0x18] sm:$0xff]
      %v910 = vld [vmem:[%s424 + $0x20] sm:$0xff]
      %v911 = vld [vmem:[%s424 + $0x30] sm:$0xff]
      %v912 = vld [vmem:[%s424 + $0x38] sm:$0xff]
      %v913 = vld [vmem:[%s424 + $0x48] sm:$0xff]
      %v914 = vld [vmem:[%s424 + $0x50] sm:$0xff]
      %v915 = vld [vmem:[%s424 + $0x60] sm:$0xff]
      %v916 = vld [vmem:[%s424 + $0x68] sm:$0xff]
      %v917 = vld [vmem:[%s424 + $0x78] sm:$0xff]
      %v918 = vld [vmem:[%s424 + $0x80] sm:$0xff]
      %v919 = vld [vmem:[%s424 + $0x90] sm:$0xff]
      %v920 = vld [vmem:[%s424 + $0x98] sm:$0xff]
      %v921 = vld [vmem:[%s424 + $0xa8] sm:$0xff]
      %v922 = vld [vmem:[%s424 + $0xb0] sm:$0xff]
      %v923 = vld [vmem:[%s424 + $0xc0] sm:$0xff]
      %v924 = vld [vmem:[%s424 + $0xc8] sm:$0xff]
      %v925 = vld [vmem:[%s424 + $0xd8] sm:$0xff]
      %v926 = vld [vmem:[%s424 + $0xe0] sm:$0xff]
      %v927 = vld [vmem:[%s424 + $0xf0] sm:$0xff]
      %v928 = vld [vmem:[%s424 + $0xf8] sm:$0xff]
      %v929 = vld [vmem:[%s424 + $0x108] sm:$0xff]
      %v930 = vld [vmem:[%s424 + $0x110] sm:$0xff]
      %v931 = vld [vmem:[%s424 + $0x120] sm:$0xff]
      %v932 = vld [vmem:[%s424 + $0x128] sm:$0xff]
      %v933 = vld [vmem:[%s424 + $0x138] sm:$0xff]
      %v934 = vld [vmem:[%s424 + $0x140] sm:$0xff]
      %v935 = vld [vmem:[%s424 + $0x150] sm:$0xff]
      %v936 = vld [vmem:[%s424 + $0x158] sm:$0xff]
      %v937 = vld [vmem:[%s424 + $0x168] sm:$0xff]
      %v938 = vld [vmem:[%s424 + $0x170] sm:$0xff]
      %971 = vrot.lane.b32.xlu0 %v907, 24
      %v972 = vpop.permute.xlu0 %971
      %973 = vrot.lane.b32.xlu0 %v908, 24
      %v974 = vpop.permute.xlu0 %973
      %975 = vrot.lane.b32.xlu0 %v909, 24
      %v976 = vpop.permute.xlu0 %975
      %977 = vrot.lane.b32.xlu0 %v910, 24
      %v978 = vpop.permute.xlu0 %977
      %979 = vrot.lane.b32.xlu0 %v911, 24
      %v980 = vpop.permute.xlu0 %979
      %981 = vrot.lane.b32.xlu0 %v912, 24
      %v982 = vpop.permute.xlu0 %981
      %983 = vrot.lane.b32.xlu0 %v913, 24
      %v984 = vpop.permute.xlu0 %983
      %985 = vrot.lane.b32.xlu0 %v914, 24
      %v986 = vpop.permute.xlu0 %985
      %987 = vrot.lane.b32.xlu0 %v915, 24
      %v988 = vpop.permute.xlu0 %987
      %989 = vrot.lane.b32.xlu0 %v916, 24
      %v990 = vpop.permute.xlu0 %989
      %991 = vrot.lane.b32.xlu0 %v917, 24
      %v992 = vpop.permute.xlu0 %991
      %993 = vrot.lane.b32.xlu0 %v918, 24
      %v994 = vpop.permute.xlu0 %993
      %995 = vrot.lane.b32.xlu0 %v919, 24
      %v996 = vpop.permute.xlu0 %995
      %997 = vrot.lane.b32.xlu0 %v920, 24
      %v998 = vpop.permute.xlu0 %997
      %999 = vrot.lane.b32.xlu0 %v921, 24
      %v1000 = vpop.permute.xlu0 %999
      %1001 = vrot.lane.b32.xlu0 %v922, 24
      %v1002 = vpop.permute.xlu0 %1001
      %1003 = vrot.lane.b32.xlu0 %v923, 24
      %v1004 = vpop.permute.xlu0 %1003
      %1005 = vrot.lane.b32.xlu0 %v924, 24
      %v1006 = vpop.permute.xlu0 %1005
      %1007 = vrot.lane.b32.xlu0 %v925, 24
      %v1008 = vpop.permute.xlu0 %1007
      %1009 = vrot.lane.b32.xlu0 %v926, 24
      %v1010 = vpop.permute.xlu0 %1009
      %1011 = vrot.lane.b32.xlu0 %v927, 24
      %v1012 = vpop.permute.xlu0 %1011
      %1013 = vrot.lane.b32.xlu0 %v928, 24
      %v1014 = vpop.permute.xlu0 %1013
      %1015 = vrot.lane.b32.xlu0 %v929, 24
      %v1016 = vpop.permute.xlu0 %1015
      %1017 = vrot.lane.b32.xlu0 %v930, 24
      %v1018 = vpop.permute.xlu0 %1017
      %1019 = vrot.lane.b32.xlu0 %v931, 24
      %v1020 = vpop.permute.xlu0 %1019
      %1021 = vrot.lane.b32.xlu0 %v932, 24
      %v1022 = vpop.permute.xlu0 %1021
      %1023 = vrot.lane.b32.xlu0 %v933, 24
      %v1024 = vpop.permute.xlu0 %1023
      %1025 = vrot.lane.b32.xlu0 %v934, 24
      %v1026 = vpop.permute.xlu0 %1025
      %1027 = vrot.lane.b32.xlu0 %v935, 24
      %v1028 = vpop.permute.xlu0 %1027
      %1029 = vrot.lane.b32.xlu0 %v936, 24
      %v1030 = vpop.permute.xlu0 %1029
      %1031 = vrot.lane.b32.xlu0 %v937, 24
      %v1032 = vpop.permute.xlu0 %1031
      %1033 = vrot.lane.b32.xlu0 %v938, 24
      %v1034 = vpop.permute.xlu0 %1033
      %vm1067 = vcmask 261312
      %1068 = vst.msk [vmem:[#allocation3] sm:$0xff] %vm1067, %v972
      %1069 = vst.msk [vmem:[#allocation3 + $0x8] sm:$0xff] %vm1067, %v974
      %1070 = vst.msk [vmem:[#allocation3 + $0x10] sm:$0xff] %vm1067, %v976
      %1071 = vst.msk [vmem:[#allocation3 + $0x18] sm:$0xff] %vm1067, %v978
      %1072 = vst.msk [vmem:[#allocation3 + $0x20] sm:$0xff] %vm1067, %v980
      %1073 = vst.msk [vmem:[#allocation3 + $0x28] sm:$0xff] %vm1067, %v982
      %1074 = vst.msk [vmem:[#allocation3 + $0x30] sm:$0xff] %vm1067, %v984
      %1075 = vst.msk [vmem:[#allocation3 + $0x38] sm:$0xff] %vm1067, %v986
      %1076 = vst.msk [vmem:[#allocation3 + $0x40] sm:$0xff] %vm1067, %v988
      %1077 = vst.msk [vmem:[#allocation3 + $0x48] sm:$0xff] %vm1067, %v990
      %1078 = vst.msk [vmem:[#allocation3 + $0x50] sm:$0xff] %vm1067, %v992
      %1079 = vst.msk [vmem:[#allocation3 + $0x58] sm:$0xff] %vm1067, %v994
      %1080 = vst.msk [vmem:[#allocation3 + $0x60] sm:$0xff] %vm1067, %v996
      %1081 = vst.msk [vmem:[#allocation3 + $0x68] sm:$0xff] %vm1067, %v998
      %1082 = vst.msk [vmem:[#allocation3 + $0x70] sm:$0xff] %vm1067, %v1000
      %1083 = vst.msk [vmem:[#allocation3 + $0x78] sm:$0xff] %vm1067, %v1002
      %1084 = vst.msk [vmem:[#allocation3 + $0x80] sm:$0xff] %vm1067, %v1004
      %1085 = vst.msk [vmem:[#allocation3 + $0x88] sm:$0xff] %vm1067, %v1006
      %1086 = vst.msk [vmem:[#allocation3 + $0x90] sm:$0xff] %vm1067, %v1008
      %1087 = vst.msk [vmem:[#allocation3 + $0x98] sm:$0xff] %vm1067, %v1010
      %1088 = vst.msk [vmem:[#allocation3 + $0xa0] sm:$0xff] %vm1067, %v1012
      %1089 = vst.msk [vmem:[#allocation3 + $0xa8] sm:$0xff] %vm1067, %v1014
      %1090 = vst.msk [vmem:[#allocation3 + $0xb0] sm:$0xff] %vm1067, %v1016
      %1091 = vst.msk [vmem:[#allocation3 + $0xb8] sm:$0xff] %vm1067, %v1018
      %1092 = vst.msk [vmem:[#allocation3 + $0xc0] sm:$0xff] %vm1067, %v1020
      %1093 = vst.msk [vmem:[#allocation3 + $0xc8] sm:$0xff] %vm1067, %v1022
      %1094 = vst.msk [vmem:[#allocation3 + $0xd0] sm:$0xff] %vm1067, %v1024
      %1095 = vst.msk [vmem:[#allocation3 + $0xd8] sm:$0xff] %vm1067, %v1026
      %1096 = vst.msk [vmem:[#allocation3 + $0xe0] sm:$0xff] %vm1067, %v1028
      %1097 = vst.msk [vmem:[#allocation3 + $0xe8] sm:$0xff] %vm1067, %v1030
      %1098 = vst.msk [vmem:[#allocation3 + $0xf0] sm:$0xff] %vm1067, %v1032
      %1099 = vst.msk [vmem:[#allocation3 + $0xf8] sm:$0xff] %vm1067, %v1034
      %v1100 = vld [vmem:[%s424 + $0x1] sm:$0xff]
      %v1101 = vld [vmem:[%s424 + $0x9] sm:$0xff]
      %v1102 = vld [vmem:[%s424 + $0x19] sm:$0xff]
      %v1103 = vld [vmem:[%s424 + $0x21] sm:$0xff]
      %v1104 = vld [vmem:[%s424 + $0x31] sm:$0xff]
      %v1105 = vld [vmem:[%s424 + $0x39] sm:$0xff]
      %v1106 = vld [vmem:[%s424 + $0x49] sm:$0xff]
      %v1107 = vld [vmem:[%s424 + $0x51] sm:$0xff]
      %v1108 = vld [vmem:[%s424 + $0x61] sm:$0xff]
      %v1109 = vld [vmem:[%s424 + $0x69] sm:$0xff]
      %v1110 = vld [vmem:[%s424 + $0x79] sm:$0xff]
      %v1111 = vld [vmem:[%s424 + $0x81] sm:$0xff]
      %v1112 = vld [vmem:[%s424 + $0x91] sm:$0xff]
      %v1113 = vld [vmem:[%s424 + $0x99] sm:$0xff]
      %v1114 = vld [vmem:[%s424 + $0xa9] sm:$0xff]
      %v1115 = vld [vmem:[%s424 + $0xb1] sm:$0xff]
      %v1116 = vld [vmem:[%s424 + $0xc1] sm:$0xff]
      %v1117 = vld [vmem:[%s424 + $0xc9] sm:$0xff]
      %v1118 = vld [vmem:[%s424 + $0xd9] sm:$0xff]
      %v1119 = vld [vmem:[%s424 + $0xe1] sm:$0xff]
      %v1120 = vld [vmem:[%s424 + $0xf1] sm:$0xff]
      %v1121 = vld [vmem:[%s424 + $0xf9] sm:$0xff]
      %v1122 = vld [vmem:[%s424 + $0x109] sm:$0xff]
      %v1123 = vld [vmem:[%s424 + $0x111] sm:$0xff]
      %v1124 = vld [vmem:[%s424 + $0x121] sm:$0xff]
      %v1125 = vld [vmem:[%s424 + $0x129] sm:$0xff]
      %v1126 = vld [vmem:[%s424 + $0x139] sm:$0xff]
      %v1127 = vld [vmem:[%s424 + $0x141] sm:$0xff]
      %v1128 = vld [vmem:[%s424 + $0x151] sm:$0xff]
      %v1129 = vld [vmem:[%s424 + $0x159] sm:$0xff]
      %v1130 = vld [vmem:[%s424 + $0x169] sm:$0xff]
      %v1131 = vld [vmem:[%s424 + $0x171] sm:$0xff]
      %1164 = vrot.lane.b32.xlu0 %v1100, 32
      %v1165 = vpop.permute.xlu0 %1164
      %1166 = vrot.lane.b32.xlu0 %v1101, 32
      %v1167 = vpop.permute.xlu0 %1166
      %1168 = vrot.lane.b32.xlu0 %v1102, 32
      %v1169 = vpop.permute.xlu0 %1168
      %1170 = vrot.lane.b32.xlu0 %v1103, 32
      %v1171 = vpop.permute.xlu0 %1170
      %1172 = vrot.lane.b32.xlu0 %v1104, 32
      %v1173 = vpop.permute.xlu0 %1172
      %1174 = vrot.lane.b32.xlu0 %v1105, 32
      %v1175 = vpop.permute.xlu0 %1174
      %1176 = vrot.lane.b32.xlu0 %v1106, 32
      %v1177 = vpop.permute.xlu0 %1176
      %1178 = vrot.lane.b32.xlu0 %v1107, 32
      %v1179 = vpop.permute.xlu0 %1178
      %1180 = vrot.lane.b32.xlu0 %v1108, 32
      %v1181 = vpop.permute.xlu0 %1180
      %1182 = vrot.lane.b32.xlu0 %v1109, 32
      %v1183 = vpop.permute.xlu0 %1182
      %1184 = vrot.lane.b32.xlu0 %v1110, 32
      %v1185 = vpop.permute.xlu0 %1184
      %1186 = vrot.lane.b32.xlu0 %v1111, 32
      %v1187 = vpop.permute.xlu0 %1186
      %1188 = vrot.lane.b32.xlu0 %v1112, 32
      %v1189 = vpop.permute.xlu0 %1188
      %1190 = vrot.lane.b32.xlu0 %v1113, 32
      %v1191 = vpop.permute.xlu0 %1190
      %1192 = vrot.lane.b32.xlu0 %v1114, 32
      %v1193 = vpop.permute.xlu0 %1192
      %1194 = vrot.lane.b32.xlu0 %v1115, 32
      %v1195 = vpop.permute.xlu0 %1194
      %1196 = vrot.lane.b32.xlu0 %v1116, 32
      %v1197 = vpop.permute.xlu0 %1196
      %1198 = vrot.lane.b32.xlu0 %v1117, 32
      %v1199 = vpop.permute.xlu0 %1198
      %1200 = vrot.lane.b32.xlu0 %v1118, 32
      %v1201 = vpop.permute.xlu0 %1200
      %1202 = vrot.lane.b32.xlu0 %v1119, 32
      %v1203 = vpop.permute.xlu0 %1202
      %1204 = vrot.lane.b32.xlu0 %v1120, 32
      %v1205 = vpop.permute.xlu0 %1204
      %1206 = vrot.lane.b32.xlu0 %v1121, 32
      %v1207 = vpop.permute.xlu0 %1206
      %1208 = vrot.lane.b32.xlu0 %v1122, 32
      %v1209 = vpop.permute.xlu0 %1208
      %1210 = vrot.lane.b32.xlu0 %v1123, 32
      %v1211 = vpop.permute.xlu0 %1210
      %1212 = vrot.lane.b32.xlu0 %v1124, 32
      %v1213 = vpop.permute.xlu0 %1212
      %1214 = vrot.lane.b32.xlu0 %v1125, 32
      %v1215 = vpop.permute.xlu0 %1214
      %1216 = vrot.lane.b32.xlu0 %v1126, 32
      %v1217 = vpop.permute.xlu0 %1216
      %1218 = vrot.lane.b32.xlu0 %v1127, 32
      %v1219 = vpop.permute.xlu0 %1218
      %1220 = vrot.lane.b32.xlu0 %v1128, 32
      %v1221 = vpop.permute.xlu0 %1220
      %1222 = vrot.lane.b32.xlu0 %v1129, 32
      %v1223 = vpop.permute.xlu0 %1222
      %1224 = vrot.lane.b32.xlu0 %v1130, 32
      %v1225 = vpop.permute.xlu0 %1224
      %1226 = vrot.lane.b32.xlu0 %v1131, 32
      %v1227 = vpop.permute.xlu0 %1226
      %vm1260 = vcmask 326912
      %1261 = vst.msk [vmem:[#allocation3] sm:$0xff] %vm1260, %v1165
      %1262 = vst.msk [vmem:[#allocation3 + $0x8] sm:$0xff] %vm1260, %v1167
      %1263 = vst.msk [vmem:[#allocation3 + $0x10] sm:$0xff] %vm1260, %v1169
      %1264 = vst.msk [vmem:[#allocation3 + $0x18] sm:$0xff] %vm1260, %v1171
      %1265 = vst.msk [vmem:[#allocation3 + $0x20] sm:$0xff] %vm1260, %v1173
      %1266 = vst.msk [vmem:[#allocation3 + $0x28] sm:$0xff] %vm1260, %v1175
      %1267 = vst.msk [vmem:[#allocation3 + $0x30] sm:$0xff] %vm1260, %v1177
      %1268 = vst.msk [vmem:[#allocation3 + $0x38] sm:$0xff] %vm1260, %v1179
      %1269 = vst.msk [vmem:[#allocation3 + $0x40] sm:$0xff] %vm1260, %v1181
      %1270 = vst.msk [vmem:[#allocation3 + $0x48] sm:$0xff] %vm1260, %v1183
      %1271 = vst.msk [vmem:[#allocation3 + $0x50] sm:$0xff] %vm1260, %v1185
      %1272 = vst.msk [vmem:[#allocation3 + $0x58] sm:$0xff] %vm1260, %v1187
      %1273 = vst.msk [vmem:[#allocation3 + $0x60] sm:$0xff] %vm1260, %v1189
      %1274 = vst.msk [vmem:[#allocation3 + $0x68] sm:$0xff] %vm1260, %v1191
      %1275 = vst.msk [vmem:[#allocation3 + $0x70] sm:$0xff] %vm1260, %v1193
      %1276 = vst.msk [vmem:[#allocation3 + $0x78] sm:$0xff] %vm1260, %v1195
      %1277 = vst.msk [vmem:[#allocation3 + $0x80] sm:$0xff] %vm1260, %v1197
      %1278 = vst.msk [vmem:[#allocation3 + $0x88] sm:$0xff] %vm1260, %v1199
      %1279 = vst.msk [vmem:[#allocation3 + $0x90] sm:$0xff] %vm1260, %v1201
      %1280 = vst.msk [vmem:[#allocation3 + $0x98] sm:$0xff] %vm1260, %v1203
      %1281 = vst.msk [vmem:[#allocation3 + $0xa0] sm:$0xff] %vm1260, %v1205
      %1282 = vst.msk [vmem:[#allocation3 + $0xa8] sm:$0xff] %vm1260, %v1207
      %1283 = vst.msk [vmem:[#allocation3 + $0xb0] sm:$0xff] %vm1260, %v1209
      %1284 = vst.msk [vmem:[#allocation3 + $0xb8] sm:$0xff] %vm1260, %v1211
      %1285 = vst.msk [vmem:[#allocation3 + $0xc0] sm:$0xff] %vm1260, %v1213
      %1286 = vst.msk [vmem:[#allocation3 + $0xc8] sm:$0xff] %vm1260, %v1215
      %1287 = vst.msk [vmem:[#allocation3 + $0xd0] sm:$0xff] %vm1260, %v1217
      %1288 = vst.msk [vmem:[#allocation3 + $0xd8] sm:$0xff] %vm1260, %v1219
      %1289 = vst.msk [vmem:[#allocation3 + $0xe0] sm:$0xff] %vm1260, %v1221
      %1290 = vst.msk [vmem:[#allocation3 + $0xe8] sm:$0xff] %vm1260, %v1223
      %1291 = vst.msk [vmem:[#allocation3 + $0xf0] sm:$0xff] %vm1260, %v1225
      %1292 = vst.msk [vmem:[#allocation3 + $0xf8] sm:$0xff] %vm1260, %v1227
      %v1293 = vld [vmem:[%s424 + $0x2] sm:$0xff]
      %v1294 = vld [vmem:[%s424 + $0xa] sm:$0xff]
      %v1295 = vld [vmem:[%s424 + $0x1a] sm:$0xff]
      %v1296 = vld [vmem:[%s424 + $0x22] sm:$0xff]
      %v1297 = vld [vmem:[%s424 + $0x32] sm:$0xff]
      %v1298 = vld [vmem:[%s424 + $0x3a] sm:$0xff]
      %v1299 = vld [vmem:[%s424 + $0x4a] sm:$0xff]
      %v1300 = vld [vmem:[%s424 + $0x52] sm:$0xff]
      %v1301 = vld [vmem:[%s424 + $0x62] sm:$0xff]
      %v1302 = vld [vmem:[%s424 + $0x6a] sm:$0xff]
      %v1303 = vld [vmem:[%s424 + $0x7a] sm:$0xff]
      %v1304 = vld [vmem:[%s424 + $0x82] sm:$0xff]
      %v1305 = vld [vmem:[%s424 + $0x92] sm:$0xff]
      %v1306 = vld [vmem:[%s424 + $0x9a] sm:$0xff]
      %v1307 = vld [vmem:[%s424 + $0xaa] sm:$0xff]
      %v1308 = vld [vmem:[%s424 + $0xb2] sm:$0xff]
      %v1309 = vld [vmem:[%s424 + $0xc2] sm:$0xff]
      %v1310 = vld [vmem:[%s424 + $0xca] sm:$0xff]
      %v1311 = vld [vmem:[%s424 + $0xda] sm:$0xff]
      %v1312 = vld [vmem:[%s424 + $0xe2] sm:$0xff]
      %v1313 = vld [vmem:[%s424 + $0xf2] sm:$0xff]
      %v1314 = vld [vmem:[%s424 + $0xfa] sm:$0xff]
      %v1315 = vld [vmem:[%s424 + $0x10a] sm:$0xff]
      %v1316 = vld [vmem:[%s424 + $0x112] sm:$0xff]
      %v1317 = vld [vmem:[%s424 + $0x122] sm:$0xff]
      %v1318 = vld [vmem:[%s424 + $0x12a] sm:$0xff]
      %v1319 = vld [vmem:[%s424 + $0x13a] sm:$0xff]
      %v1320 = vld [vmem:[%s424 + $0x142] sm:$0xff]
      %v1321 = vld [vmem:[%s424 + $0x152] sm:$0xff]
      %v1322 = vld [vmem:[%s424 + $0x15a] sm:$0xff]
      %v1323 = vld [vmem:[%s424 + $0x16a] sm:$0xff]
      %v1324 = vld [vmem:[%s424 + $0x172] sm:$0xff]
      %1357 = vrot.lane.b32.xlu0 %v1293, 40
      %v1358 = vpop.permute.xlu0 %1357
      %1359 = vrot.lane.b32.xlu0 %v1294, 40
      %v1360 = vpop.permute.xlu0 %1359
      %1361 = vrot.lane.b32.xlu0 %v1295, 40
      %v1362 = vpop.permute.xlu0 %1361
      %1363 = vrot.lane.b32.xlu0 %v1296, 40
      %v1364 = vpop.permute.xlu0 %1363
      %1365 = vrot.lane.b32.xlu0 %v1297, 40
      %v1366 = vpop.permute.xlu0 %1365
      %1367 = vrot.lane.b32.xlu0 %v1298, 40
      %v1368 = vpop.permute.xlu0 %1367
      %1369 = vrot.lane.b32.xlu0 %v1299, 40
      %v1370 = vpop.permute.xlu0 %1369
      %1371 = vrot.lane.b32.xlu0 %v1300, 40
      %v1372 = vpop.permute.xlu0 %1371
      %1373 = vrot.lane.b32.xlu0 %v1301, 40
      %v1374 = vpop.permute.xlu0 %1373
      %1375 = vrot.lane.b32.xlu0 %v1302, 40
      %v1376 = vpop.permute.xlu0 %1375
      %1377 = vrot.lane.b32.xlu0 %v1303, 40
      %v1378 = vpop.permute.xlu0 %1377
      %1379 = vrot.lane.b32.xlu0 %v1304, 40
      %v1380 = vpop.permute.xlu0 %1379
      %1381 = vrot.lane.b32.xlu0 %v1305, 40
      %v1382 = vpop.permute.xlu0 %1381
      %1383 = vrot.lane.b32.xlu0 %v1306, 40
      %v1384 = vpop.permute.xlu0 %1383
      %1385 = vrot.lane.b32.xlu0 %v1307, 40
      %v1386 = vpop.permute.xlu0 %1385
      %1387 = vrot.lane.b32.xlu0 %v1308, 40
      %v1388 = vpop.permute.xlu0 %1387
      %1389 = vrot.lane.b32.xlu0 %v1309, 40
      %v1390 = vpop.permute.xlu0 %1389
      %1391 = vrot.lane.b32.xlu0 %v1310, 40
      %v1392 = vpop.permute.xlu0 %1391
      %1393 = vrot.lane.b32.xlu0 %v1311, 40
      %v1394 = vpop.permute.xlu0 %1393
      %1395 = vrot.lane.b32.xlu0 %v1312, 40
      %v1396 = vpop.permute.xlu0 %1395
      %1397 = vrot.lane.b32.xlu0 %v1313, 40
      %v1398 = vpop.permute.xlu0 %1397
      %1399 = vrot.lane.b32.xlu0 %v1314, 40
      %v1400 = vpop.permute.xlu0 %1399
      %1401 = vrot.lane.b32.xlu0 %v1315, 40
      %v1402 = vpop.permute.xlu0 %1401
      %1403 = vrot.lane.b32.xlu0 %v1316, 40
      %v1404 = vpop.permute.xlu0 %1403
      %1405 = vrot.lane.b32.xlu0 %v1317, 40
      %v1406 = vpop.permute.xlu0 %1405
      %1407 = vrot.lane.b32.xlu0 %v1318, 40
      %v1408 = vpop.permute.xlu0 %1407
      %1409 = vrot.lane.b32.xlu0 %v1319, 40
      %v1410 = vpop.permute.xlu0 %1409
      %1411 = vrot.lane.b32.xlu0 %v1320, 40
      %v1412 = vpop.permute.xlu0 %1411
      %1413 = vrot.lane.b32.xlu0 %v1321, 40
      %v1414 = vpop.permute.xlu0 %1413
      %1415 = vrot.lane.b32.xlu0 %v1322, 40
      %v1416 = vpop.permute.xlu0 %1415
      %1417 = vrot.lane.b32.xlu0 %v1323, 40
      %v1418 = vpop.permute.xlu0 %1417
      %1419 = vrot.lane.b32.xlu0 %v1324, 40
      %v1420 = vpop.permute.xlu0 %1419
      %vm1453 = vcmask 392512
      %1454 = vst.msk [vmem:[#allocation3] sm:$0xff] %vm1453, %v1358
      %1455 = vst.msk [vmem:[#allocation3 + $0x8] sm:$0xff] %vm1453, %v1360
      %1456 = vst.msk [vmem:[#allocation3 + $0x10] sm:$0xff] %vm1453, %v1362
      %1457 = vst.msk [vmem:[#allocation3 + $0x18] sm:$0xff] %vm1453, %v1364
      %1458 = vst.msk [vmem:[#allocation3 + $0x20] sm:$0xff] %vm1453, %v1366
      %1459 = vst.msk [vmem:[#allocation3 + $0x28] sm:$0xff] %vm1453, %v1368
      %1460 = vst.msk [vmem:[#allocation3 + $0x30] sm:$0xff] %vm1453, %v1370
      %1461 = vst.msk [vmem:[#allocation3 + $0x38] sm:$0xff] %vm1453, %v1372
      %1462 = vst.msk [vmem:[#allocation3 + $0x40] sm:$0xff] %vm1453, %v1374
      %1463 = vst.msk [vmem:[#allocation3 + $0x48] sm:$0xff] %vm1453, %v1376
      %1464 = vst.msk [vmem:[#allocation3 + $0x50] sm:$0xff] %vm1453, %v1378
      %1465 = vst.msk [vmem:[#allocation3 + $0x58] sm:$0xff] %vm1453, %v1380
      %1466 = vst.msk [vmem:[#allocation3 + $0x60] sm:$0xff] %vm1453, %v1382
      %1467 = vst.msk [vmem:[#allocation3 + $0x68] sm:$0xff] %vm1453, %v1384
      %1468 = vst.msk [vmem:[#allocation3 + $0x70] sm:$0xff] %vm1453, %v1386
      %1469 = vst.msk [vmem:[#allocation3 + $0x78] sm:$0xff] %vm1453, %v1388
      %1470 = vst.msk [vmem:[#allocation3 + $0x80] sm:$0xff] %vm1453, %v1390
      %1471 = vst.msk [vmem:[#allocation3 + $0x88] sm:$0xff] %vm1453, %v1392
      %1472 = vst.msk [vmem:[#allocation3 + $0x90] sm:$0xff] %vm1453, %v1394
      %1473 = vst.msk [vmem:[#allocation3 + $0x98] sm:$0xff] %vm1453, %v1396
      %1474 = vst.msk [vmem:[#allocation3 + $0xa0] sm:$0xff] %vm1453, %v1398
      %1475 = vst.msk [vmem:[#allocation3 + $0xa8] sm:$0xff] %vm1453, %v1400
      %1476 = vst.msk [vmem:[#allocation3 + $0xb0] sm:$0xff] %vm1453, %v1402
      %1477 = vst.msk [vmem:[#allocation3 + $0xb8] sm:$0xff] %vm1453, %v1404
      %1478 = vst.msk [vmem:[#allocation3 + $0xc0] sm:$0xff] %vm1453, %v1406
      %1479 = vst.msk [vmem:[#allocation3 + $0xc8] sm:$0xff] %vm1453, %v1408
      %1480 = vst.msk [vmem:[#allocation3 + $0xd0] sm:$0xff] %vm1453, %v1410
      %1481 = vst.msk [vmem:[#allocation3 + $0xd8] sm:$0xff] %vm1453, %v1412
      %1482 = vst.msk [vmem:[#allocation3 + $0xe0] sm:$0xff] %vm1453, %v1414
      %1483 = vst.msk [vmem:[#allocation3 + $0xe8] sm:$0xff] %vm1453, %v1416
      %1484 = vst.msk [vmem:[#allocation3 + $0xf0] sm:$0xff] %vm1453, %v1418
      %1485 = vst.msk [vmem:[#allocation3 + $0xf8] sm:$0xff] %vm1453, %v1420
      %s1486 = scalar_lea.vmem [#allocation2], 48
      %v1487 = vld [vmem:[%s1486] sm:$0xff]
      %v1488 = vld [vmem:[%s1486 + $0x8] sm:$0xff]
      %v1489 = vld [vmem:[%s1486 + $0x18] sm:$0xff]
      %v1490 = vld [vmem:[%s1486 + $0x20] sm:$0xff]
      %v1491 = vld [vmem:[%s1486 + $0x30] sm:$0xff]
      %v1492 = vld [vmem:[%s1486 + $0x38] sm:$0xff]
      %v1493 = vld [vmem:[%s1486 + $0x48] sm:$0xff]
      %v1494 = vld [vmem:[%s1486 + $0x50] sm:$0xff]
      %v1495 = vld [vmem:[%s1486 + $0x60] sm:$0xff]
      %v1496 = vld [vmem:[%s1486 + $0x68] sm:$0xff]
      %v1497 = vld [vmem:[%s1486 + $0x78] sm:$0xff]
      %v1498 = vld [vmem:[%s1486 + $0x80] sm:$0xff]
      %v1499 = vld [vmem:[%s1486 + $0x90] sm:$0xff]
      %v1500 = vld [vmem:[%s1486 + $0x98] sm:$0xff]
      %v1501 = vld [vmem:[%s1486 + $0xa8] sm:$0xff]
      %v1502 = vld [vmem:[%s1486 + $0xb0] sm:$0xff]
      %v1503 = vld [vmem:[%s1486 + $0xc0] sm:$0xff]
      %v1504 = vld [vmem:[%s1486 + $0xc8] sm:$0xff]
      %v1505 = vld [vmem:[%s1486 + $0xd8] sm:$0xff]
      %v1506 = vld [vmem:[%s1486 + $0xe0] sm:$0xff]
      %v1507 = vld [vmem:[%s1486 + $0xf0] sm:$0xff]
      %v1508 = vld [vmem:[%s1486 + $0xf8] sm:$0xff]
      %v1509 = vld [vmem:[%s1486 + $0x108] sm:$0xff]
      %v1510 = vld [vmem:[%s1486 + $0x110] sm:$0xff]
      %v1511 = vld [vmem:[%s1486 + $0x120] sm:$0xff]
      %v1512 = vld [vmem:[%s1486 + $0x128] sm:$0xff]
      %v1513 = vld [vmem:[%s1486 + $0x138] sm:$0xff]
      %v1514 = vld [vmem:[%s1486 + $0x140] sm:$0xff]
      %v1515 = vld [vmem:[%s1486 + $0x150] sm:$0xff]
      %v1516 = vld [vmem:[%s1486 + $0x158] sm:$0xff]
      %v1517 = vld [vmem:[%s1486 + $0x168] sm:$0xff]
      %v1518 = vld [vmem:[%s1486 + $0x170] sm:$0xff]
      %1551 = vrot.lane.b32.xlu0 %v1487, 48
      %v1552 = vpop.permute.xlu0 %1551
      %1553 = vrot.lane.b32.xlu0 %v1488, 48
      %v1554 = vpop.permute.xlu0 %1553
      %1555 = vrot.lane.b32.xlu0 %v1489, 48
      %v1556 = vpop.permute.xlu0 %1555
      %1557 = vrot.lane.b32.xlu0 %v1490, 48
      %v1558 = vpop.permute.xlu0 %1557
      %1559 = vrot.lane.b32.xlu0 %v1491, 48
      %v1560 = vpop.permute.xlu0 %1559
      %1561 = vrot.lane.b32.xlu0 %v1492, 48
      %v1562 = vpop.permute.xlu0 %1561
      %1563 = vrot.lane.b32.xlu0 %v1493, 48
      %v1564 = vpop.permute.xlu0 %1563
      %1565 = vrot.lane.b32.xlu0 %v1494, 48
      %v1566 = vpop.permute.xlu0 %1565
      %1567 = vrot.lane.b32.xlu0 %v1495, 48
      %v1568 = vpop.permute.xlu0 %1567
      %1569 = vrot.lane.b32.xlu0 %v1496, 48
      %v1570 = vpop.permute.xlu0 %1569
      %1571 = vrot.lane.b32.xlu0 %v1497, 48
      %v1572 = vpop.permute.xlu0 %1571
      %1573 = vrot.lane.b32.xlu0 %v1498, 48
      %v1574 = vpop.permute.xlu0 %1573
      %1575 = vrot.lane.b32.xlu0 %v1499, 48
      %v1576 = vpop.permute.xlu0 %1575
      %1577 = vrot.lane.b32.xlu0 %v1500, 48
      %v1578 = vpop.permute.xlu0 %1577
      %1579 = vrot.lane.b32.xlu0 %v1501, 48
      %v1580 = vpop.permute.xlu0 %1579
      %1581 = vrot.lane.b32.xlu0 %v1502, 48
      %v1582 = vpop.permute.xlu0 %1581
      %1583 = vrot.lane.b32.xlu0 %v1503, 48
      %v1584 = vpop.permute.xlu0 %1583
      %1585 = vrot.lane.b32.xlu0 %v1504, 48
      %v1586 = vpop.permute.xlu0 %1585
      %1587 = vrot.lane.b32.xlu0 %v1505, 48
      %v1588 = vpop.permute.xlu0 %1587
      %1589 = vrot.lane.b32.xlu0 %v1506, 48
      %v1590 = vpop.permute.xlu0 %1589
      %1591 = vrot.lane.b32.xlu0 %v1507, 48
      %v1592 = vpop.permute.xlu0 %1591
      %1593 = vrot.lane.b32.xlu0 %v1508, 48
      %v1594 = vpop.permute.xlu0 %1593
      %1595 = vrot.lane.b32.xlu0 %v1509, 48
      %v1596 = vpop.permute.xlu0 %1595
      %1597 = vrot.lane.b32.xlu0 %v1510, 48
      %v1598 = vpop.permute.xlu0 %1597
      %1599 = vrot.lane.b32.xlu0 %v1511, 48
      %v1600 = vpop.permute.xlu0 %1599
      %1601 = vrot.lane.b32.xlu0 %v1512, 48
      %v1602 = vpop.permute.xlu0 %1601
      %1603 = vrot.lane.b32.xlu0 %v1513, 48
      %v1604 = vpop.permute.xlu0 %1603
      %1605 = vrot.lane.b32.xlu0 %v1514, 48
      %v1606 = vpop.permute.xlu0 %1605
      %1607 = vrot.lane.b32.xlu0 %v1515, 48
      %v1608 = vpop.permute.xlu0 %1607
      %1609 = vrot.lane.b32.xlu0 %v1516, 48
      %v1610 = vpop.permute.xlu0 %1609
      %1611 = vrot.lane.b32.xlu0 %v1517, 48
      %v1612 = vpop.permute.xlu0 %1611
      %1613 = vrot.lane.b32.xlu0 %v1518, 48
      %v1614 = vpop.permute.xlu0 %1613
      %vm1647 = vcmask 458112
      %1648 = vst.msk [vmem:[#allocation3] sm:$0xff] %vm1647, %v1552
      %1649 = vst.msk [vmem:[#allocation3 + $0x8] sm:$0xff] %vm1647, %v1554
      %1650 = vst.msk [vmem:[#allocation3 + $0x10] sm:$0xff] %vm1647, %v1556
      %1651 = vst.msk [vmem:[#allocation3 + $0x18] sm:$0xff] %vm1647, %v1558
      %1652 = vst.msk [vmem:[#allocation3 + $0x20] sm:$0xff] %vm1647, %v1560
      %1653 = vst.msk [vmem:[#allocation3 + $0x28] sm:$0xff] %vm1647, %v1562
      %1654 = vst.msk [vmem:[#allocation3 + $0x30] sm:$0xff] %vm1647, %v1564
      %1655 = vst.msk [vmem:[#allocation3 + $0x38] sm:$0xff] %vm1647, %v1566
      %1656 = vst.msk [vmem:[#allocation3 + $0x40] sm:$0xff] %vm1647, %v1568
      %1657 = vst.msk [vmem:[#allocation3 + $0x48] sm:$0xff] %vm1647, %v1570
      %1658 = vst.msk [vmem:[#allocation3 + $0x50] sm:$0xff] %vm1647, %v1572
      %1659 = vst.msk [vmem:[#allocation3 + $0x58] sm:$0xff] %vm1647, %v1574
      %1660 = vst.msk [vmem:[#allocation3 + $0x60] sm:$0xff] %vm1647, %v1576
      %1661 = vst.msk [vmem:[#allocation3 + $0x68] sm:$0xff] %vm1647, %v1578
      %1662 = vst.msk [vmem:[#allocation3 + $0x70] sm:$0xff] %vm1647, %v1580
      %1663 = vst.msk [vmem:[#allocation3 + $0x78] sm:$0xff] %vm1647, %v1582
      %1664 = vst.msk [vmem:[#allocation3 + $0x80] sm:$0xff] %vm1647, %v1584
      %1665 = vst.msk [vmem:[#allocation3 + $0x88] sm:$0xff] %vm1647, %v1586
      %1666 = vst.msk [vmem:[#allocation3 + $0x90] sm:$0xff] %vm1647, %v1588
      %1667 = vst.msk [vmem:[#allocation3 + $0x98] sm:$0xff] %vm1647, %v1590
      %1668 = vst.msk [vmem:[#allocation3 + $0xa0] sm:$0xff] %vm1647, %v1592
      %1669 = vst.msk [vmem:[#allocation3 + $0xa8] sm:$0xff] %vm1647, %v1594
      %1670 = vst.msk [vmem:[#allocation3 + $0xb0] sm:$0xff] %vm1647, %v1596
      %1671 = vst.msk [vmem:[#allocation3 + $0xb8] sm:$0xff] %vm1647, %v1598
      %1672 = vst.msk [vmem:[#allocation3 + $0xc0] sm:$0xff] %vm1647, %v1600
      %1673 = vst.msk [vmem:[#allocation3 + $0xc8] sm:$0xff] %vm1647, %v1602
      %1674 = vst.msk [vmem:[#allocation3 + $0xd0] sm:$0xff] %vm1647, %v1604
      %1675 = vst.msk [vmem:[#allocation3 + $0xd8] sm:$0xff] %vm1647, %v1606
      %1676 = vst.msk [vmem:[#allocation3 + $0xe0] sm:$0xff] %vm1647, %v1608
      %1677 = vst.msk [vmem:[#allocation3 + $0xe8] sm:$0xff] %vm1647, %v1610
      %1678 = vst.msk [vmem:[#allocation3 + $0xf0] sm:$0xff] %vm1647, %v1612
      %1679 = vst.msk [vmem:[#allocation3 + $0xf8] sm:$0xff] %vm1647, %v1614
      %v1680 = vld [vmem:[%s1486 + $0x1] sm:$0xff]
      %v1681 = vld [vmem:[%s1486 + $0x9] sm:$0xff]
      %v1682 = vld [vmem:[%s1486 + $0x19] sm:$0xff]
      %v1683 = vld [vmem:[%s1486 + $0x21] sm:$0xff]
      %v1684 = vld [vmem:[%s1486 + $0x31] sm:$0xff]
      %v1685 = vld [vmem:[%s1486 + $0x39] sm:$0xff]
      %v1686 = vld [vmem:[%s1486 + $0x49] sm:$0xff]
      %v1687 = vld [vmem:[%s1486 + $0x51] sm:$0xff]
      %v1688 = vld [vmem:[%s1486 + $0x61] sm:$0xff]
      %v1689 = vld [vmem:[%s1486 + $0x69] sm:$0xff]
      %v1690 = vld [vmem:[%s1486 + $0x79] sm:$0xff]
      %v1691 = vld [vmem:[%s1486 + $0x81] sm:$0xff]
      %v1692 = vld [vmem:[%s1486 + $0x91] sm:$0xff]
      %v1693 = vld [vmem:[%s1486 + $0x99] sm:$0xff]
      %v1694 = vld [vmem:[%s1486 + $0xa9] sm:$0xff]
      %v1695 = vld [vmem:[%s1486 + $0xb1] sm:$0xff]
      %v1696 = vld [vmem:[%s1486 + $0xc1] sm:$0xff]
      %v1697 = vld [vmem:[%s1486 + $0xc9] sm:$0xff]
      %v1698 = vld [vmem:[%s1486 + $0xd9] sm:$0xff]
      %v1699 = vld [vmem:[%s1486 + $0xe1] sm:$0xff]
      %v1700 = vld [vmem:[%s1486 + $0xf1] sm:$0xff]
      %v1701 = vld [vmem:[%s1486 + $0xf9] sm:$0xff]
      %v1702 = vld [vmem:[%s1486 + $0x109] sm:$0xff]
      %v1703 = vld [vmem:[%s1486 + $0x111] sm:$0xff]
      %v1704 = vld [vmem:[%s1486 + $0x121] sm:$0xff]
      %v1705 = vld [vmem:[%s1486 + $0x129] sm:$0xff]
      %v1706 = vld [vmem:[%s1486 + $0x139] sm:$0xff]
      %v1707 = vld [vmem:[%s1486 + $0x141] sm:$0xff]
      %v1708 = vld [vmem:[%s1486 + $0x151] sm:$0xff]
      %v1709 = vld [vmem:[%s1486 + $0x159] sm:$0xff]
      %v1710 = vld [vmem:[%s1486 + $0x169] sm:$0xff]
      %v1711 = vld [vmem:[%s1486 + $0x171] sm:$0xff]
      %1744 = vrot.lane.b32.xlu0 %v1680, 56
      %v1745 = vpop.permute.xlu0 %1744
      %1746 = vrot.lane.b32.xlu0 %v1681, 56
      %v1747 = vpop.permute.xlu0 %1746
      %1748 = vrot.lane.b32.xlu0 %v1682, 56
      %v1749 = vpop.permute.xlu0 %1748
      %1750 = vrot.lane.b32.xlu0 %v1683, 56
      %v1751 = vpop.permute.xlu0 %1750
      %1752 = vrot.lane.b32.xlu0 %v1684, 56
      %v1753 = vpop.permute.xlu0 %1752
      %1754 = vrot.lane.b32.xlu0 %v1685, 56
      %v1755 = vpop.permute.xlu0 %1754
      %1756 = vrot.lane.b32.xlu0 %v1686, 56
      %v1757 = vpop.permute.xlu0 %1756
      %1758 = vrot.lane.b32.xlu0 %v1687, 56
      %v1759 = vpop.permute.xlu0 %1758
      %1760 = vrot.lane.b32.xlu0 %v1688, 56
      %v1761 = vpop.permute.xlu0 %1760
      %1762 = vrot.lane.b32.xlu0 %v1689, 56
      %v1763 = vpop.permute.xlu0 %1762
      %1764 = vrot.lane.b32.xlu0 %v1690, 56
      %v1765 = vpop.permute.xlu0 %1764
      %1766 = vrot.lane.b32.xlu0 %v1691, 56
      %v1767 = vpop.permute.xlu0 %1766
      %1768 = vrot.lane.b32.xlu0 %v1692, 56
      %v1769 = vpop.permute.xlu0 %1768
      %1770 = vrot.lane.b32.xlu0 %v1693, 56
      %v1771 = vpop.permute.xlu0 %1770
      %1772 = vrot.lane.b32.xlu0 %v1694, 56
      %v1773 = vpop.permute.xlu0 %1772
      %1774 = vrot.lane.b32.xlu0 %v1695, 56
      %v1775 = vpop.permute.xlu0 %1774
      %1776 = vrot.lane.b32.xlu0 %v1696, 56
      %v1777 = vpop.permute.xlu0 %1776
      %1778 = vrot.lane.b32.xlu0 %v1697, 56
      %v1779 = vpop.permute.xlu0 %1778
      %1780 = vrot.lane.b32.xlu0 %v1698, 56
      %v1781 = vpop.permute.xlu0 %1780
      %1782 = vrot.lane.b32.xlu0 %v1699, 56
      %v1783 = vpop.permute.xlu0 %1782
      %1784 = vrot.lane.b32.xlu0 %v1700, 56
      %v1785 = vpop.permute.xlu0 %1784
      %1786 = vrot.lane.b32.xlu0 %v1701, 56
      %v1787 = vpop.permute.xlu0 %1786
      %1788 = vrot.lane.b32.xlu0 %v1702, 56
      %v1789 = vpop.permute.xlu0 %1788
      %1790 = vrot.lane.b32.xlu0 %v1703, 56
      %v1791 = vpop.permute.xlu0 %1790
      %1792 = vrot.lane.b32.xlu0 %v1704, 56
      %v1793 = vpop.permute.xlu0 %1792
      %1794 = vrot.lane.b32.xlu0 %v1705, 56
      %v1795 = vpop.permute.xlu0 %1794
      %1796 = vrot.lane.b32.xlu0 %v1706, 56
      %v1797 = vpop.permute.xlu0 %1796
      %1798 = vrot.lane.b32.xlu0 %v1707, 56
      %v1799 = vpop.permute.xlu0 %1798
      %1800 = vrot.lane.b32.xlu0 %v1708, 56
      %v1801 = vpop.permute.xlu0 %1800
      %1802 = vrot.lane.b32.xlu0 %v1709, 56
      %v1803 = vpop.permute.xlu0 %1802
      %1804 = vrot.lane.b32.xlu0 %v1710, 56
      %v1805 = vpop.permute.xlu0 %1804
      %1806 = vrot.lane.b32.xlu0 %v1711, 56
      %v1807 = vpop.permute.xlu0 %1806
      %vm1840 = vcmask 523712
      %1841 = vst.msk [vmem:[#allocation3] sm:$0xff] %vm1840, %v1745
      %1842 = vst.msk [vmem:[#allocation3 + $0x8] sm:$0xff] %vm1840, %v1747
      %1843 = vst.msk [vmem:[#allocation3 + $0x10] sm:$0xff] %vm1840, %v1749
      %1844 = vst.msk [vmem:[#allocation3 + $0x18] sm:$0xff] %vm1840, %v1751
      %1845 = vst.msk [vmem:[#allocation3 + $0x20] sm:$0xff] %vm1840, %v1753
      %1846 = vst.msk [vmem:[#allocation3 + $0x28] sm:$0xff] %vm1840, %v1755
      %1847 = vst.msk [vmem:[#allocation3 + $0x30] sm:$0xff] %vm1840, %v1757
      %1848 = vst.msk [vmem:[#allocation3 + $0x38] sm:$0xff] %vm1840, %v1759
      %1849 = vst.msk [vmem:[#allocation3 + $0x40] sm:$0xff] %vm1840, %v1761
      %1850 = vst.msk [vmem:[#allocation3 + $0x48] sm:$0xff] %vm1840, %v1763
      %1851 = vst.msk [vmem:[#allocation3 + $0x50] sm:$0xff] %vm1840, %v1765
      %1852 = vst.msk [vmem:[#allocation3 + $0x58] sm:$0xff] %vm1840, %v1767
      %1853 = vst.msk [vmem:[#allocation3 + $0x60] sm:$0xff] %vm1840, %v1769
      %1854 = vst.msk [vmem:[#allocation3 + $0x68] sm:$0xff] %vm1840, %v1771
      %1855 = vst.msk [vmem:[#allocation3 + $0x70] sm:$0xff] %vm1840, %v1773
      %1856 = vst.msk [vmem:[#allocation3 + $0x78] sm:$0xff] %vm1840, %v1775
      %1857 = vst.msk [vmem:[#allocation3 + $0x80] sm:$0xff] %vm1840, %v1777
      %1858 = vst.msk [vmem:[#allocation3 + $0x88] sm:$0xff] %vm1840, %v1779
      %1859 = vst.msk [vmem:[#allocation3 + $0x90] sm:$0xff] %vm1840, %v1781
      %1860 = vst.msk [vmem:[#allocation3 + $0x98] sm:$0xff] %vm1840, %v1783
      %1861 = vst.msk [vmem:[#allocation3 + $0xa0] sm:$0xff] %vm1840, %v1785
      %1862 = vst.msk [vmem:[#allocation3 + $0xa8] sm:$0xff] %vm1840, %v1787
      %1863 = vst.msk [vmem:[#allocation3 + $0xb0] sm:$0xff] %vm1840, %v1789
      %1864 = vst.msk [vmem:[#allocation3 + $0xb8] sm:$0xff] %vm1840, %v1791
      %1865 = vst.msk [vmem:[#allocation3 + $0xc0] sm:$0xff] %vm1840, %v1793
      %1866 = vst.msk [vmem:[#allocation3 + $0xc8] sm:$0xff] %vm1840, %v1795
      %1867 = vst.msk [vmem:[#allocation3 + $0xd0] sm:$0xff] %vm1840, %v1797
      %1868 = vst.msk [vmem:[#allocation3 + $0xd8] sm:$0xff] %vm1840, %v1799
      %1869 = vst.msk [vmem:[#allocation3 + $0xe0] sm:$0xff] %vm1840, %v1801
      %1870 = vst.msk [vmem:[#allocation3 + $0xe8] sm:$0xff] %vm1840, %v1803
      %1871 = vst.msk [vmem:[#allocation3 + $0xf0] sm:$0xff] %vm1840, %v1805
      %1872 = vst.msk [vmem:[#allocation3 + $0xf8] sm:$0xff] %vm1840, %v1807
      %v1873 = vld [vmem:[%s1486 + $0x2] sm:$0xff]
      %v1874 = vld [vmem:[%s1486 + $0xa] sm:$0xff]
      %v1875 = vld [vmem:[%s1486 + $0x1a] sm:$0xff]
      %v1876 = vld [vmem:[%s1486 + $0x22] sm:$0xff]
      %v1877 = vld [vmem:[%s1486 + $0x32] sm:$0xff]
      %v1878 = vld [vmem:[%s1486 + $0x3a] sm:$0xff]
      %v1879 = vld [vmem:[%s1486 + $0x4a] sm:$0xff]
      %v1880 = vld [vmem:[%s1486 + $0x52] sm:$0xff]
      %v1881 = vld [vmem:[%s1486 + $0x62] sm:$0xff]
      %v1882 = vld [vmem:[%s1486 + $0x6a] sm:$0xff]
      %v1883 = vld [vmem:[%s1486 + $0x7a] sm:$0xff]
      %v1884 = vld [vmem:[%s1486 + $0x82] sm:$0xff]
      %v1885 = vld [vmem:[%s1486 + $0x92] sm:$0xff]
      %v1886 = vld [vmem:[%s1486 + $0x9a] sm:$0xff]
      %v1887 = vld [vmem:[%s1486 + $0xaa] sm:$0xff]
      %v1888 = vld [vmem:[%s1486 + $0xb2] sm:$0xff]
      %v1889 = vld [vmem:[%s1486 + $0xc2] sm:$0xff]
      %v1890 = vld [vmem:[%s1486 + $0xca] sm:$0xff]
      %v1891 = vld [vmem:[%s1486 + $0xda] sm:$0xff]
      %v1892 = vld [vmem:[%s1486 + $0xe2] sm:$0xff]
      %v1893 = vld [vmem:[%s1486 + $0xf2] sm:$0xff]
      %v1894 = vld [vmem:[%s1486 + $0xfa] sm:$0xff]
      %v1895 = vld [vmem:[%s1486 + $0x10a] sm:$0xff]
      %v1896 = vld [vmem:[%s1486 + $0x112] sm:$0xff]
      %v1897 = vld [vmem:[%s1486 + $0x122] sm:$0xff]
      %v1898 = vld [vmem:[%s1486 + $0x12a] sm:$0xff]
      %v1899 = vld [vmem:[%s1486 + $0x13a] sm:$0xff]
      %v1900 = vld [vmem:[%s1486 + $0x142] sm:$0xff]
      %v1901 = vld [vmem:[%s1486 + $0x152] sm:$0xff]
      %v1902 = vld [vmem:[%s1486 + $0x15a] sm:$0xff]
      %v1903 = vld [vmem:[%s1486 + $0x16a] sm:$0xff]
      %v1904 = vld [vmem:[%s1486 + $0x172] sm:$0xff]
      %1937 = vrot.lane.b32.xlu0 %v1873, 64
      %v1938 = vpop.permute.xlu0 %1937
      %1939 = vrot.lane.b32.xlu0 %v1874, 64
      %v1940 = vpop.permute.xlu0 %1939
      %1941 = vrot.lane.b32.xlu0 %v1875, 64
      %v1942 = vpop.permute.xlu0 %1941
      %1943 = vrot.lane.b32.xlu0 %v1876, 64
      %v1944 = vpop.permute.xlu0 %1943
      %1945 = vrot.lane.b32.xlu0 %v1877, 64
      %v1946 = vpop.permute.xlu0 %1945
      %1947 = vrot.lane.b32.xlu0 %v1878, 64
      %v1948 = vpop.permute.xlu0 %1947
      %1949 = vrot.lane.b32.xlu0 %v1879, 64
      %v1950 = vpop.permute.xlu0 %1949
      %1951 = vrot.lane.b32.xlu0 %v1880, 64
      %v1952 = vpop.permute.xlu0 %1951
      %1953 = vrot.lane.b32.xlu0 %v1881, 64
      %v1954 = vpop.permute.xlu0 %1953
      %1955 = vrot.lane.b32.xlu0 %v1882, 64
      %v1956 = vpop.permute.xlu0 %1955
      %1957 = vrot.lane.b32.xlu0 %v1883, 64
      %v1958 = vpop.permute.xlu0 %1957
      %1959 = vrot.lane.b32.xlu0 %v1884, 64
      %v1960 = vpop.permute.xlu0 %1959
      %1961 = vrot.lane.b32.xlu0 %v1885, 64
      %v1962 = vpop.permute.xlu0 %1961
      %1963 = vrot.lane.b32.xlu0 %v1886, 64
      %v1964 = vpop.permute.xlu0 %1963
      %1965 = vrot.lane.b32.xlu0 %v1887, 64
      %v1966 = vpop.permute.xlu0 %1965
      %1967 = vrot.lane.b32.xlu0 %v1888, 64
      %v1968 = vpop.permute.xlu0 %1967
      %1969 = vrot.lane.b32.xlu0 %v1889, 64
      %v1970 = vpop.permute.xlu0 %1969
      %1971 = vrot.lane.b32.xlu0 %v1890, 64
      %v1972 = vpop.permute.xlu0 %1971
      %1973 = vrot.lane.b32.xlu0 %v1891, 64
      %v1974 = vpop.permute.xlu0 %1973
      %1975 = vrot.lane.b32.xlu0 %v1892, 64
      %v1976 = vpop.permute.xlu0 %1975
      %1977 = vrot.lane.b32.xlu0 %v1893, 64
      %v1978 = vpop.permute.xlu0 %1977
      %1979 = vrot.lane.b32.xlu0 %v1894, 64
      %v1980 = vpop.permute.xlu0 %1979
      %1981 = vrot.lane.b32.xlu0 %v1895, 64
      %v1982 = vpop.permute.xlu0 %1981
      %1983 = vrot.lane.b32.xlu0 %v1896, 64
      %v1984 = vpop.permute.xlu0 %1983
      %1985 = vrot.lane.b32.xlu0 %v1897, 64
      %v1986 = vpop.permute.xlu0 %1985
      %1987 = vrot.lane.b32.xlu0 %v1898, 64
      %v1988 = vpop.permute.xlu0 %1987
      %1989 = vrot.lane.b32.xlu0 %v1899, 64
      %v1990 = vpop.permute.xlu0 %1989
      %1991 = vrot.lane.b32.xlu0 %v1900, 64
      %v1992 = vpop.permute.xlu0 %1991
      %1993 = vrot.lane.b32.xlu0 %v1901, 64
      %v1994 = vpop.permute.xlu0 %1993
      %1995 = vrot.lane.b32.xlu0 %v1902, 64
      %v1996 = vpop.permute.xlu0 %1995
      %1997 = vrot.lane.b32.xlu0 %v1903, 64
      %v1998 = vpop.permute.xlu0 %1997
      %1999 = vrot.lane.b32.xlu0 %v1904, 64
      %v2000 = vpop.permute.xlu0 %1999
      %vm2033 = vcmask 589312
      %2034 = vst.msk [vmem:[#allocation3] sm:$0xff] %vm2033, %v1938
      %2035 = vst.msk [vmem:[#allocation3 + $0x8] sm:$0xff] %vm2033, %v1940
      %2036 = vst.msk [vmem:[#allocation3 + $0x10] sm:$0xff] %vm2033, %v1942
      %2037 = vst.msk [vmem:[#allocation3 + $0x18] sm:$0xff] %vm2033, %v1944
      %2038 = vst.msk [vmem:[#allocation3 + $0x20] sm:$0xff] %vm2033, %v1946
      %2039 = vst.msk [vmem:[#allocation3 + $0x28] sm:$0xff] %vm2033, %v1948
      %2040 = vst.msk [vmem:[#allocation3 + $0x30] sm:$0xff] %vm2033, %v1950
      %2041 = vst.msk [vmem:[#allocation3 + $0x38] sm:$0xff] %vm2033, %v1952
      %2042 = vst.msk [vmem:[#allocation3 + $0x40] sm:$0xff] %vm2033, %v1954
      %2043 = vst.msk [vmem:[#allocation3 + $0x48] sm:$0xff] %vm2033, %v1956
      %2044 = vst.msk [vmem:[#allocation3 + $0x50] sm:$0xff] %vm2033, %v1958
      %2045 = vst.msk [vmem:[#allocation3 + $0x58] sm:$0xff] %vm2033, %v1960
      %2046 = vst.msk [vmem:[#allocation3 + $0x60] sm:$0xff] %vm2033, %v1962
      %2047 = vst.msk [vmem:[#allocation3 + $0x68] sm:$0xff] %vm2033, %v1964
      %2048 = vst.msk [vmem:[#allocation3 + $0x70] sm:$0xff] %vm2033, %v1966
      %2049 = vst.msk [vmem:[#allocation3 + $0x78] sm:$0xff] %vm2033, %v1968
      %2050 = vst.msk [vmem:[#allocation3 + $0x80] sm:$0xff] %vm2033, %v1970
      %2051 = vst.msk [vmem:[#allocation3 + $0x88] sm:$0xff] %vm2033, %v1972
      %2052 = vst.msk [vmem:[#allocation3 + $0x90] sm:$0xff] %vm2033, %v1974
      %2053 = vst.msk [vmem:[#allocation3 + $0x98] sm:$0xff] %vm2033, %v1976
      %2054 = vst.msk [vmem:[#allocation3 + $0xa0] sm:$0xff] %vm2033, %v1978
      %2055 = vst.msk [vmem:[#allocation3 + $0xa8] sm:$0xff] %vm2033, %v1980
      %2056 = vst.msk [vmem:[#allocation3 + $0xb0] sm:$0xff] %vm2033, %v1982
      %2057 = vst.msk [vmem:[#allocation3 + $0xb8] sm:$0xff] %vm2033, %v1984
      %2058 = vst.msk [vmem:[#allocation3 + $0xc0] sm:$0xff] %vm2033, %v1986
      %2059 = vst.msk [vmem:[#allocation3 + $0xc8] sm:$0xff] %vm2033, %v1988
      %2060 = vst.msk [vmem:[#allocation3 + $0xd0] sm:$0xff] %vm2033, %v1990
      %2061 = vst.msk [vmem:[#allocation3 + $0xd8] sm:$0xff] %vm2033, %v1992
      %2062 = vst.msk [vmem:[#allocation3 + $0xe0] sm:$0xff] %vm2033, %v1994
      %2063 = vst.msk [vmem:[#allocation3 + $0xe8] sm:$0xff] %vm2033, %v1996
      %2064 = vst.msk [vmem:[#allocation3 + $0xf0] sm:$0xff] %vm2033, %v1998
      %2065 = vst.msk [vmem:[#allocation3 + $0xf8] sm:$0xff] %vm2033, %v2000
      %v2066 = vld [vmem:[#allocation3] sm:$0xff]
      %v2067 = vld [vmem:[#allocation3 + $0x8] sm:$0xff]
      %v2068 = vld [vmem:[#allocation3 + $0x10] sm:$0xff]
      %v2069 = vld [vmem:[#allocation3 + $0x18] sm:$0xff]
      %v2070 = vld [vmem:[#allocation3 + $0x20] sm:$0xff]
      %v2071 = vld [vmem:[#allocation3 + $0x28] sm:$0xff]
      %v2072 = vld [vmem:[#allocation3 + $0x30] sm:$0xff]
      %v2073 = vld [vmem:[#allocation3 + $0x38] sm:$0xff]
      %v2074 = vld [vmem:[#allocation3 + $0x40] sm:$0xff]
      %v2075 = vld [vmem:[#allocation3 + $0x48] sm:$0xff]
      %v2076 = vld [vmem:[#allocation3 + $0x50] sm:$0xff]
      %v2077 = vld [vmem:[#allocation3 + $0x58] sm:$0xff]
      %v2078 = vld [vmem:[#allocation3 + $0x60] sm:$0xff]
      %v2079 = vld [vmem:[#allocation3 + $0x68] sm:$0xff]
      %v2080 = vld [vmem:[#allocation3 + $0x70] sm:$0xff]
      %v2081 = vld [vmem:[#allocation3 + $0x78] sm:$0xff]
      %v2082 = vld [vmem:[#allocation3 + $0x80] sm:$0xff]
      %v2083 = vld [vmem:[#allocation3 + $0x88] sm:$0xff]
      %v2084 = vld [vmem:[#allocation3 + $0x90] sm:$0xff]
      %v2085 = vld [vmem:[#allocation3 + $0x98] sm:$0xff]
      %v2086 = vld [vmem:[#allocation3 + $0xa0] sm:$0xff]
      %v2087 = vld [vmem:[#allocation3 + $0xa8] sm:$0xff]
      %v2088 = vld [vmem:[#allocation3 + $0xb0] sm:$0xff]
      %v2089 = vld [vmem:[#allocation3 + $0xb8] sm:$0xff]
      %v2090 = vld [vmem:[#allocation3 + $0xc0] sm:$0xff]
      %v2091 = vld [vmem:[#allocation3 + $0xc8] sm:$0xff]
      %v2092 = vld [vmem:[#allocation3 + $0xd0] sm:$0xff]
      %v2093 = vld [vmem:[#allocation3 + $0xd8] sm:$0xff]
      %v2094 = vld [vmem:[#allocation3 + $0xe0] sm:$0xff]
      %v2095 = vld [vmem:[#allocation3 + $0xe8] sm:$0xff]
      %v2096 = vld [vmem:[#allocation3 + $0xf0] sm:$0xff]
      %v2097 = vld [vmem:[#allocation3 + $0xf8] sm:$0xff]
      %v2098 = vld [vmem:[%s1] sm:$0xff]
      %v2099 = vld [vmem:[%s1 + $0x8] sm:$0xff]
      %v2100 = vld [vmem:[%s1 + $0x10] sm:$0xff]
      %v2101 = vld [vmem:[%s1 + $0x18] sm:$0xff]
      %v2102 = vld [vmem:[%s1 + $0x20] sm:$0xff]
      %v2103 = vld [vmem:[%s1 + $0x28] sm:$0xff]
      %v2104 = vld [vmem:[%s1 + $0x30] sm:$0xff]
      %v2105 = vld [vmem:[%s1 + $0x38] sm:$0xff]
      %v2106 = vld [vmem:[%s1 + $0x40] sm:$0xff]
      %vm2107 = vcmask 588800
      %v2109 = vsel %vm2107, %v2066, 0
      %v2112 = vsel %vm2107, %v2067, 0
      %v2115 = vsel %vm2107, %v2068, 0
      %v2118 = vsel %vm2107, %v2069, 0
      %v2121 = vsel %vm2107, %v2070, 0
      %v2124 = vsel %vm2107, %v2071, 0
      %v2127 = vsel %vm2107, %v2072, 0
      %v2130 = vsel %vm2107, %v2073, 0
      %v2133 = vsel %vm2107, %v2074, 0
      %v2136 = vsel %vm2107, %v2075, 0
      %v2139 = vsel %vm2107, %v2076, 0
      %v2142 = vsel %vm2107, %v2077, 0
      %v2145 = vsel %vm2107, %v2078, 0
      %v2148 = vsel %vm2107, %v2079, 0
      %v2151 = vsel %vm2107, %v2080, 0
      %v2154 = vsel %vm2107, %v2081, 0
      %v2157 = vsel %vm2107, %v2082, 0
      %v2160 = vsel %vm2107, %v2083, 0
      %v2163 = vsel %vm2107, %v2084, 0
      %v2166 = vsel %vm2107, %v2085, 0
      %v2169 = vsel %vm2107, %v2086, 0
      %v2172 = vsel %vm2107, %v2087, 0
      %v2175 = vsel %vm2107, %v2088, 0
      %v2178 = vsel %vm2107, %v2089, 0
      %v2181 = vsel %vm2107, %v2090, 0
      %v2184 = vsel %vm2107, %v2091, 0
      %v2187 = vsel %vm2107, %v2092, 0
      %v2190 = vsel %vm2107, %v2093, 0
      %v2193 = vsel %vm2107, %v2094, 0
      %v2196 = vsel %vm2107, %v2095, 0
      %v2199 = vsel %vm2107, %v2096, 0
      %v2202 = vsel %vm2107, %v2097, 0
      %2204 = vmatprep.subr.mxu0 0.0
      %2205 = vmatpush1.msra.mxu0 %v2098
      %2206 = vmatprep.subr.mxu0 0.0
      %2207 = vmatpush1.msra.mxu0 %v2099
      %2208 = vmatprep.subr.mxu0 0.0
      %2209 = vmatpush1.msra.mxu0 %v2100
      %2210 = vmatprep.subr.mxu0 0.0
      %2211 = vmatpush1.msra.mxu0 %v2101
      %2212 = vmatprep.subr.mxu0 0.0
      %2213 = vmatpush1.msra.mxu0 %v2102
      %2214 = vmatprep.subr.mxu0 0.0
      %2215 = vmatpush1.msra.mxu0 %v2103
      %2216 = vmatprep.subr.mxu0 0.0
      %2217 = vmatpush1.msra.mxu0 %v2104
      %2218 = vmatprep.subr.mxu0 0.0
      %2219 = vmatpush1.msra.mxu0 %v2105
      %2220 = vmatprep.subr.mxu0 0.0
      %2221 = vmatpush1.msra.mxu0 %v2106
      %2222 = vmatprep.subr.mxu0 0.0
      %2223 = vmatpush1.msra.mxu0 0.0
      %2224 = vmatprep.subr.mxu0 0.0
      %2225 = vmatpush1.msra.mxu0 0.0
      %2226 = vmatprep.subr.mxu0 0.0
      %2227 = vmatpush1.msra.mxu0 0.0
      %2228 = vmatprep.subr.mxu0 0.0
      %2229 = vmatpush1.msra.mxu0 0.0
      %2230 = vmatprep.subr.mxu0 0.0
      %2231 = vmatpush1.msra.mxu0 0.0
      %2232 = vmatprep.subr.mxu0 0.0
      %2233 = vmatpush1.msra.mxu0 0.0
      %2234 = vmatprep.subr.mxu0 0.0
      %2235 = vmatpush1.msra.mxu0 0.0
      %2236 = vmatprep.subr.mxu0 0.0
      %2237 = vmatpush1.msra.mxu0 0.0
      %2238 = vmatprep.subr.mxu0 0.0
      %2239 = vmatpush1.msra.mxu0 0.0
      %2240 = vmatprep.subr.mxu0 0.0
      %2241 = vmatpush1.msra.mxu0 0.0
      %2242 = vmatprep.subr.mxu0 0.0
      %2243 = vmatpush1.msra.mxu0 0.0
      %2244 = vmatprep.subr.mxu0 0.0
      %2245 = vmatpush1.msra.mxu0 0.0
      %2246 = vmatprep.subr.mxu0 0.0
      %2247 = vmatpush1.msra.mxu0 0.0
      %2248 = vmatprep.subr.mxu0 0.0
      %2249 = vmatpush1.msra.mxu0 0.0
      %2250 = vmatprep.subr.mxu0 0.0
      %2251 = vmatpush1.msra.mxu0 0.0
      %2252 = vmatprep.subr.mxu0 0.0
      %2253 = vmatpush1.msra.mxu0 0.0
      %2254 = vmatprep.subr.mxu0 0.0
      %2255 = vmatpush1.msra.mxu0 0.0
      %2256 = vmatprep.subr.mxu0 0.0
      %2257 = vmatpush1.msra.mxu0 0.0
      %2258 = vmatprep.subr.mxu0 0.0
      %2259 = vmatpush1.msra.mxu0 0.0
      %2260 = vmatprep.subr.mxu0 0.0
      %2261 = vmatpush1.msra.mxu0 0.0
      %2262 = vmatprep.subr.mxu0 0.0
      %2263 = vmatpush1.msra.mxu0 0.0
      %2264 = vmatprep.subr.mxu0 0.0
      %2265 = vmatpush1.msra.mxu0 0.0
      %2266 = vmatprep.subr.mxu0 0.0
      %2267 = vmatpush1.msra.mxu0 0.0
      %2268 = vmatprep.mubr.f32.mxu0 0.0
      %2269 = vmatmul.mubr.f32.gmra.mrb[0].mxu0 %v2109
      %v2270 = vpop.f32.mrb[0].mxu0
      %v2271 = vadd.f32 0.0, %v2270
      %v2272 = vpop.f32.mrb[0].mxu0
      %2273 = vmatprep.mubr.f32.mxu0 0.0
      %2274 = vmatmul.mubr.f32.gmra.mrb[0].mxu0 %v2112
      %v2275 = vpop.f32.mrb[0].mxu0
      %v2276 = vadd.f32 0.0, %v2275
      %v2277 = vpop.f32.mrb[0].mxu0
      %2278 = vmatprep.mubr.f32.mxu0 0.0
      %2279 = vmatmul.mubr.f32.gmra.mrb[0].mxu0 %v2115
      %v2280 = vpop.f32.mrb[0].mxu0
      %v2281 = vadd.f32 0.0, %v2280
      %v2282 = vpop.f32.mrb[0].mxu0
      %2283 = vmatprep.mubr.f32.mxu0 0.0
      %2284 = vmatmul.mubr.f32.gmra.mrb[0].mxu0 %v2118
      %v2285 = vpop.f32.mrb[0].mxu0
      %v2286 = vadd.f32 0.0, %v2285
      %v2287 = vpop.f32.mrb[0].mxu0
      %2288 = vmatprep.mubr.f32.mxu0 0.0
      %2289 = vmatmul.mubr.f32.gmra.mrb[0].mxu0 %v2121
      %v2290 = vpop.f32.mrb[0].mxu0
      %v2291 = vadd.f32 0.0, %v2290
      %v2292 = vpop.f32.mrb[0].mxu0
      %2293 = vmatprep.mubr.f32.mxu0 0.0
      %2294 = vmatmul.mubr.f32.gmra.mrb[0].mxu0 %v2124
      %v2295 = vpop.f32.mrb[0].mxu0
      %v2296 = vadd.f32 0.0, %v2295
      %v2297 = vpop.f32.mrb[0].mxu0
      %2298 = vmatprep.mubr.f32.mxu0 0.0
      %2299 = vmatmul.mubr.f32.gmra.mrb[0].mxu0 %v2127
      %v2300 = vpop.f32.mrb[0].mxu0
      %v2301 = vadd.f32 0.0, %v2300
      %v2302 = vpop.f32.mrb[0].mxu0
      %2303 = vmatprep.mubr.f32.mxu0 0.0
      %2304 = vmatmul.mubr.f32.gmra.mrb[0].mxu0 %v2130
      %v2305 = vpop.f32.mrb[0].mxu0
      %v2306 = vadd.f32 0.0, %v2305
      %v2307 = vpop.f32.mrb[0].mxu0
      %2308 = vmatprep.mubr.f32.mxu0 0.0
      %2309 = vmatmul.mubr.f32.gmra.mrb[0].mxu0 %v2133
      %v2310 = vpop.f32.mrb[0].mxu0
      %v2311 = vadd.f32 0.0, %v2310
      %v2312 = vpop.f32.mrb[0].mxu0
      %2313 = vmatprep.mubr.f32.mxu0 0.0
      %2314 = vmatmul.mubr.f32.gmra.mrb[0].mxu0 %v2136
      %v2315 = vpop.f32.mrb[0].mxu0
      %v2316 = vadd.f32 0.0, %v2315
      %v2317 = vpop.f32.mrb[0].mxu0
      %2318 = vmatprep.mubr.f32.mxu0 0.0
      %2319 = vmatmul.mubr.f32.gmra.mrb[0].mxu0 %v2139
      %v2320 = vpop.f32.mrb[0].mxu0
      %v2321 = vadd.f32 0.0, %v2320
      %v2322 = vpop.f32.mrb[0].mxu0
      %2323 = vmatprep.mubr.f32.mxu0 0.0
      %2324 = vmatmul.mubr.f32.gmra.mrb[0].mxu0 %v2142
      %v2325 = vpop.f32.mrb[0].mxu0
      %v2326 = vadd.f32 0.0, %v2325
      %v2327 = vpop.f32.mrb[0].mxu0
      %2328 = vmatprep.mubr.f32.mxu0 0.0
      %2329 = vmatmul.mubr.f32.gmra.mrb[0].mxu0 %v2145
      %v2330 = vpop.f32.mrb[0].mxu0
      %v2331 = vadd.f32 0.0, %v2330
      %v2332 = vpop.f32.mrb[0].mxu0
      %2333 = vmatprep.mubr.f32.mxu0 0.0
      %2334 = vmatmul.mubr.f32.gmra.mrb[0].mxu0 %v2148
      %v2335 = vpop.f32.mrb[0].mxu0
      %v2336 = vadd.f32 0.0, %v2335
      %v2337 = vpop.f32.mrb[0].mxu0
      %2338 = vmatprep.mubr.f32.mxu0 0.0
      %2339 = vmatmul.mubr.f32.gmra.mrb[0].mxu0 %v2151
      %v2340 = vpop.f32.mrb[0].mxu0
      %v2341 = vadd.f32 0.0, %v2340
      %v2342 = vpop.f32.mrb[0].mxu0
      %2343 = vmatprep.mubr.f32.mxu0 0.0
      %2344 = vmatmul.mubr.f32.gmra.mrb[0].mxu0 %v2154
      %v2345 = vpop.f32.mrb[0].mxu0
      %v2346 = vadd.f32 0.0, %v2345
      %v2347 = vpop.f32.mrb[0].mxu0
      %2348 = vmatprep.mubr.f32.mxu0 0.0
      %2349 = vmatmul.mubr.f32.gmra.mrb[0].mxu0 %v2157
      %v2350 = vpop.f32.mrb[0].mxu0
      %v2351 = vadd.f32 0.0, %v2350
      %v2352 = vpop.f32.mrb[0].mxu0
      %2353 = vmatprep.mubr.f32.mxu0 0.0
      %2354 = vmatmul.mubr.f32.gmra.mrb[0].mxu0 %v2160
      %v2355 = vpop.f32.mrb[0].mxu0
      %v2356 = vadd.f32 0.0, %v2355
      %v2357 = vpop.f32.mrb[0].mxu0
      %2358 = vmatprep.mubr.f32.mxu0 0.0
      %2359 = vmatmul.mubr.f32.gmra.mrb[0].mxu0 %v2163
      %v2360 = vpop.f32.mrb[0].mxu0
      %v2361 = vadd.f32 0.0, %v2360
      %v2362 = vpop.f32.mrb[0].mxu0
      %2363 = vmatprep.mubr.f32.mxu0 0.0
      %2364 = vmatmul.mubr.f32.gmra.mrb[0].mxu0 %v2166
      %v2365 = vpop.f32.mrb[0].mxu0
      %v2366 = vadd.f32 0.0, %v2365
      %v2367 = vpop.f32.mrb[0].mxu0
      %2368 = vmatprep.mubr.f32.mxu0 0.0
      %2369 = vmatmul.mubr.f32.gmra.mrb[0].mxu0 %v2169
      %v2370 = vpop.f32.mrb[0].mxu0
      %v2371 = vadd.f32 0.0, %v2370
      %v2372 = vpop.f32.mrb[0].mxu0
      %2373 = vmatprep.mubr.f32.mxu0 0.0
      %2374 = vmatmul.mubr.f32.gmra.mrb[0].mxu0 %v2172
      %v2375 = vpop.f32.mrb[0].mxu0
      %v2376 = vadd.f32 0.0, %v2375
      %v2377 = vpop.f32.mrb[0].mxu0
      %2378 = vmatprep.mubr.f32.mxu0 0.0
      %2379 = vmatmul.mubr.f32.gmra.mrb[0].mxu0 %v2175
      %v2380 = vpop.f32.mrb[0].mxu0
      %v2381 = vadd.f32 0.0, %v2380
      %v2382 = vpop.f32.mrb[0].mxu0
      %2383 = vmatprep.mubr.f32.mxu0 0.0
      %2384 = vmatmul.mubr.f32.gmra.mrb[0].mxu0 %v2178
      %v2385 = vpop.f32.mrb[0].mxu0
      %v2386 = vadd.f32 0.0, %v2385
      %v2387 = vpop.f32.mrb[0].mxu0
      %2388 = vmatprep.mubr.f32.mxu0 0.0
      %2389 = vmatmul.mubr.f32.gmra.mrb[0].mxu0 %v2181
      %v2390 = vpop.f32.mrb[0].mxu0
      %v2391 = vadd.f32 0.0, %v2390
      %v2392 = vpop.f32.mrb[0].mxu0
      %2393 = vmatprep.mubr.f32.mxu0 0.0
      %2394 = vmatmul.mubr.f32.gmra.mrb[0].mxu0 %v2184
      %v2395 = vpop.f32.mrb[0].mxu0
      %v2396 = vadd.f32 0.0, %v2395
      %v2397 = vpop.f32.mrb[0].mxu0
      %2398 = vmatprep.mubr.f32.mxu0 0.0
      %2399 = vmatmul.mubr.f32.gmra.mrb[0].mxu0 %v2187
      %v2400 = vpop.f32.mrb[0].mxu0
      %v2401 = vadd.f32 0.0, %v2400
      %v2402 = vpop.f32.mrb[0].mxu0
      %2403 = vmatprep.mubr.f32.mxu0 0.0
      %2404 = vmatmul.mubr.f32.gmra.mrb[0].mxu0 %v2190
      %v2405 = vpop.f32.mrb[0].mxu0
      %v2406 = vadd.f32 0.0, %v2405
      %v2407 = vpop.f32.mrb[0].mxu0
      %2408 = vmatprep.mubr.f32.mxu0 0.0
      %2409 = vmatmul.mubr.f32.gmra.mrb[0].mxu0 %v2193
      %v2410 = vpop.f32.mrb[0].mxu0
      %v2411 = vadd.f32 0.0, %v2410
      %v2412 = vpop.f32.mrb[0].mxu0
      %2413 = vmatprep.mubr.f32.mxu0 0.0
      %2414 = vmatmul.mubr.f32.gmra.mrb[0].mxu0 %v2196
      %v2415 = vpop.f32.mrb[0].mxu0
      %v2416 = vadd.f32 0.0, %v2415
      %v2417 = vpop.f32.mrb[0].mxu0
      %2418 = vmatprep.mubr.f32.mxu0 0.0
      %2419 = vmatmul.mubr.f32.gmra.mrb[0].mxu0 %v2199
      %v2420 = vpop.f32.mrb[0].mxu0
      %v2421 = vadd.f32 0.0, %v2420
      %v2422 = vpop.f32.mrb[0].mxu0
      %2423 = vmatprep.mubr.f32.mxu0 0.0
      %2424 = vmatmul.mubr.f32.gmra.mrb[0].mxu0 %v2202
      %v2425 = vpop.f32.mrb[0].mxu0
      %v2426 = vadd.f32 0.0, %v2425
      %v2427 = vpop.f32.mrb[0].mxu0
      %2428 = vdwg.mxu0
      %v2429 = vsel %vm378, %v2271, 0.0
      %v2430 = vsel %vm378, %v2276, 0.0
      %v2431 = vadd.f32 %v2429, %v2430
      %v2432 = vsel %vm378, %v2281, 0.0
      %v2433 = vadd.f32 %v2431, %v2432
      %v2434 = vsel %vm378, %v2286, 0.0
      %v2435 = vadd.f32 %v2433, %v2434
      %v2436 = vsel %vm378, %v2291, 0.0
      %v2437 = vadd.f32 %v2435, %v2436
      %v2438 = vsel %vm378, %v2296, 0.0
      %v2439 = vadd.f32 %v2437, %v2438
      %v2440 = vsel %vm378, %v2301, 0.0
      %v2441 = vadd.f32 %v2439, %v2440
      %v2442 = vsel %vm378, %v2306, 0.0
      %v2443 = vadd.f32 %v2441, %v2442
      %v2444 = vsel %vm378, %v2311, 0.0
      %v2445 = vadd.f32 %v2443, %v2444
      %v2446 = vsel %vm378, %v2316, 0.0
      %v2447 = vadd.f32 %v2445, %v2446
      %v2448 = vsel %vm378, %v2321, 0.0
      %v2449 = vadd.f32 %v2447, %v2448
      %v2450 = vsel %vm378, %v2326, 0.0
      %v2451 = vadd.f32 %v2449, %v2450
      %v2452 = vsel %vm378, %v2331, 0.0
      %v2453 = vadd.f32 %v2451, %v2452
      %v2454 = vsel %vm378, %v2336, 0.0
      %v2455 = vadd.f32 %v2453, %v2454
      %v2456 = vsel %vm378, %v2341, 0.0
      %v2457 = vadd.f32 %v2455, %v2456
      %v2458 = vsel %vm378, %v2346, 0.0
      %v2459 = vadd.f32 %v2457, %v2458
      %v2460 = vsel %vm378, %v2351, 0.0
      %v2461 = vadd.f32 %v2459, %v2460
      %v2462 = vsel %vm378, %v2356, 0.0
      %v2463 = vadd.f32 %v2461, %v2462
      %v2464 = vsel %vm378, %v2361, 0.0
      %v2465 = vadd.f32 %v2463, %v2464
      %v2466 = vsel %vm378, %v2366, 0.0
      %v2467 = vadd.f32 %v2465, %v2466
      %v2468 = vsel %vm378, %v2371, 0.0
      %v2469 = vadd.f32 %v2467, %v2468
      %v2470 = vsel %vm378, %v2376, 0.0
      %v2471 = vadd.f32 %v2469, %v2470
      %v2472 = vsel %vm378, %v2381, 0.0
      %v2473 = vadd.f32 %v2471, %v2472
      %v2474 = vsel %vm378, %v2386, 0.0
      %v2475 = vadd.f32 %v2473, %v2474
      %v2476 = vsel %vm378, %v2391, 0.0
      %v2477 = vadd.f32 %v2475, %v2476
      %v2478 = vsel %vm378, %v2396, 0.0
      %v2479 = vadd.f32 %v2477, %v2478
      %v2480 = vsel %vm378, %v2401, 0.0
      %v2481 = vadd.f32 %v2479, %v2480
      %v2482 = vsel %vm378, %v2406, 0.0
      %v2483 = vadd.f32 %v2481, %v2482
      %v2484 = vsel %vm378, %v2411, 0.0
      %v2485 = vadd.f32 %v2483, %v2484
      %v2486 = vsel %vm378, %v2416, 0.0
      %v2487 = vadd.f32 %v2485, %v2486
      %v2488 = vsel %vm378, %v2421, 0.0
      %v2489 = vadd.f32 %v2487, %v2488
      %v2490 = vsel %vm378, %v2426, 0.0
      %v2491 = vadd.f32 %v2489, %v2490
      %v2492 = vrot.slane %v2491, 4
      %v2493 = vadd.f32 %v2491, %v2492
      %v2494 = vrot.slane %v2493, 2
      %v2495 = vadd.f32 %v2493, %v2494
      %v2496 = vrot.slane %v2495, 1
      %v2497 = vadd.f32 %v2495, %v2496
      %2498 = vst.msk [vmem:[%s235] sm:$0x1] %vm387, %v2497
      %v2499 = vmul.f32 %v2271, %v2271
      %v2500 = vmul.f32 %v2276, %v2276
      %v2501 = vmul.f32 %v2281, %v2281
      %v2502 = vmul.f32 %v2286, %v2286
      %v2503 = vmul.f32 %v2291, %v2291
      %v2504 = vmul.f32 %v2296, %v2296
      %v2505 = vmul.f32 %v2301, %v2301
      %v2506 = vmul.f32 %v2306, %v2306
      %v2507 = vmul.f32 %v2311, %v2311
      %v2508 = vmul.f32 %v2316, %v2316
      %v2509 = vmul.f32 %v2321, %v2321
      %v2510 = vmul.f32 %v2326, %v2326
      %v2511 = vmul.f32 %v2331, %v2331
      %v2512 = vmul.f32 %v2336, %v2336
      %v2513 = vmul.f32 %v2341, %v2341
      %v2514 = vmul.f32 %v2346, %v2346
      %v2515 = vmul.f32 %v2351, %v2351
      %v2516 = vmul.f32 %v2356, %v2356
      %v2517 = vmul.f32 %v2361, %v2361
      %v2518 = vmul.f32 %v2366, %v2366
      %v2519 = vmul.f32 %v2371, %v2371
      %v2520 = vmul.f32 %v2376, %v2376
      %v2521 = vmul.f32 %v2381, %v2381
      %v2522 = vmul.f32 %v2386, %v2386
      %v2523 = vmul.f32 %v2391, %v2391
      %v2524 = vmul.f32 %v2396, %v2396
      %v2525 = vmul.f32 %v2401, %v2401
      %v2526 = vmul.f32 %v2406, %v2406
      %v2527 = vmul.f32 %v2411, %v2411
      %v2528 = vmul.f32 %v2416, %v2416
      %v2529 = vmul.f32 %v2421, %v2421
      %v2530 = vmul.f32 %v2426, %v2426
      %v2531 = vsel %vm378, %v2499, 0.0
      %v2532 = vsel %vm378, %v2500, 0.0
      %v2533 = vadd.f32 %v2531, %v2532
      %v2534 = vsel %vm378, %v2501, 0.0
      %v2535 = vadd.f32 %v2533, %v2534
      %v2536 = vsel %vm378, %v2502, 0.0
      %v2537 = vadd.f32 %v2535, %v2536
      %v2538 = vsel %vm378, %v2503, 0.0
      %v2539 = vadd.f32 %v2537, %v2538
      %v2540 = vsel %vm378, %v2504, 0.0
      %v2541 = vadd.f32 %v2539, %v2540
      %v2542 = vsel %vm378, %v2505, 0.0
      %v2543 = vadd.f32 %v2541, %v2542
      %v2544 = vsel %vm378, %v2506, 0.0
      %v2545 = vadd.f32 %v2543, %v2544
      %v2546 = vsel %vm378, %v2507, 0.0
      %v2547 = vadd.f32 %v2545, %v2546
      %v2548 = vsel %vm378, %v2508, 0.0
      %v2549 = vadd.f32 %v2547, %v2548
      %v2550 = vsel %vm378, %v2509, 0.0
      %v2551 = vadd.f32 %v2549, %v2550
      %v2552 = vsel %vm378, %v2510, 0.0
      %v2553 = vadd.f32 %v2551, %v2552
      %v2554 = vsel %vm378, %v2511, 0.0
      %v2555 = vadd.f32 %v2553, %v2554
      %v2556 = vsel %vm378, %v2512, 0.0
      %v2557 = vadd.f32 %v2555, %v2556
      %v2558 = vsel %vm378, %v2513, 0.0
      %v2559 = vadd.f32 %v2557, %v2558
      %v2560 = vsel %vm378, %v2514, 0.0
      %v2561 = vadd.f32 %v2559, %v2560
      %v2562 = vsel %vm378, %v2515, 0.0
      %v2563 = vadd.f32 %v2561, %v2562
      %v2564 = vsel %vm378, %v2516, 0.0
      %v2565 = vadd.f32 %v2563, %v2564
      %v2566 = vsel %vm378, %v2517, 0.0
      %v2567 = vadd.f32 %v2565, %v2566
      %v2568 = vsel %vm378, %v2518, 0.0
      %v2569 = vadd.f32 %v2567, %v2568
      %v2570 = vsel %vm378, %v2519, 0.0
      %v2571 = vadd.f32 %v2569, %v2570
      %v2572 = vsel %vm378, %v2520, 0.0
      %v2573 = vadd.f32 %v2571, %v2572
      %v2574 = vsel %vm378, %v2521, 0.0
      %v2575 = vadd.f32 %v2573, %v2574
      %v2576 = vsel %vm378, %v2522, 0.0
      %v2577 = vadd.f32 %v2575, %v2576
      %v2578 = vsel %vm378, %v2523, 0.0
      %v2579 = vadd.f32 %v2577, %v2578
      %v2580 = vsel %vm378, %v2524, 0.0
      %v2581 = vadd.f32 %v2579, %v2580
      %v2582 = vsel %vm378, %v2525, 0.0
      %v2583 = vadd.f32 %v2581, %v2582
      %v2584 = vsel %vm378, %v2526, 0.0
      %v2585 = vadd.f32 %v2583, %v2584
      %v2586 = vsel %vm378, %v2527, 0.0
      %v2587 = vadd.f32 %v2585, %v2586
      %v2588 = vsel %vm378, %v2528, 0.0
      %v2589 = vadd.f32 %v2587, %v2588
      %v2590 = vsel %vm378, %v2529, 0.0
      %v2591 = vadd.f32 %v2589, %v2590
      %v2592 = vsel %vm378, %v2530, 0.0
      %v2593 = vadd.f32 %v2591, %v2592
      %v2594 = vrot.slane %v2593, 4
      %v2595 = vadd.f32 %v2593, %v2594
      %v2596 = vrot.slane %v2595, 2
      %v2597 = vadd.f32 %v2595, %v2596
      %v2598 = vrot.slane %v2597, 1
      %v2599 = vadd.f32 %v2597, %v2598
      %2600 = vst.msk [vmem:[%s235 + $0x1] sm:$0x1] %vm387, %v2599
      %2601 = vst.msk [vmem:[%s231] sm:$0xff] %vm378, %v2271
      %2602 = vst.msk [vmem:[%s231 + $0x8] sm:$0xff] %vm378, %v2276
      %2603 = vst.msk [vmem:[%s231 + $0x10] sm:$0xff] %vm378, %v2281
      %2604 = vst.msk [vmem:[%s231 + $0x18] sm:$0xff] %vm378, %v2286
      %2605 = vst.msk [vmem:[%s231 + $0x20] sm:$0xff] %vm378, %v2291
      %2606 = vst.msk [vmem:[%s231 + $0x28] sm:$0xff] %vm378, %v2296
      %2607 = vst.msk [vmem:[%s231 + $0x30] sm:$0xff] %vm378, %v2301
      %2608 = vst.msk [vmem:[%s231 + $0x38] sm:$0xff] %vm378, %v2306
      %2609 = vst.msk [vmem:[%s231 + $0x40] sm:$0xff] %vm378, %v2311
      %2610 = vst.msk [vmem:[%s231 + $0x48] sm:$0xff] %vm378, %v2316
      %2611 = vst.msk [vmem:[%s231 + $0x50] sm:$0xff] %vm378, %v2321
      %2612 = vst.msk [vmem:[%s231 + $0x58] sm:$0xff] %vm378, %v2326
      %2613 = vst.msk [vmem:[%s231 + $0x60] sm:$0xff] %vm378, %v2331
      %2614 = vst.msk [vmem:[%s231 + $0x68] sm:$0xff] %vm378, %v2336
      %2615 = vst.msk [vmem:[%s231 + $0x70] sm:$0xff] %vm378, %v2341
      %2616 = vst.msk [vmem:[%s231 + $0x78] sm:$0xff] %vm378, %v2346
      %2617 = vst.msk [vmem:[%s231 + $0x80] sm:$0xff] %vm378, %v2351
      %2618 = vst.msk [vmem:[%s231 + $0x88] sm:$0xff] %vm378, %v2356
      %2619 = vst.msk [vmem:[%s231 + $0x90] sm:$0xff] %vm378, %v2361
      %2620 = vst.msk [vmem:[%s231 + $0x98] sm:$0xff] %vm378, %v2366
      %2621 = vst.msk [vmem:[%s231 + $0xa0] sm:$0xff] %vm378, %v2371
      %2622 = vst.msk [vmem:[%s231 + $0xa8] sm:$0xff] %vm378, %v2376
      %2623 = vst.msk [vmem:[%s231 + $0xb0] sm:$0xff] %vm378, %v2381
      %2624 = vst.msk [vmem:[%s231 + $0xb8] sm:$0xff] %vm378, %v2386
      %2625 = vst.msk [vmem:[%s231 + $0xc0] sm:$0xff] %vm378, %v2391
      %2626 = vst.msk [vmem:[%s231 + $0xc8] sm:$0xff] %vm378, %v2396
      %2627 = vst.msk [vmem:[%s231 + $0xd0] sm:$0xff] %vm378, %v2401
      %2628 = vst.msk [vmem:[%s231 + $0xd8] sm:$0xff] %vm378, %v2406
      %2629 = vst.msk [vmem:[%s231 + $0xe0] sm:$0xff] %vm378, %v2411
      %2630 = vst.msk [vmem:[%s231 + $0xe8] sm:$0xff] %vm378, %v2416
      %2631 = vst.msk [vmem:[%s231 + $0xf0] sm:$0xff] %vm378, %v2421
      %2632 = vst.msk [vmem:[%s231 + $0xf8] sm:$0xff] %vm378, %v2426
      %p2633 = scmp.lt.s32.totalorder %s17, 1
      %s2634 = scalar_select %p2633, %s17, 1
      %s2635 = smul.addr %s2634, 32
      %s2636 = smul.addr %s2635, 8
      %s2637 = scalar_lea.vmem %s4, %s2636
      %p2638 = scmp.lt.s32.totalorder %s17, 1
      %s2639 = scalar_select %p2638, %s17, 1
      %s2640 = smul.addr %s2639, 2
      %s2641 = scalar_lea.vmem %s5, %s2640
      // Predicated region
      $region37: #{resblock2d_forward.4} parent=35 // pred_check
        %p2642 = pneg %p124
      $region38: #{resblock2d_forward.4} parent=35 // pred_check_branch
        %2644 = sbr.rel (%p2642) target = $region40
      $region39: #{resblock2d_forward.4} parent=35 // pred_region
        _
      $region40: #{resblock2d_forward.4} parent=35 // pred_fallthru
        _
      // Predicated region
      $region41: #{resblock2d_forward.4} parent=35 // pred_check
        %p2645 = pneg %p150
      $region42: #{resblock2d_forward.4} parent=35 // pred_check_branch
        %2647 = sbr.rel (%p2645) target = $region44
      $region43: #{resblock2d_forward.4} parent=35 // pred_region
        _
      $region44: #{resblock2d_forward.4} parent=35 // pred_fallthru
        _
    $region36: #{resblock2d_forward.4} parent=5 // pred_fallthru
      _
    %p2648 = scmp.le.s32.totalorder 2, %s12
    // Predicated region
    $region45: #{resblock2d_forward.4} parent=5 // pred_check
      %p2649 = pneg %p2648
    $region46: #{resblock2d_forward.4} parent=5 // pred_check_branch
      %2651 = sbr.rel (%p2649) target = $region48
    $region47: #{resblock2d_forward.4} parent=5 // pred_region
      %s2652 = ssub.s32 %s12, 2
      // Predicated region
      $region49: #{resblock2d_forward.4} parent=47 // pred_check
        %p2653 = pneg %p130
      $region50: #{resblock2d_forward.4} parent=47 // pred_check_branch
        %2655 = sbr.rel (%p2653) target = $region52
      $region51: #{resblock2d_forward.4} parent=47 // pred_region
        %p2656 = scmp.lt.s32.totalorder %s18, 1
        %s2657 = scalar_select %p2656, %s18, 1
        %s2658 = smul.addr %s2657, 32
        %s2659 = smul.addr %s2658, 8
        %s2660 = scalar_lea.vmem %s4, %s2659
      $region52: #{resblock2d_forward.4} parent=47 // pred_fallthru
        _
      // Predicated region
      $region53: #{resblock2d_forward.4} parent=47 // pred_check
        %p2661 = pneg %p156
      $region54: #{resblock2d_forward.4} parent=47 // pred_check_branch
        %2663 = sbr.rel (%p2661) target = $region56
      $region55: #{resblock2d_forward.4} parent=47 // pred_region
        %p2664 = scmp.lt.s32.totalorder %s18, 1
        %s2665 = scalar_select %p2664, %s18, 1
        %s2666 = smul.addr %s2665, 2
        %s2667 = scalar_lea.vmem %s5, %s2666
      $region56: #{resblock2d_forward.4} parent=47 // pred_fallthru
        _
    $region48: #{resblock2d_forward.4} parent=5 // pred_fallthru
      _
  $region6: #{resblock2d_forward.4} parent=0 // loop_footer
    %s16 = sadd.s32 1, %s12
  $region7: #{resblock2d_forward.4} parent=0 // loop_footer_branch
    %11 = sbr.rel target = $region3
  $region8: #{resblock2d_forward.4} parent=0 // loop_exit
    _

</llo_original>
